<compile_context>
chip_gen: v6e
topology: v6e:2x2x1
jax: 0.10.0
libtpu: 0.0.40
codegen_flags: <defaults>
</compile_context>

<pallas_src>
import functools

import jax
import jax.numpy as jnp
from jax import lax
from jax.experimental import pallas as pl
from jax.experimental.pallas import tpu as pltpu


def _round_up(x, m):
    return (x + m - 1) // m * m


def _lstm_kernel(seq_len, padded_len,
                 x_ref,                        # (tc*Bt, Dp)  rows ordered (t_local, b_local)
                 wih0_ref, b0_ref,             # (Dp, 4Hp), (1, 4Hp)   b0 = b_ih0 + b_hh0
                 wf_ref,                       # (Hp, 8Hp) = [W_ih1 | W_hh0]  (fused)
                 whh1_ref, b1_ref,             # (Hp, 4Hp), (1, 4Hp)   b1 = b_ih1 + b_hh1
                 wp_ref, bp_ref,               # (Hp, Pp), (1, Pp)
                 enc_ref, proj_ref,            # outputs (Bt, Hp), (Bt, Pp)
                 xg_buf,                       # (tc*Bt, 4Hp)  hoisted x-projection (+ b0)
                 h0s, c0s, h1s, c1s, accs,     # persistent state (Bt, Hp) each
                 r0s, r1s):                    # persistent partial gate sums (Bt, 4Hp)
    chunk = pl.program_id(1)
    n_chunks = pl.num_programs(1)
    Bt, Hp = h0s.shape
    G = 4 * Hp
    tc = x_ref.shape[0] // Bt

    # Hoisted, bias-folded input projection for the whole chunk: one big MXU matmul
    # instead of tc small ones on the serial critical path.
    xg_buf[...] = (jnp.dot(x_ref[...], wih0_ref[...],
                           preferred_element_type=jnp.float32) + b0_ref[...])

    @pl.when(chunk == 0)
    def _init():
        h0s[...] = jnp.zeros_like(h0s)
        c0s[...] = jnp.zeros_like(c0s)
        h1s[...] = jnp.zeros_like(h1s)
        c1s[...] = jnp.zeros_like(c1s)
        accs[...] = jnp.zeros_like(accs)
        r0s[...] = jnp.zeros_like(r0s)                        # h0 = 0  ->  0 @ W_hh0
        r1s[...] = jnp.broadcast_to(b1_ref[...], r1s.shape)   # h1 = 0  ->  b1 (folded)

    # Weight loads / bias broadcast hoisted out of the unrolled loop.
    wf = wf_ref[...]
    whh1 = whh1_ref[...]
    b1b = jnp.broadcast_to(b1_ref[...], (Bt, G))
    wdt = wf_ref.dtype

    def step(tt, carry):
        h0, c0, h1, c1, acc, r0, r1 = carry
        row = pl.multiple_of(tt * Bt, Bt)
        xg_t = xg_buf[pl.ds(row, Bt), :]                      # x_t @ W_ih0 + b0

        # ---- layer 0: recurrent gates were produced by the previous step's fused dot
        g0 = xg_t + r0
        i0 = jax.nn.sigmoid(g0[:, 0 * Hp:1 * Hp])
        f0 = jax.nn.sigmoid(g0[:, 1 * Hp:2 * Hp])
        gg0 = jnp.tanh(g0[:, 2 * Hp:3 * Hp])
        o0 = jax.nn.sigmoid(g0[:, 3 * Hp:4 * Hp])
        c0 = f0 * c0 + i0 * gg0
        h0 = o0 * jnp.tanh(c0)

        # ---- software-pipelined fused MXU call: layer-1 input gates for step t
        #      AND layer-0 recurrent gates for step t+1, in ONE matmul off h0_t.
        fused = jnp.dot(h0.astype(wdt), wf, preferred_element_type=jnp.float32)
        g1_in = fused[:, :G]
        r0 = fused[:, G:]

        # ---- layer 1 (r1 already holds h1_{t-1} @ W_hh1 + b1)
        g1 = g1_in + r1
        i1 = jax.nn.sigmoid(g1[:, 0 * Hp:1 * Hp])
        f1 = jax.nn.sigmoid(g1[:, 1 * Hp:2 * Hp])
        gg1 = jnp.tanh(g1[:, 2 * Hp:3 * Hp])
        o1 = jax.nn.sigmoid(g1[:, 3 * Hp:4 * Hp])
        c1 = f1 * c1 + i1 * gg1
        h1 = o1 * jnp.tanh(c1)

        # Next step's layer-1 recurrent partial sum (off the serial critical path).
        r1 = jnp.dot(h1.astype(wdt), whh1, preferred_element_type=jnp.float32) + b1b

        # Temporal-mean accumulator; skip zero-padded tail timesteps (static branch,
        # the dynamic predicate is only emitted when the sequence was padded).
        if padded_len == seq_len:
            acc = acc + h1
        else:
            acc = acc + jnp.where(chunk * tc + tt < seq_len, h1, 0.0)
        return (h0, c0, h1, c1, acc, r0, r1)

    # State stays in vregs for the whole chunk (bounded unroll of 8 inside the loop).
    carry0 = (h0s[...], c0s[...], h1s[...], c1s[...], accs[...], r0s[...], r1s[...])
    h0, c0, h1, c1, acc, r0, r1 = lax.fori_loop(0, tc, step, carry0, unroll=8)

    # Single VMEM writeback per chunk.
    h0s[...] = h0
    c0s[...] = c0
    h1s[...] = h1
    c1s[...] = c1
    accs[...] = acc
    r0s[...] = r0
    r1s[...] = r1

    @pl.when(chunk == n_chunks - 1)
    def _finalize():
        enc = acc * (1.0 / seq_len)                           # mean over the time axis
        enc_ref[...] = enc.astype(enc_ref.dtype)
        proj_ref[...] = (jnp.dot(enc.astype(wp_ref.dtype), wp_ref[...],
                                 preferred_element_type=jnp.float32)
                         + bp_ref[...]).astype(proj_ref.dtype)


def _const_weight_spec(shape):
    """Constant-index (resident) weight block: single-buffered if supported."""
    try:
        return pl.BlockSpec(shape, lambda j, t: (0, 0), pipeline_mode=pl.Buffered(1))
    except TypeError:  # older pallas without pipeline_mode
        return pl.BlockSpec(shape, lambda j, t: (0, 0))


@functools.partial(jax.jit, static_argnames=("mxu_dtype",))
def rnn_forward(x, params, mxu_dtype=jnp.float32):
    """x: (B, T, D) batch-first like the PyTorch module. Returns (encoding, projection)."""
    B, T, D = x.shape
    H = params["whh0"].shape[0]
    P = params["wp"].shape[1]

    Bt = 8                                  # sublane tile (rows per batch tile)
    n_btiles = _round_up(B, Bt) // Bt
    Bp = n_btiles * Bt
    Dp = _round_up(D, 128)                  # lane tiles
    Hp = _round_up(H, 128)
    Pp = _round_up(P, 128)
    G = 4 * Hp

    tc = min(32, _round_up(T, 8))           # time chunk (inner unroll of 8)
    Tp = _round_up(T, tc)
    n_chunks = Tp // tc

    # Tile-aligned, time-major layout per batch tile, one XLA pad+transpose pass.
    # Row order inside a batch tile is (t, b_local) so per-step slices are
    # contiguous sublane blocks of the per-chunk xg_buf.
    xw = jnp.zeros((Bp, Tp, Dp), jnp.float32).at[:B, :T, :D].set(x.astype(jnp.float32))
    x_lay = (xw.reshape(n_btiles, Bt, Tp, Dp)
               .transpose(0, 2, 1, 3)
               .reshape(n_btiles, Tp * Bt, Dp)
               .astype(mxu_dtype))

    def pad_gates(w, rows, rows_pad):
        # (rows, 4H) -> (rows_pad, 4Hp), each gate block at k*Hp (PyTorch order i,f,g,o)
        out = jnp.zeros((rows_pad, G), jnp.float32)
        for k in range(4):
            out = out.at[:rows, k * Hp:k * Hp + H].set(w[:, k * H:(k + 1) * H])
        return out

    wih0_p = pad_gates(params["wih0"], D, Dp).astype(mxu_dtype)
    b0_p = pad_gates(params["b0"], 1, 1)                                # f32 (post-acc add)
    # Software-pipelined fused weight: one MXU operand produces layer-1 input gates
    # (t) and layer-0 recurrent gates (t+1) from h0_t.
    wf_p = jnp.concatenate([pad_gates(params["wih1"], H, Hp),
                            pad_gates(params["whh0"], H, Hp)], axis=1).astype(mxu_dtype)
    whh1_p = pad_gates(params["whh1"], H, Hp).astype(mxu_dtype)
    b1_p = pad_gates(params["b1"], 1, 1)                                # f32
    wp_p = jnp.zeros((Hp, Pp), jnp.float32).at[:H, :P].set(params["wp"]).astype(mxu_dtype)
    bp_p = jnp.zeros((1, Pp), jnp.float32).at[:, :P].set(params["bp"])

    grid_spec = pltpu.PrefetchScalarGridSpec(
        num_scalar_prefetch=0,
        grid=(n_btiles, n_chunks),                       # (parallel batch, serial time)
        in_specs=[
            pl.BlockSpec((None, tc * Bt, Dp), lambda j, t: (j, t, 0)),  # streamed x chunk
            _const_weight_spec((Dp, G)),                 # W_ih0
            _const_weight_spec((1, G)),                  # b0 (b_ih0 + b_hh0)
            _const_weight_spec((Hp, 2 * G)),             # [W_ih1 | W_hh0]
            _const_weight_spec((Hp, G)),                 # W_hh1
            _const_weight_spec((1, G)),                  # b1 (b_ih1 + b_hh1)
            _const_weight_spec((Hp, Pp)),                # W_proj
            _const_weight_spec((1, Pp)),                 # b_proj
        ],
        out_specs=[
            pl.BlockSpec((Bt, Hp), lambda j, t: (j, 0)),  # encoding (lane-dense)
            pl.BlockSpec((Bt, Pp), lambda j, t: (j, 0)),  # projection (lane-dense)
        ],
        scratch_shapes=[
            pltpu.VMEM((tc * Bt, G), jnp.float32),       # xg_buf: x@W_ih0 + b0 per chunk
            pltpu.VMEM((Bt, Hp), jnp.float32),           # h0
            pltpu.VMEM((Bt, Hp), jnp.float32),           # c0
            pltpu.VMEM((Bt, Hp), jnp.float32),           # h1
            pltpu.VMEM((Bt, Hp), jnp.float32),           # c1
            pltpu.VMEM((Bt, Hp), jnp.float32),           # acc (temporal sum)
            pltpu.VMEM((Bt, G), jnp.float32),            # r0 = h0 @ W_hh0
            pltpu.VMEM((Bt, G), jnp.float32),            # r1 = h1 @ W_hh1 + b1
        ],
    )

    enc_p, proj_p = pl.pallas_call(
        functools.partial(_lstm_kernel, T, Tp),
        grid_spec=grid_spec,
        out_shape=(jax.ShapeDtypeStruct((Bp, Hp), jnp.float32),
                   jax.ShapeDtypeStruct((Bp, Pp), jnp.float32)),
        compiler_params=pltpu.CompilerParams(
            dimension_semantics=("parallel", "arbitrary"),  # batch tiles x time (serial)
            vmem_limit_bytes=32 * 1024 * 1024),             # raise v5e's 16 MiB default
    )(x_lay, wih0_p, b0_p, wf_p, whh1_p, b1_p, wp_p, bp_p)

    return enc_p[:B, :H], proj_p[:B, :P]


def init_params(key, input_size, hidden_size, proj_dim):
    """Deterministic PyTorch-style uniform(-1/sqrt(H), 1/sqrt(H)) init (weights transposed)."""
    H = hidden_size
    bound = 1.0 / jnp.sqrt(jnp.float32(H))
    ks = jax.random.split(key, 12)

    def u(k, shape):
        return jax.random.uniform(k, shape, jnp.float32, -bound, bound)

    wih0 = u(ks[0], (input_size, 4 * H))
    whh0 = u(ks[1], (H, 4 * H))
    b0 = u(ks[2], (1, 4 * H)) + u(ks[3], (1, 4 * H))        # b_ih + b_hh fused
    wih1 = u(ks[4], (H, 4 * H))
    whh1 = u(ks[5], (H, 4 * H))
    b1 = u(ks[6], (1, 4 * H)) + u(ks[7], (1, 4 * H))
    wp = jax.random.uniform(ks[8], (H, proj_dim), jnp.float32, -bound, bound)
    bp = jax.random.uniform(ks[9], (1, proj_dim), jnp.float32, -bound, bound)
    return dict(wih0=wih0, whh0=whh0, b0=b0,
                wih1=wih1, whh1=whh1, b1=b1,
                wp=wp, bp=bp)


def rnn_forward_ref(x, params):
    """Pure-JAX reference of the same math (sanity check)."""
    B, T, D = x.shape
    H = params["whh0"].shape[0]

    def cell(x_t, h, c, wih, whh, b):
        g = x_t @ wih + h @ whh + b
        i = jax.nn.sigmoid(g[:, 0 * H:1 * H])
        f = jax.nn.sigmoid(g[:, 1 * H:2 * H])
        gg = jnp.tanh(g[:, 2 * H:3 * H])
        o = jax.nn.sigmoid(g[:, 3 * H:4 * H])
        c = f * c + i * gg
        h = o * jnp.tanh(c)
        return h, c

    h0 = c0 = h1 = c1 = jnp.zeros((B, H), jnp.float32)
    acc = jnp.zeros((B, H), jnp.float32)
    for t in range(T):
        h0, c0 = cell(x[:, t, :], h0, c0, params["wih0"], params["whh0"], params["b0"])
        h1, c1 = cell(h0, h1, c1, params["wih1"], params["whh1"], params["b1"])
        acc = acc + h1
    enc = acc / T
    proj = enc @ params["wp"] + params["bp"]
    return enc, proj


if __name__ == "__main__":
    # Small shapes consistent with the module: batch=2, seq=8,
    # features = hidden_size = input_size = projection_head_dimension = 50.
    B, T, FEATS = 2, 8, 50
    key = jax.random.PRNGKey(0)
    kx, kp = jax.random.split(key)

    x = jax.random.normal(kx, (B, T, FEATS), jnp.float32)
    params = init_params(kp, input_size=FEATS, hidden_size=FEATS, proj_dim=FEATS)

    enc_ref, proj_ref = rnn_forward_ref(x, params)

    # f32 MXU-input path: tight numeric check against the f32 reference.
    enc, proj = rnn_forward(x, params)
    jax.block_until_ready((enc, proj))
    assert enc.shape == (B, FEATS) and proj.shape == (B, FEATS)
    assert jnp.allclose(enc, enc_ref, atol=2e-4), "encoding mismatch (f32)"
    assert jnp.allclose(proj, proj_ref, atol=2e-4), "projection mismatch (f32)"

    # bf16 MXU-input path (f32 accumulation / gate math): looser tolerance.
    enc_bf, proj_bf = rnn_forward(x, params, mxu_dtype=jnp.bfloat16)
    jax.block_until_ready((enc_bf, proj_bf))
    assert jnp.allclose(enc_bf, enc_ref, atol=5e-2), "encoding mismatch (bf16)"
    assert jnp.allclose(proj_bf, proj_ref, atol=5e-2), "projection mismatch (bf16)"

    print("KERNEL_OK")
</pallas_src>

<mosaic_0001>
module attributes {stable_mosaic.version = 11 : i64} {
  func.func @_lstm_kernel(%arg0: i32, %arg1: i32, %arg2: memref<1x64x128xf32, #tpu.memory_space<vmem>>, %arg3: memref<128x512xf32, #tpu.memory_space<vmem>>, %arg4: memref<1x512xf32, #tpu.memory_space<vmem>>, %arg5: memref<128x1024xf32, #tpu.memory_space<vmem>>, %arg6: memref<128x512xf32, #tpu.memory_space<vmem>>, %arg7: memref<1x512xf32, #tpu.memory_space<vmem>>, %arg8: memref<128x128xf32, #tpu.memory_space<vmem>>, %arg9: memref<1x128xf32, #tpu.memory_space<vmem>>, %arg10: memref<8x128xf32, #tpu.memory_space<vmem>>, %arg11: memref<8x128xf32, #tpu.memory_space<vmem>>, %arg12: memref<64x512xf32, #tpu.memory_space<vmem>>, %arg13: memref<8x128xf32, #tpu.memory_space<vmem>>, %arg14: memref<8x128xf32, #tpu.memory_space<vmem>>, %arg15: memref<8x128xf32, #tpu.memory_space<vmem>>, %arg16: memref<8x128xf32, #tpu.memory_space<vmem>>, %arg17: memref<8x128xf32, #tpu.memory_space<vmem>>, %arg18: memref<8x512xf32, #tpu.memory_space<vmem>>, %arg19: memref<8x512xf32, #tpu.memory_space<vmem>>) attributes {dimension_semantics = [#tpu.dimension_semantics<parallel>, #tpu.dimension_semantics<arbitrary>], iteration_bounds = array<i64: 1, 1>, scalar_prefetch = 0 : i64, scratch_operands = 8 : i64, tpu.core_type = #tpu.core_type<tc>, window_params = [{transform_indices = @transform_0, window_bounds = array<i64: 1, 64, 128>}, {pipeline_mode = #tpu.pipeline_mode<synchronous>, transform_indices = @transform_1, window_bounds = array<i64: 128, 512>}, {pipeline_mode = #tpu.pipeline_mode<synchronous>, transform_indices = @transform_2, window_bounds = array<i64: 1, 512>}, {pipeline_mode = #tpu.pipeline_mode<synchronous>, transform_indices = @transform_3, window_bounds = array<i64: 128, 1024>}, {pipeline_mode = #tpu.pipeline_mode<synchronous>, transform_indices = @transform_4, window_bounds = array<i64: 128, 512>}, {pipeline_mode = #tpu.pipeline_mode<synchronous>, transform_indices = @transform_5, window_bounds = array<i64: 1, 512>}, {pipeline_mode = #tpu.pipeline_mode<synchronous>, transform_indices = @transform_6, window_bounds = array<i64: 128, 128>}, {pipeline_mode = #tpu.pipeline_mode<synchronous>, transform_indices = @transform_7, window_bounds = array<i64: 1, 128>}, {transform_indices = @transform_8, window_bounds = array<i64: 8, 128>}, {transform_indices = @transform_9, window_bounds = array<i64: 8, 128>}]} {
    %c0 = arith.constant 0 : index
    %c0_0 = arith.constant 0 : index
    %c0_1 = arith.constant 0 : index
    %0 = vector.load %arg2[%c0, %c0_0, %c0_1] : memref<1x64x128xf32, #tpu.memory_space<vmem>>, vector<1x64x128xf32>
    %1 = vector.shape_cast %0 : vector<1x64x128xf32> to vector<64x128xf32>
    %c0_2 = arith.constant 0 : index
    %c0_3 = arith.constant 0 : index
    %2 = vector.load %arg3[%c0_2, %c0_3] : memref<128x512xf32, #tpu.memory_space<vmem>>, vector<128x512xf32>
    %cst = arith.constant dense<0.000000e+00> : vector<64x512xf32>
    %3 = tpu.matmul %1, %2, %cst {dimension_numbers = #tpu.dot_dimension_numbers<[1], [0], [0], [1], [0, 0, 1, 1], [], []>} : vector<64x128xf32>, vector<128x512xf32>, vector<64x512xf32> -> vector<64x512xf32>
    %c0_4 = arith.constant 0 : index
    %c0_5 = arith.constant 0 : index
    %4 = vector.load %arg4[%c0_4, %c0_5] : memref<1x512xf32, #tpu.memory_space<vmem>>, vector<1x512xf32>
    %5 = vector.broadcast %4 : vector<1x512xf32> to vector<64x512xf32>
    %6 = arith.addf %3, %5 : vector<64x512xf32>
    %c0_6 = arith.constant 0 : index
    %c0_7 = arith.constant 0 : index
    %7 = vector.load %arg12[%c0_6, %c0_7] : memref<64x512xf32, #tpu.memory_space<vmem>>, vector<64x512xf32>
    tpu.vector_store %arg12[%c0_6, %c0_7], %6 {strides = array<i32>} : memref<64x512xf32, #tpu.memory_space<vmem>>, vector<64x512xf32>,
    %c0_i32 = arith.constant 0 : i32
    %8 = arith.cmpi eq, %arg1, %c0_i32 : i32
    %9 = arith.extui %8 : i1 to i32
    %c0_i32_8 = arith.constant 0 : i32
    %10 = arith.cmpi ne, %9, %c0_i32_8 : i32
    scf.if %10 {
      %cst_126 = arith.constant 0.000000e+00 : f32
      %529 = vector.broadcast %cst_126 : f32 to vector<8x128xf32>
      %c0_127 = arith.constant 0 : index
      %c0_128 = arith.constant 0 : index
      %530 = vector.load %arg13[%c0_127, %c0_128] : memref<8x128xf32, #tpu.memory_space<vmem>>, vector<8x128xf32>
      tpu.vector_store %arg13[%c0_127, %c0_128], %529 {strides = array<i32>} : memref<8x128xf32, #tpu.memory_space<vmem>>, vector<8x128xf32>,
      %cst_129 = arith.constant 0.000000e+00 : f32
      %531 = vector.broadcast %cst_129 : f32 to vector<8x128xf32>
      %c0_130 = arith.constant 0 : index
      %c0_131 = arith.constant 0 : index
      %532 = vector.load %arg14[%c0_130, %c0_131] : memref<8x128xf32, #tpu.memory_space<vmem>>, vector<8x128xf32>
      tpu.vector_store %arg14[%c0_130, %c0_131], %531 {strides = array<i32>} : memref<8x128xf32, #tpu.memory_space<vmem>>, vector<8x128xf32>,
      %cst_132 = arith.constant 0.000000e+00 : f32
      %533 = vector.broadcast %cst_132 : f32 to vector<8x128xf32>
      %c0_133 = arith.constant 0 : index
      %c0_134 = arith.constant 0 : index
      %534 = vector.load %arg15[%c0_133, %c0_134] : memref<8x128xf32, #tpu.memory_space<vmem>>, vector<8x128xf32>
      tpu.vector_store %arg15[%c0_133, %c0_134], %533 {strides = array<i32>} : memref<8x128xf32, #tpu.memory_space<vmem>>, vector<8x128xf32>,
      %cst_135 = arith.constant 0.000000e+00 : f32
      %535 = vector.broadcast %cst_135 : f32 to vector<8x128xf32>
      %c0_136 = arith.constant 0 : index
      %c0_137 = arith.constant 0 : index
      %536 = vector.load %arg16[%c0_136, %c0_137] : memref<8x128xf32, #tpu.memory_space<vmem>>, vector<8x128xf32>
      tpu.vector_store %arg16[%c0_136, %c0_137], %535 {strides = array<i32>} : memref<8x128xf32, #tpu.memory_space<vmem>>, vector<8x128xf32>,
      %cst_138 = arith.constant 0.000000e+00 : f32
      %537 = vector.broadcast %cst_138 : f32 to vector<8x128xf32>
      %c0_139 = arith.constant 0 : index
      %c0_140 = arith.constant 0 : index
      %538 = vector.load %arg17[%c0_139, %c0_140] : memref<8x128xf32, #tpu.memory_space<vmem>>, vector<8x128xf32>
      tpu.vector_store %arg17[%c0_139, %c0_140], %537 {strides = array<i32>} : memref<8x128xf32, #tpu.memory_space<vmem>>, vector<8x128xf32>,
      %cst_141 = arith.constant 0.000000e+00 : f32
      %539 = vector.broadcast %cst_141 : f32 to vector<8x512xf32>
      %c0_142 = arith.constant 0 : index
      %c0_143 = arith.constant 0 : index
      %540 = vector.load %arg18[%c0_142, %c0_143] : memref<8x512xf32, #tpu.memory_space<vmem>>, vector<8x512xf32>
      tpu.vector_store %arg18[%c0_142, %c0_143], %539 {strides = array<i32>} : memref<8x512xf32, #tpu.memory_space<vmem>>, vector<8x512xf32>,
      %c0_144 = arith.constant 0 : index
      %c0_145 = arith.constant 0 : index
      %541 = vector.load %arg7[%c0_144, %c0_145] : memref<1x512xf32, #tpu.memory_space<vmem>>, vector<1x512xf32>
      %542 = vector.shape_cast %541 : vector<1x512xf32> to vector<1x512xf32>
      %543 = vector.broadcast %542 : vector<1x512xf32> to vector<8x512xf32>
      %c0_146 = arith.constant 0 : index
      %c0_147 = arith.constant 0 : index
      %544 = vector.load %arg19[%c0_146, %c0_147] : memref<8x512xf32, #tpu.memory_space<vmem>>, vector<8x512xf32>
      tpu.vector_store %arg19[%c0_146, %c0_147], %543 {strides = array<i32>} : memref<8x512xf32, #tpu.memory_space<vmem>>, vector<8x512xf32>,
    } else {
    }
    %c0_9 = arith.constant 0 : index
    %c0_10 = arith.constant 0 : index
    %11 = vector.load %arg5[%c0_9, %c0_10] : memref<128x1024xf32, #tpu.memory_space<vmem>>, vector<128x1024xf32>
    %c0_11 = arith.constant 0 : index
    %c0_12 = arith.constant 0 : index
    %12 = vector.load %arg6[%c0_11, %c0_12] : memref<128x512xf32, #tpu.memory_space<vmem>>, vector<128x512xf32>
    %c0_13 = arith.constant 0 : index
    %c0_14 = arith.constant 0 : index
    %13 = vector.load %arg7[%c0_13, %c0_14] : memref<1x512xf32, #tpu.memory_space<vmem>>, vector<1x512xf32>
    %14 = vector.shape_cast %13 : vector<1x512xf32> to vector<1x512xf32>
    %15 = vector.broadcast %14 : vector<1x512xf32> to vector<8x512xf32>
    %c0_15 = arith.constant 0 : index
    %c0_16 = arith.constant 0 : index
    %16 = vector.load %arg13[%c0_15, %c0_16] : memref<8x128xf32, #tpu.memory_space<vmem>>, vector<8x128xf32>
    %c0_17 = arith.constant 0 : index
    %c0_18 = arith.constant 0 : index
    %17 = vector.load %arg14[%c0_17, %c0_18] : memref<8x128xf32, #tpu.memory_space<vmem>>, vector<8x128xf32>
    %c0_19 = arith.constant 0 : index
    %c0_20 = arith.constant 0 : index
    %18 = vector.load %arg15[%c0_19, %c0_20] : memref<8x128xf32, #tpu.memory_space<vmem>>, vector<8x128xf32>
    %c0_21 = arith.constant 0 : index
    %c0_22 = arith.constant 0 : index
    %19 = vector.load %arg16[%c0_21, %c0_22] : memref<8x128xf32, #tpu.memory_space<vmem>>, vector<8x128xf32>
    %c0_23 = arith.constant 0 : index
    %c0_24 = arith.constant 0 : index
    %20 = vector.load %arg17[%c0_23, %c0_24] : memref<8x128xf32, #tpu.memory_space<vmem>>, vector<8x128xf32>
    %c0_25 = arith.constant 0 : index
    %c0_26 = arith.constant 0 : index
    %21 = vector.load %arg18[%c0_25, %c0_26] : memref<8x512xf32, #tpu.memory_space<vmem>>, vector<8x512xf32>
    %c0_27 = arith.constant 0 : index
    %c0_28 = arith.constant 0 : index
    %22 = vector.load %arg19[%c0_27, %c0_28] : memref<8x512xf32, #tpu.memory_space<vmem>>, vector<8x512xf32>
    %c0_i32_29 = arith.constant 0 : i32
    %c8_i32 = arith.constant 8 : i32
    %23 = arith.muli %c0_i32_29, %c8_i32 : i32
    %24 = tpu.assume_multiple %23, 8 : i32
    %25 = arith.index_cast %24 : i32 to index
    %c0_30 = arith.constant 0 : index
    %26 = vector.load %arg12[%25, %c0_30] : memref<64x512xf32, #tpu.memory_space<vmem>>, vector<8x512xf32>
    %27 = arith.addf %26, %21 : vector<8x512xf32>
    %28 = vector.extract_strided_slice %27 {offsets = [0, 0], sizes = [8, 128], strides = [1, 1]} : vector<8x512xf32> to vector<8x128xf32>
    %29 = arith.negf %28 : vector<8x128xf32>
    %30 = math.exp %29 : vector<8x128xf32>
    %cst_31 = arith.constant 1.000000e+00 : f32
    %31 = vector.broadcast %cst_31 : f32 to vector<8x128xf32>
    %32 = arith.addf %31, %30 : vector<8x128xf32>
    %33 = arith.divf %31, %32 : vector<8x128xf32>
    %34 = vector.extract_strided_slice %27 {offsets = [0, 128], sizes = [8, 128], strides = [1, 1]} : vector<8x512xf32> to vector<8x128xf32>
    %35 = arith.negf %34 : vector<8x128xf32>
    %36 = math.exp %35 : vector<8x128xf32>
    %cst_32 = arith.constant 1.000000e+00 : f32
    %37 = vector.broadcast %cst_32 : f32 to vector<8x128xf32>
    %38 = arith.addf %37, %36 : vector<8x128xf32>
    %39 = arith.divf %37, %38 : vector<8x128xf32>
    %40 = vector.extract_strided_slice %27 {offsets = [0, 256], sizes = [8, 128], strides = [1, 1]} : vector<8x512xf32> to vector<8x128xf32>
    %41 = math.tanh %40 : vector<8x128xf32>
    %42 = vector.extract_strided_slice %27 {offsets = [0, 384], sizes = [8, 128], strides = [1, 1]} : vector<8x512xf32> to vector<8x128xf32>
    %43 = arith.negf %42 : vector<8x128xf32>
    %44 = math.exp %43 : vector<8x128xf32>
    %cst_33 = arith.constant 1.000000e+00 : f32
    %45 = vector.broadcast %cst_33 : f32 to vector<8x128xf32>
    %46 = arith.addf %45, %44 : vector<8x128xf32>
    %47 = arith.divf %45, %46 : vector<8x128xf32>
    %48 = arith.mulf %39, %17 : vector<8x128xf32>
    %49 = arith.mulf %33, %41 : vector<8x128xf32>
    %50 = arith.addf %48, %49 : vector<8x128xf32>
    %51 = math.tanh %50 : vector<8x128xf32>
    %52 = arith.mulf %47, %51 : vector<8x128xf32>
    %cst_34 = arith.constant dense<0.000000e+00> : vector<8x1024xf32>
    %53 = tpu.matmul %52, %11, %cst_34 {dimension_numbers = #tpu.dot_dimension_numbers<[1], [0], [0], [1], [0, 0, 1, 1], [], []>} : vector<8x128xf32>, vector<128x1024xf32>, vector<8x1024xf32> -> vector<8x1024xf32>
    %54 = vector.extract_strided_slice %53 {offsets = [0, 0], sizes = [8, 512], strides = [1, 1]} : vector<8x1024xf32> to vector<8x512xf32>
    %55 = vector.extract_strided_slice %53 {offsets = [0, 512], sizes = [8, 512], strides = [1, 1]} : vector<8x1024xf32> to vector<8x512xf32>
    %56 = arith.addf %54, %22 : vector<8x512xf32>
    %57 = vector.extract_strided_slice %56 {offsets = [0, 0], sizes = [8, 128], strides = [1, 1]} : vector<8x512xf32> to vector<8x128xf32>
    %58 = arith.negf %57 : vector<8x128xf32>
    %59 = math.exp %58 : vector<8x128xf32>
    %cst_35 = arith.constant 1.000000e+00 : f32
    %60 = vector.broadcast %cst_35 : f32 to vector<8x128xf32>
    %61 = arith.addf %60, %59 : vector<8x128xf32>
    %62 = arith.divf %60, %61 : vector<8x128xf32>
    %63 = vector.extract_strided_slice %56 {offsets = [0, 128], sizes = [8, 128], strides = [1, 1]} : vector<8x512xf32> to vector<8x128xf32>
    %64 = arith.negf %63 : vector<8x128xf32>
    %65 = math.exp %64 : vector<8x128xf32>
    %cst_36 = arith.constant 1.000000e+00 : f32
    %66 = vector.broadcast %cst_36 : f32 to vector<8x128xf32>
    %67 = arith.addf %66, %65 : vector<8x128xf32>
    %68 = arith.divf %66, %67 : vector<8x128xf32>
    %69 = vector.extract_strided_slice %56 {offsets = [0, 256], sizes = [8, 128], strides = [1, 1]} : vector<8x512xf32> to vector<8x128xf32>
    %70 = math.tanh %69 : vector<8x128xf32>
    %71 = vector.extract_strided_slice %56 {offsets = [0, 384], sizes = [8, 128], strides = [1, 1]} : vector<8x512xf32> to vector<8x128xf32>
    %72 = arith.negf %71 : vector<8x128xf32>
    %73 = math.exp %72 : vector<8x128xf32>
    %cst_37 = arith.constant 1.000000e+00 : f32
    %74 = vector.broadcast %cst_37 : f32 to vector<8x128xf32>
    %75 = arith.addf %74, %73 : vector<8x128xf32>
    %76 = arith.divf %74, %75 : vector<8x128xf32>
    %77 = arith.mulf %68, %19 : vector<8x128xf32>
    %78 = arith.mulf %62, %70 : vector<8x128xf32>
    %79 = arith.addf %77, %78 : vector<8x128xf32>
    %80 = math.tanh %79 : vector<8x128xf32>
    %81 = arith.mulf %76, %80 : vector<8x128xf32>
    %cst_38 = arith.constant dense<0.000000e+00> : vector<8x512xf32>
    %82 = tpu.matmul %81, %12, %cst_38 {dimension_numbers = #tpu.dot_dimension_numbers<[1], [0], [0], [1], [0, 0, 1, 1], [], []>} : vector<8x128xf32>, vector<128x512xf32>, vector<8x512xf32> -> vector<8x512xf32>
    %83 = arith.addf %82, %15 : vector<8x512xf32>
    %84 = arith.addf %20, %81 : vector<8x128xf32>
    %c1_i32 = arith.constant 1 : i32
    %c8_i32_39 = arith.constant 8 : i32
    %85 = arith.muli %c1_i32, %c8_i32_39 : i32
    %86 = tpu.assume_multiple %85, 8 : i32
    %87 = arith.index_cast %86 : i32 to index
    %c0_40 = arith.constant 0 : index
    %88 = vector.load %arg12[%87, %c0_40] : memref<64x512xf32, #tpu.memory_space<vmem>>, vector<8x512xf32>
    %89 = arith.addf %88, %55 : vector<8x512xf32>
    %90 = vector.extract_strided_slice %89 {offsets = [0, 0], sizes = [8, 128], strides = [1, 1]} : vector<8x512xf32> to vector<8x128xf32>
    %91 = arith.negf %90 : vector<8x128xf32>
    %92 = math.exp %91 : vector<8x128xf32>
    %cst_41 = arith.constant 1.000000e+00 : f32
    %93 = vector.broadcast %cst_41 : f32 to vector<8x128xf32>
    %94 = arith.addf %93, %92 : vector<8x128xf32>
    %95 = arith.divf %93, %94 : vector<8x128xf32>
    %96 = vector.extract_strided_slice %89 {offsets = [0, 128], sizes = [8, 128], strides = [1, 1]} : vector<8x512xf32> to vector<8x128xf32>
    %97 = arith.negf %96 : vector<8x128xf32>
    %98 = math.exp %97 : vector<8x128xf32>
    %cst_42 = arith.constant 1.000000e+00 : f32
    %99 = vector.broadcast %cst_42 : f32 to vector<8x128xf32>
    %100 = arith.addf %99, %98 : vector<8x128xf32>
    %101 = arith.divf %99, %100 : vector<8x128xf32>
    %102 = vector.extract_strided_slice %89 {offsets = [0, 256], sizes = [8, 128], strides = [1, 1]} : vector<8x512xf32> to vector<8x128xf32>
    %103 = math.tanh %102 : vector<8x128xf32>
    %104 = vector.extract_strided_slice %89 {offsets = [0, 384], sizes = [8, 128], strides = [1, 1]} : vector<8x512xf32> to vector<8x128xf32>
    %105 = arith.negf %104 : vector<8x128xf32>
    %106 = math.exp %105 : vector<8x128xf32>
    %cst_43 = arith.constant 1.000000e+00 : f32
    %107 = vector.broadcast %cst_43 : f32 to vector<8x128xf32>
    %108 = arith.addf %107, %106 : vector<8x128xf32>
    %109 = arith.divf %107, %108 : vector<8x128xf32>
    %110 = arith.mulf %101, %50 : vector<8x128xf32>
    %111 = arith.mulf %95, %103 : vector<8x128xf32>
    %112 = arith.addf %110, %111 : vector<8x128xf32>
    %113 = math.tanh %112 : vector<8x128xf32>
    %114 = arith.mulf %109, %113 : vector<8x128xf32>
    %cst_44 = arith.constant dense<0.000000e+00> : vector<8x1024xf32>
    %115 = tpu.matmul %114, %11, %cst_44 {dimension_numbers = #tpu.dot_dimension_numbers<[1], [0], [0], [1], [0, 0, 1, 1], [], []>} : vector<8x128xf32>, vector<128x1024xf32>, vector<8x1024xf32> -> vector<8x1024xf32>
    %116 = vector.extract_strided_slice %115 {offsets = [0, 0], sizes = [8, 512], strides = [1, 1]} : vector<8x1024xf32> to vector<8x512xf32>
    %117 = vector.extract_strided_slice %115 {offsets = [0, 512], sizes = [8, 512], strides = [1, 1]} : vector<8x1024xf32> to vector<8x512xf32>
    %118 = arith.addf %116, %83 : vector<8x512xf32>
    %119 = vector.extract_strided_slice %118 {offsets = [0, 0], sizes = [8, 128], strides = [1, 1]} : vector<8x512xf32> to vector<8x128xf32>
    %120 = arith.negf %119 : vector<8x128xf32>
    %121 = math.exp %120 : vector<8x128xf32>
    %cst_45 = arith.constant 1.000000e+00 : f32
    %122 = vector.broadcast %cst_45 : f32 to vector<8x128xf32>
    %123 = arith.addf %122, %121 : vector<8x128xf32>
    %124 = arith.divf %122, %123 : vector<8x128xf32>
    %125 = vector.extract_strided_slice %118 {offsets = [0, 128], sizes = [8, 128], strides = [1, 1]} : vector<8x512xf32> to vector<8x128xf32>
    %126 = arith.negf %125 : vector<8x128xf32>
    %127 = math.exp %126 : vector<8x128xf32>
    %cst_46 = arith.constant 1.000000e+00 : f32
    %128 = vector.broadcast %cst_46 : f32 to vector<8x128xf32>
    %129 = arith.addf %128, %127 : vector<8x128xf32>
    %130 = arith.divf %128, %129 : vector<8x128xf32>
    %131 = vector.extract_strided_slice %118 {offsets = [0, 256], sizes = [8, 128], strides = [1, 1]} : vector<8x512xf32> to vector<8x128xf32>
    %132 = math.tanh %131 : vector<8x128xf32>
    %133 = vector.extract_strided_slice %118 {offsets = [0, 384], sizes = [8, 128], strides = [1, 1]} : vector<8x512xf32> to vector<8x128xf32>
    %134 = arith.negf %133 : vector<8x128xf32>
    %135 = math.exp %134 : vector<8x128xf32>
    %cst_47 = arith.constant 1.000000e+00 : f32
    %136 = vector.broadcast %cst_47 : f32 to vector<8x128xf32>
    %137 = arith.addf %136, %135 : vector<8x128xf32>
    %138 = arith.divf %136, %137 : vector<8x128xf32>
    %139 = arith.mulf %130, %79 : vector<8x128xf32>
    %140 = arith.mulf %124, %132 : vector<8x128xf32>
    %141 = arith.addf %139, %140 : vector<8x128xf32>
    %142 = math.tanh %141 : vector<8x128xf32>
    %143 = arith.mulf %138, %142 : vector<8x128xf32>
    %cst_48 = arith.constant dense<0.000000e+00> : vector<8x512xf32>
    %144 = tpu.matmul %143, %12, %cst_48 {dimension_numbers = #tpu.dot_dimension_numbers<[1], [0], [0], [1], [0, 0, 1, 1], [], []>} : vector<8x128xf32>, vector<128x512xf32>, vector<8x512xf32> -> vector<8x512xf32>
    %145 = arith.addf %144, %15 : vector<8x512xf32>
    %146 = arith.addf %84, %143 : vector<8x128xf32>
    %c2_i32 = arith.constant 2 : i32
    %c8_i32_49 = arith.constant 8 : i32
    %147 = arith.muli %c2_i32, %c8_i32_49 : i32
    %148 = tpu.assume_multiple %147, 8 : i32
    %149 = arith.index_cast %148 : i32 to index
    %c0_50 = arith.constant 0 : index
    %150 = vector.load %arg12[%149, %c0_50] : memref<64x512xf32, #tpu.memory_space<vmem>>, vector<8x512xf32>
    %151 = arith.addf %150, %117 : vector<8x512xf32>
    %152 = vector.extract_strided_slice %151 {offsets = [0, 0], sizes = [8, 128], strides = [1, 1]} : vector<8x512xf32> to vector<8x128xf32>
    %153 = arith.negf %152 : vector<8x128xf32>
    %154 = math.exp %153 : vector<8x128xf32>
    %cst_51 = arith.constant 1.000000e+00 : f32
    %155 = vector.broadcast %cst_51 : f32 to vector<8x128xf32>
    %156 = arith.addf %155, %154 : vector<8x128xf32>
    %157 = arith.divf %155, %156 : vector<8x128xf32>
    %158 = vector.extract_strided_slice %151 {offsets = [0, 128], sizes = [8, 128], strides = [1, 1]} : vector<8x512xf32> to vector<8x128xf32>
    %159 = arith.negf %158 : vector<8x128xf32>
    %160 = math.exp %159 : vector<8x128xf32>
    %cst_52 = arith.constant 1.000000e+00 : f32
    %161 = vector.broadcast %cst_52 : f32 to vector<8x128xf32>
    %162 = arith.addf %161, %160 : vector<8x128xf32>
    %163 = arith.divf %161, %162 : vector<8x128xf32>
    %164 = vector.extract_strided_slice %151 {offsets = [0, 256], sizes = [8, 128], strides = [1, 1]} : vector<8x512xf32> to vector<8x128xf32>
    %165 = math.tanh %164 : vector<8x128xf32>
    %166 = vector.extract_strided_slice %151 {offsets = [0, 384], sizes = [8, 128], strides = [1, 1]} : vector<8x512xf32> to vector<8x128xf32>
    %167 = arith.negf %166 : vector<8x128xf32>
    %168 = math.exp %167 : vector<8x128xf32>
    %cst_53 = arith.constant 1.000000e+00 : f32
    %169 = vector.broadcast %cst_53 : f32 to vector<8x128xf32>
    %170 = arith.addf %169, %168 : vector<8x128xf32>
    %171 = arith.divf %169, %170 : vector<8x128xf32>
    %172 = arith.mulf %163, %112 : vector<8x128xf32>
    %173 = arith.mulf %157, %165 : vector<8x128xf32>
    %174 = arith.addf %172, %173 : vector<8x128xf32>
    %175 = math.tanh %174 : vector<8x128xf32>
    %176 = arith.mulf %171, %175 : vector<8x128xf32>
    %cst_54 = arith.constant dense<0.000000e+00> : vector<8x1024xf32>
    %177 = tpu.matmul %176, %11, %cst_54 {dimension_numbers = #tpu.dot_dimension_numbers<[1], [0], [0], [1], [0, 0, 1, 1], [], []>} : vector<8x128xf32>, vector<128x1024xf32>, vector<8x1024xf32> -> vector<8x1024xf32>
    %178 = vector.extract_strided_slice %177 {offsets = [0, 0], sizes = [8, 512], strides = [1, 1]} : vector<8x1024xf32> to vector<8x512xf32>
    %179 = vector.extract_strided_slice %177 {offsets = [0, 512], sizes = [8, 512], strides = [1, 1]} : vector<8x1024xf32> to vector<8x512xf32>
    %180 = arith.addf %178, %145 : vector<8x512xf32>
    %181 = vector.extract_strided_slice %180 {offsets = [0, 0], sizes = [8, 128], strides = [1, 1]} : vector<8x512xf32> to vector<8x128xf32>
    %182 = arith.negf %181 : vector<8x128xf32>
    %183 = math.exp %182 : vector<8x128xf32>
    %cst_55 = arith.constant 1.000000e+00 : f32
    %184 = vector.broadcast %cst_55 : f32 to vector<8x128xf32>
    %185 = arith.addf %184, %183 : vector<8x128xf32>
    %186 = arith.divf %184, %185 : vector<8x128xf32>
    %187 = vector.extract_strided_slice %180 {offsets = [0, 128], sizes = [8, 128], strides = [1, 1]} : vector<8x512xf32> to vector<8x128xf32>
    %188 = arith.negf %187 : vector<8x128xf32>
    %189 = math.exp %188 : vector<8x128xf32>
    %cst_56 = arith.constant 1.000000e+00 : f32
    %190 = vector.broadcast %cst_56 : f32 to vector<8x128xf32>
    %191 = arith.addf %190, %189 : vector<8x128xf32>
    %192 = arith.divf %190, %191 : vector<8x128xf32>
    %193 = vector.extract_strided_slice %180 {offsets = [0, 256], sizes = [8, 128], strides = [1, 1]} : vector<8x512xf32> to vector<8x128xf32>
    %194 = math.tanh %193 : vector<8x128xf32>
    %195 = vector.extract_strided_slice %180 {offsets = [0, 384], sizes = [8, 128], strides = [1, 1]} : vector<8x512xf32> to vector<8x128xf32>
    %196 = arith.negf %195 : vector<8x128xf32>
    %197 = math.exp %196 : vector<8x128xf32>
    %cst_57 = arith.constant 1.000000e+00 : f32
    %198 = vector.broadcast %cst_57 : f32 to vector<8x128xf32>
    %199 = arith.addf %198, %197 : vector<8x128xf32>
    %200 = arith.divf %198, %199 : vector<8x128xf32>
    %201 = arith.mulf %192, %141 : vector<8x128xf32>
    %202 = arith.mulf %186, %194 : vector<8x128xf32>
    %203 = arith.addf %201, %202 : vector<8x128xf32>
    %204 = math.tanh %203 : vector<8x128xf32>
    %205 = arith.mulf %200, %204 : vector<8x128xf32>
    %cst_58 = arith.constant dense<0.000000e+00> : vector<8x512xf32>
    %206 = tpu.matmul %205, %12, %cst_58 {dimension_numbers = #tpu.dot_dimension_numbers<[1], [0], [0], [1], [0, 0, 1, 1], [], []>} : vector<8x128xf32>, vector<128x512xf32>, vector<8x512xf32> -> vector<8x512xf32>
    %207 = arith.addf %206, %15 : vector<8x512xf32>
    %208 = arith.addf %146, %205 : vector<8x128xf32>
    %c3_i32 = arith.constant 3 : i32
    %c8_i32_59 = arith.constant 8 : i32
    %209 = arith.muli %c3_i32, %c8_i32_59 : i32
    %210 = tpu.assume_multiple %209, 8 : i32
    %211 = arith.index_cast %210 : i32 to index
    %c0_60 = arith.constant 0 : index
    %212 = vector.load %arg12[%211, %c0_60] : memref<64x512xf32, #tpu.memory_space<vmem>>, vector<8x512xf32>
    %213 = arith.addf %212, %179 : vector<8x512xf32>
    %214 = vector.extract_strided_slice %213 {offsets = [0, 0], sizes = [8, 128], strides = [1, 1]} : vector<8x512xf32> to vector<8x128xf32>
    %215 = arith.negf %214 : vector<8x128xf32>
    %216 = math.exp %215 : vector<8x128xf32>
    %cst_61 = arith.constant 1.000000e+00 : f32
    %217 = vector.broadcast %cst_61 : f32 to vector<8x128xf32>
    %218 = arith.addf %217, %216 : vector<8x128xf32>
    %219 = arith.divf %217, %218 : vector<8x128xf32>
    %220 = vector.extract_strided_slice %213 {offsets = [0, 128], sizes = [8, 128], strides = [1, 1]} : vector<8x512xf32> to vector<8x128xf32>
    %221 = arith.negf %220 : vector<8x128xf32>
    %222 = math.exp %221 : vector<8x128xf32>
    %cst_62 = arith.constant 1.000000e+00 : f32
    %223 = vector.broadcast %cst_62 : f32 to vector<8x128xf32>
    %224 = arith.addf %223, %222 : vector<8x128xf32>
    %225 = arith.divf %223, %224 : vector<8x128xf32>
    %226 = vector.extract_strided_slice %213 {offsets = [0, 256], sizes = [8, 128], strides = [1, 1]} : vector<8x512xf32> to vector<8x128xf32>
    %227 = math.tanh %226 : vector<8x128xf32>
    %228 = vector.extract_strided_slice %213 {offsets = [0, 384], sizes = [8, 128], strides = [1, 1]} : vector<8x512xf32> to vector<8x128xf32>
    %229 = arith.negf %228 : vector<8x128xf32>
    %230 = math.exp %229 : vector<8x128xf32>
    %cst_63 = arith.constant 1.000000e+00 : f32
    %231 = vector.broadcast %cst_63 : f32 to vector<8x128xf32>
    %232 = arith.addf %231, %230 : vector<8x128xf32>
    %233 = arith.divf %231, %232 : vector<8x128xf32>
    %234 = arith.mulf %225, %174 : vector<8x128xf32>
    %235 = arith.mulf %219, %227 : vector<8x128xf32>
    %236 = arith.addf %234, %235 : vector<8x128xf32>
    %237 = math.tanh %236 : vector<8x128xf32>
    %238 = arith.mulf %233, %237 : vector<8x128xf32>
    %cst_64 = arith.constant dense<0.000000e+00> : vector<8x1024xf32>
    %239 = tpu.matmul %238, %11, %cst_64 {dimension_numbers = #tpu.dot_dimension_numbers<[1], [0], [0], [1], [0, 0, 1, 1], [], []>} : vector<8x128xf32>, vector<128x1024xf32>, vector<8x1024xf32> -> vector<8x1024xf32>
    %240 = vector.extract_strided_slice %239 {offsets = [0, 0], sizes = [8, 512], strides = [1, 1]} : vector<8x1024xf32> to vector<8x512xf32>
    %241 = vector.extract_strided_slice %239 {offsets = [0, 512], sizes = [8, 512], strides = [1, 1]} : vector<8x1024xf32> to vector<8x512xf32>
    %242 = arith.addf %240, %207 : vector<8x512xf32>
    %243 = vector.extract_strided_slice %242 {offsets = [0, 0], sizes = [8, 128], strides = [1, 1]} : vector<8x512xf32> to vector<8x128xf32>
    %244 = arith.negf %243 : vector<8x128xf32>
    %245 = math.exp %244 : vector<8x128xf32>
    %cst_65 = arith.constant 1.000000e+00 : f32
    %246 = vector.broadcast %cst_65 : f32 to vector<8x128xf32>
    %247 = arith.addf %246, %245 : vector<8x128xf32>
    %248 = arith.divf %246, %247 : vector<8x128xf32>
    %249 = vector.extract_strided_slice %242 {offsets = [0, 128], sizes = [8, 128], strides = [1, 1]} : vector<8x512xf32> to vector<8x128xf32>
    %250 = arith.negf %249 : vector<8x128xf32>
    %251 = math.exp %250 : vector<8x128xf32>
    %cst_66 = arith.constant 1.000000e+00 : f32
    %252 = vector.broadcast %cst_66 : f32 to vector<8x128xf32>
    %253 = arith.addf %252, %251 : vector<8x128xf32>
    %254 = arith.divf %252, %253 : vector<8x128xf32>
    %255 = vector.extract_strided_slice %242 {offsets = [0, 256], sizes = [8, 128], strides = [1, 1]} : vector<8x512xf32> to vector<8x128xf32>
    %256 = math.tanh %255 : vector<8x128xf32>
    %257 = vector.extract_strided_slice %242 {offsets = [0, 384], sizes = [8, 128], strides = [1, 1]} : vector<8x512xf32> to vector<8x128xf32>
    %258 = arith.negf %257 : vector<8x128xf32>
    %259 = math.exp %258 : vector<8x128xf32>
    %cst_67 = arith.constant 1.000000e+00 : f32
    %260 = vector.broadcast %cst_67 : f32 to vector<8x128xf32>
    %261 = arith.addf %260, %259 : vector<8x128xf32>
    %262 = arith.divf %260, %261 : vector<8x128xf32>
    %263 = arith.mulf %254, %203 : vector<8x128xf32>
    %264 = arith.mulf %248, %256 : vector<8x128xf32>
    %265 = arith.addf %263, %264 : vector<8x128xf32>
    %266 = math.tanh %265 : vector<8x128xf32>
    %267 = arith.mulf %262, %266 : vector<8x128xf32>
    %cst_68 = arith.constant dense<0.000000e+00> : vector<8x512xf32>
    %268 = tpu.matmul %267, %12, %cst_68 {dimension_numbers = #tpu.dot_dimension_numbers<[1], [0], [0], [1], [0, 0, 1, 1], [], []>} : vector<8x128xf32>, vector<128x512xf32>, vector<8x512xf32> -> vector<8x512xf32>
    %269 = arith.addf %268, %15 : vector<8x512xf32>
    %270 = arith.addf %208, %267 : vector<8x128xf32>
    %c4_i32 = arith.constant 4 : i32
    %c8_i32_69 = arith.constant 8 : i32
    %271 = arith.muli %c4_i32, %c8_i32_69 : i32
    %272 = tpu.assume_multiple %271, 8 : i32
    %273 = arith.index_cast %272 : i32 to index
    %c0_70 = arith.constant 0 : index
    %274 = vector.load %arg12[%273, %c0_70] : memref<64x512xf32, #tpu.memory_space<vmem>>, vector<8x512xf32>
    %275 = arith.addf %274, %241 : vector<8x512xf32>
    %276 = vector.extract_strided_slice %275 {offsets = [0, 0], sizes = [8, 128], strides = [1, 1]} : vector<8x512xf32> to vector<8x128xf32>
    %277 = arith.negf %276 : vector<8x128xf32>
    %278 = math.exp %277 : vector<8x128xf32>
    %cst_71 = arith.constant 1.000000e+00 : f32
    %279 = vector.broadcast %cst_71 : f32 to vector<8x128xf32>
    %280 = arith.addf %279, %278 : vector<8x128xf32>
    %281 = arith.divf %279, %280 : vector<8x128xf32>
    %282 = vector.extract_strided_slice %275 {offsets = [0, 128], sizes = [8, 128], strides = [1, 1]} : vector<8x512xf32> to vector<8x128xf32>
    %283 = arith.negf %282 : vector<8x128xf32>
    %284 = math.exp %283 : vector<8x128xf32>
    %cst_72 = arith.constant 1.000000e+00 : f32
    %285 = vector.broadcast %cst_72 : f32 to vector<8x128xf32>
    %286 = arith.addf %285, %284 : vector<8x128xf32>
    %287 = arith.divf %285, %286 : vector<8x128xf32>
    %288 = vector.extract_strided_slice %275 {offsets = [0, 256], sizes = [8, 128], strides = [1, 1]} : vector<8x512xf32> to vector<8x128xf32>
    %289 = math.tanh %288 : vector<8x128xf32>
    %290 = vector.extract_strided_slice %275 {offsets = [0, 384], sizes = [8, 128], strides = [1, 1]} : vector<8x512xf32> to vector<8x128xf32>
    %291 = arith.negf %290 : vector<8x128xf32>
    %292 = math.exp %291 : vector<8x128xf32>
    %cst_73 = arith.constant 1.000000e+00 : f32
    %293 = vector.broadcast %cst_73 : f32 to vector<8x128xf32>
    %294 = arith.addf %293, %292 : vector<8x128xf32>
    %295 = arith.divf %293, %294 : vector<8x128xf32>
    %296 = arith.mulf %287, %236 : vector<8x128xf32>
    %297 = arith.mulf %281, %289 : vector<8x128xf32>
    %298 = arith.addf %296, %297 : vector<8x128xf32>
    %299 = math.tanh %298 : vector<8x128xf32>
    %300 = arith.mulf %295, %299 : vector<8x128xf32>
    %cst_74 = arith.constant dense<0.000000e+00> : vector<8x1024xf32>
    %301 = tpu.matmul %300, %11, %cst_74 {dimension_numbers = #tpu.dot_dimension_numbers<[1], [0], [0], [1], [0, 0, 1, 1], [], []>} : vector<8x128xf32>, vector<128x1024xf32>, vector<8x1024xf32> -> vector<8x1024xf32>
    %302 = vector.extract_strided_slice %301 {offsets = [0, 0], sizes = [8, 512], strides = [1, 1]} : vector<8x1024xf32> to vector<8x512xf32>
    %303 = vector.extract_strided_slice %301 {offsets = [0, 512], sizes = [8, 512], strides = [1, 1]} : vector<8x1024xf32> to vector<8x512xf32>
    %304 = arith.addf %302, %269 : vector<8x512xf32>
    %305 = vector.extract_strided_slice %304 {offsets = [0, 0], sizes = [8, 128], strides = [1, 1]} : vector<8x512xf32> to vector<8x128xf32>
    %306 = arith.negf %305 : vector<8x128xf32>
    %307 = math.exp %306 : vector<8x128xf32>
    %cst_75 = arith.constant 1.000000e+00 : f32
    %308 = vector.broadcast %cst_75 : f32 to vector<8x128xf32>
    %309 = arith.addf %308, %307 : vector<8x128xf32>
    %310 = arith.divf %308, %309 : vector<8x128xf32>
    %311 = vector.extract_strided_slice %304 {offsets = [0, 128], sizes = [8, 128], strides = [1, 1]} : vector<8x512xf32> to vector<8x128xf32>
    %312 = arith.negf %311 : vector<8x128xf32>
    %313 = math.exp %312 : vector<8x128xf32>
    %cst_76 = arith.constant 1.000000e+00 : f32
    %314 = vector.broadcast %cst_76 : f32 to vector<8x128xf32>
    %315 = arith.addf %314, %313 : vector<8x128xf32>
    %316 = arith.divf %314, %315 : vector<8x128xf32>
    %317 = vector.extract_strided_slice %304 {offsets = [0, 256], sizes = [8, 128], strides = [1, 1]} : vector<8x512xf32> to vector<8x128xf32>
    %318 = math.tanh %317 : vector<8x128xf32>
    %319 = vector.extract_strided_slice %304 {offsets = [0, 384], sizes = [8, 128], strides = [1, 1]} : vector<8x512xf32> to vector<8x128xf32>
    %320 = arith.negf %319 : vector<8x128xf32>
    %321 = math.exp %320 : vector<8x128xf32>
    %cst_77 = arith.constant 1.000000e+00 : f32
    %322 = vector.broadcast %cst_77 : f32 to vector<8x128xf32>
    %323 = arith.addf %322, %321 : vector<8x128xf32>
    %324 = arith.divf %322, %323 : vector<8x128xf32>
    %325 = arith.mulf %316, %265 : vector<8x128xf32>
    %326 = arith.mulf %310, %318 : vector<8x128xf32>
    %327 = arith.addf %325, %326 : vector<8x128xf32>
    %328 = math.tanh %327 : vector<8x128xf32>
    %329 = arith.mulf %324, %328 : vector<8x128xf32>
    %cst_78 = arith.constant dense<0.000000e+00> : vector<8x512xf32>
    %330 = tpu.matmul %329, %12, %cst_78 {dimension_numbers = #tpu.dot_dimension_numbers<[1], [0], [0], [1], [0, 0, 1, 1], [], []>} : vector<8x128xf32>, vector<128x512xf32>, vector<8x512xf32> -> vector<8x512xf32>
    %331 = arith.addf %330, %15 : vector<8x512xf32>
    %332 = arith.addf %270, %329 : vector<8x128xf32>
    %c5_i32 = arith.constant 5 : i32
    %c8_i32_79 = arith.constant 8 : i32
    %333 = arith.muli %c5_i32, %c8_i32_79 : i32
    %334 = tpu.assume_multiple %333, 8 : i32
    %335 = arith.index_cast %334 : i32 to index
    %c0_80 = arith.constant 0 : index
    %336 = vector.load %arg12[%335, %c0_80] : memref<64x512xf32, #tpu.memory_space<vmem>>, vector<8x512xf32>
    %337 = arith.addf %336, %303 : vector<8x512xf32>
    %338 = vector.extract_strided_slice %337 {offsets = [0, 0], sizes = [8, 128], strides = [1, 1]} : vector<8x512xf32> to vector<8x128xf32>
    %339 = arith.negf %338 : vector<8x128xf32>
    %340 = math.exp %339 : vector<8x128xf32>
    %cst_81 = arith.constant 1.000000e+00 : f32
    %341 = vector.broadcast %cst_81 : f32 to vector<8x128xf32>
    %342 = arith.addf %341, %340 : vector<8x128xf32>
    %343 = arith.divf %341, %342 : vector<8x128xf32>
    %344 = vector.extract_strided_slice %337 {offsets = [0, 128], sizes = [8, 128], strides = [1, 1]} : vector<8x512xf32> to vector<8x128xf32>
    %345 = arith.negf %344 : vector<8x128xf32>
    %346 = math.exp %345 : vector<8x128xf32>
    %cst_82 = arith.constant 1.000000e+00 : f32
    %347 = vector.broadcast %cst_82 : f32 to vector<8x128xf32>
    %348 = arith.addf %347, %346 : vector<8x128xf32>
    %349 = arith.divf %347, %348 : vector<8x128xf32>
    %350 = vector.extract_strided_slice %337 {offsets = [0, 256], sizes = [8, 128], strides = [1, 1]} : vector<8x512xf32> to vector<8x128xf32>
    %351 = math.tanh %350 : vector<8x128xf32>
    %352 = vector.extract_strided_slice %337 {offsets = [0, 384], sizes = [8, 128], strides = [1, 1]} : vector<8x512xf32> to vector<8x128xf32>
    %353 = arith.negf %352 : vector<8x128xf32>
    %354 = math.exp %353 : vector<8x128xf32>
    %cst_83 = arith.constant 1.000000e+00 : f32
    %355 = vector.broadcast %cst_83 : f32 to vector<8x128xf32>
    %356 = arith.addf %355, %354 : vector<8x128xf32>
    %357 = arith.divf %355, %356 : vector<8x128xf32>
    %358 = arith.mulf %349, %298 : vector<8x128xf32>
    %359 = arith.mulf %343, %351 : vector<8x128xf32>
    %360 = arith.addf %358, %359 : vector<8x128xf32>
    %361 = math.tanh %360 : vector<8x128xf32>
    %362 = arith.mulf %357, %361 : vector<8x128xf32>
    %cst_84 = arith.constant dense<0.000000e+00> : vector<8x1024xf32>
    %363 = tpu.matmul %362, %11, %cst_84 {dimension_numbers = #tpu.dot_dimension_numbers<[1], [0], [0], [1], [0, 0, 1, 1], [], []>} : vector<8x128xf32>, vector<128x1024xf32>, vector<8x1024xf32> -> vector<8x1024xf32>
    %364 = vector.extract_strided_slice %363 {offsets = [0, 0], sizes = [8, 512], strides = [1, 1]} : vector<8x1024xf32> to vector<8x512xf32>
    %365 = vector.extract_strided_slice %363 {offsets = [0, 512], sizes = [8, 512], strides = [1, 1]} : vector<8x1024xf32> to vector<8x512xf32>
    %366 = arith.addf %364, %331 : vector<8x512xf32>
    %367 = vector.extract_strided_slice %366 {offsets = [0, 0], sizes = [8, 128], strides = [1, 1]} : vector<8x512xf32> to vector<8x128xf32>
    %368 = arith.negf %367 : vector<8x128xf32>
    %369 = math.exp %368 : vector<8x128xf32>
    %cst_85 = arith.constant 1.000000e+00 : f32
    %370 = vector.broadcast %cst_85 : f32 to vector<8x128xf32>
    %371 = arith.addf %370, %369 : vector<8x128xf32>
    %372 = arith.divf %370, %371 : vector<8x128xf32>
    %373 = vector.extract_strided_slice %366 {offsets = [0, 128], sizes = [8, 128], strides = [1, 1]} : vector<8x512xf32> to vector<8x128xf32>
    %374 = arith.negf %373 : vector<8x128xf32>
    %375 = math.exp %374 : vector<8x128xf32>
    %cst_86 = arith.constant 1.000000e+00 : f32
    %376 = vector.broadcast %cst_86 : f32 to vector<8x128xf32>
    %377 = arith.addf %376, %375 : vector<8x128xf32>
    %378 = arith.divf %376, %377 : vector<8x128xf32>
    %379 = vector.extract_strided_slice %366 {offsets = [0, 256], sizes = [8, 128], strides = [1, 1]} : vector<8x512xf32> to vector<8x128xf32>
    %380 = math.tanh %379 : vector<8x128xf32>
    %381 = vector.extract_strided_slice %366 {offsets = [0, 384], sizes = [8, 128], strides = [1, 1]} : vector<8x512xf32> to vector<8x128xf32>
    %382 = arith.negf %381 : vector<8x128xf32>
    %383 = math.exp %382 : vector<8x128xf32>
    %cst_87 = arith.constant 1.000000e+00 : f32
    %384 = vector.broadcast %cst_87 : f32 to vector<8x128xf32>
    %385 = arith.addf %384, %383 : vector<8x128xf32>
    %386 = arith.divf %384, %385 : vector<8x128xf32>
    %387 = arith.mulf %378, %327 : vector<8x128xf32>
    %388 = arith.mulf %372, %380 : vector<8x128xf32>
    %389 = arith.addf %387, %388 : vector<8x128xf32>
    %390 = math.tanh %389 : vector<8x128xf32>
    %391 = arith.mulf %386, %390 : vector<8x128xf32>
    %cst_88 = arith.constant dense<0.000000e+00> : vector<8x512xf32>
    %392 = tpu.matmul %391, %12, %cst_88 {dimension_numbers = #tpu.dot_dimension_numbers<[1], [0], [0], [1], [0, 0, 1, 1], [], []>} : vector<8x128xf32>, vector<128x512xf32>, vector<8x512xf32> -> vector<8x512xf32>
    %393 = arith.addf %392, %15 : vector<8x512xf32>
    %394 = arith.addf %332, %391 : vector<8x128xf32>
    %c6_i32 = arith.constant 6 : i32
    %c8_i32_89 = arith.constant 8 : i32
    %395 = arith.muli %c6_i32, %c8_i32_89 : i32
    %396 = tpu.assume_multiple %395, 8 : i32
    %397 = arith.index_cast %396 : i32 to index
    %c0_90 = arith.constant 0 : index
    %398 = vector.load %arg12[%397, %c0_90] : memref<64x512xf32, #tpu.memory_space<vmem>>, vector<8x512xf32>
    %399 = arith.addf %398, %365 : vector<8x512xf32>
    %400 = vector.extract_strided_slice %399 {offsets = [0, 0], sizes = [8, 128], strides = [1, 1]} : vector<8x512xf32> to vector<8x128xf32>
    %401 = arith.negf %400 : vector<8x128xf32>
    %402 = math.exp %401 : vector<8x128xf32>
    %cst_91 = arith.constant 1.000000e+00 : f32
    %403 = vector.broadcast %cst_91 : f32 to vector<8x128xf32>
    %404 = arith.addf %403, %402 : vector<8x128xf32>
    %405 = arith.divf %403, %404 : vector<8x128xf32>
    %406 = vector.extract_strided_slice %399 {offsets = [0, 128], sizes = [8, 128], strides = [1, 1]} : vector<8x512xf32> to vector<8x128xf32>
    %407 = arith.negf %406 : vector<8x128xf32>
    %408 = math.exp %407 : vector<8x128xf32>
    %cst_92 = arith.constant 1.000000e+00 : f32
    %409 = vector.broadcast %cst_92 : f32 to vector<8x128xf32>
    %410 = arith.addf %409, %408 : vector<8x128xf32>
    %411 = arith.divf %409, %410 : vector<8x128xf32>
    %412 = vector.extract_strided_slice %399 {offsets = [0, 256], sizes = [8, 128], strides = [1, 1]} : vector<8x512xf32> to vector<8x128xf32>
    %413 = math.tanh %412 : vector<8x128xf32>
    %414 = vector.extract_strided_slice %399 {offsets = [0, 384], sizes = [8, 128], strides = [1, 1]} : vector<8x512xf32> to vector<8x128xf32>
    %415 = arith.negf %414 : vector<8x128xf32>
    %416 = math.exp %415 : vector<8x128xf32>
    %cst_93 = arith.constant 1.000000e+00 : f32
    %417 = vector.broadcast %cst_93 : f32 to vector<8x128xf32>
    %418 = arith.addf %417, %416 : vector<8x128xf32>
    %419 = arith.divf %417, %418 : vector<8x128xf32>
    %420 = arith.mulf %411, %360 : vector<8x128xf32>
    %421 = arith.mulf %405, %413 : vector<8x128xf32>
    %422 = arith.addf %420, %421 : vector<8x128xf32>
    %423 = math.tanh %422 : vector<8x128xf32>
    %424 = arith.mulf %419, %423 : vector<8x128xf32>
    %cst_94 = arith.constant dense<0.000000e+00> : vector<8x1024xf32>
    %425 = tpu.matmul %424, %11, %cst_94 {dimension_numbers = #tpu.dot_dimension_numbers<[1], [0], [0], [1], [0, 0, 1, 1], [], []>} : vector<8x128xf32>, vector<128x1024xf32>, vector<8x1024xf32> -> vector<8x1024xf32>
    %426 = vector.extract_strided_slice %425 {offsets = [0, 0], sizes = [8, 512], strides = [1, 1]} : vector<8x1024xf32> to vector<8x512xf32>
    %427 = vector.extract_strided_slice %425 {offsets = [0, 512], sizes = [8, 512], strides = [1, 1]} : vector<8x1024xf32> to vector<8x512xf32>
    %428 = arith.addf %426, %393 : vector<8x512xf32>
    %429 = vector.extract_strided_slice %428 {offsets = [0, 0], sizes = [8, 128], strides = [1, 1]} : vector<8x512xf32> to vector<8x128xf32>
    %430 = arith.negf %429 : vector<8x128xf32>
    %431 = math.exp %430 : vector<8x128xf32>
    %cst_95 = arith.constant 1.000000e+00 : f32
    %432 = vector.broadcast %cst_95 : f32 to vector<8x128xf32>
    %433 = arith.addf %432, %431 : vector<8x128xf32>
    %434 = arith.divf %432, %433 : vector<8x128xf32>
    %435 = vector.extract_strided_slice %428 {offsets = [0, 128], sizes = [8, 128], strides = [1, 1]} : vector<8x512xf32> to vector<8x128xf32>
    %436 = arith.negf %435 : vector<8x128xf32>
    %437 = math.exp %436 : vector<8x128xf32>
    %cst_96 = arith.constant 1.000000e+00 : f32
    %438 = vector.broadcast %cst_96 : f32 to vector<8x128xf32>
    %439 = arith.addf %438, %437 : vector<8x128xf32>
    %440 = arith.divf %438, %439 : vector<8x128xf32>
    %441 = vector.extract_strided_slice %428 {offsets = [0, 256], sizes = [8, 128], strides = [1, 1]} : vector<8x512xf32> to vector<8x128xf32>
    %442 = math.tanh %441 : vector<8x128xf32>
    %443 = vector.extract_strided_slice %428 {offsets = [0, 384], sizes = [8, 128], strides = [1, 1]} : vector<8x512xf32> to vector<8x128xf32>
    %444 = arith.negf %443 : vector<8x128xf32>
    %445 = math.exp %444 : vector<8x128xf32>
    %cst_97 = arith.constant 1.000000e+00 : f32
    %446 = vector.broadcast %cst_97 : f32 to vector<8x128xf32>
    %447 = arith.addf %446, %445 : vector<8x128xf32>
    %448 = arith.divf %446, %447 : vector<8x128xf32>
    %449 = arith.mulf %440, %389 : vector<8x128xf32>
    %450 = arith.mulf %434, %442 : vector<8x128xf32>
    %451 = arith.addf %449, %450 : vector<8x128xf32>
    %452 = math.tanh %451 : vector<8x128xf32>
    %453 = arith.mulf %448, %452 : vector<8x128xf32>
    %cst_98 = arith.constant dense<0.000000e+00> : vector<8x512xf32>
    %454 = tpu.matmul %453, %12, %cst_98 {dimension_numbers = #tpu.dot_dimension_numbers<[1], [0], [0], [1], [0, 0, 1, 1], [], []>} : vector<8x128xf32>, vector<128x512xf32>, vector<8x512xf32> -> vector<8x512xf32>
    %455 = arith.addf %454, %15 : vector<8x512xf32>
    %456 = arith.addf %394, %453 : vector<8x128xf32>
    %c7_i32 = arith.constant 7 : i32
    %c8_i32_99 = arith.constant 8 : i32
    %457 = arith.muli %c7_i32, %c8_i32_99 : i32
    %458 = tpu.assume_multiple %457, 8 : i32
    %459 = arith.index_cast %458 : i32 to index
    %c0_100 = arith.constant 0 : index
    %460 = vector.load %arg12[%459, %c0_100] : memref<64x512xf32, #tpu.memory_space<vmem>>, vector<8x512xf32>
    %461 = arith.addf %460, %427 : vector<8x512xf32>
    %462 = vector.extract_strided_slice %461 {offsets = [0, 0], sizes = [8, 128], strides = [1, 1]} : vector<8x512xf32> to vector<8x128xf32>
    %463 = arith.negf %462 : vector<8x128xf32>
    %464 = math.exp %463 : vector<8x128xf32>
    %cst_101 = arith.constant 1.000000e+00 : f32
    %465 = vector.broadcast %cst_101 : f32 to vector<8x128xf32>
    %466 = arith.addf %465, %464 : vector<8x128xf32>
    %467 = arith.divf %465, %466 : vector<8x128xf32>
    %468 = vector.extract_strided_slice %461 {offsets = [0, 128], sizes = [8, 128], strides = [1, 1]} : vector<8x512xf32> to vector<8x128xf32>
    %469 = arith.negf %468 : vector<8x128xf32>
    %470 = math.exp %469 : vector<8x128xf32>
    %cst_102 = arith.constant 1.000000e+00 : f32
    %471 = vector.broadcast %cst_102 : f32 to vector<8x128xf32>
    %472 = arith.addf %471, %470 : vector<8x128xf32>
    %473 = arith.divf %471, %472 : vector<8x128xf32>
    %474 = vector.extract_strided_slice %461 {offsets = [0, 256], sizes = [8, 128], strides = [1, 1]} : vector<8x512xf32> to vector<8x128xf32>
    %475 = math.tanh %474 : vector<8x128xf32>
    %476 = vector.extract_strided_slice %461 {offsets = [0, 384], sizes = [8, 128], strides = [1, 1]} : vector<8x512xf32> to vector<8x128xf32>
    %477 = arith.negf %476 : vector<8x128xf32>
    %478 = math.exp %477 : vector<8x128xf32>
    %cst_103 = arith.constant 1.000000e+00 : f32
    %479 = vector.broadcast %cst_103 : f32 to vector<8x128xf32>
    %480 = arith.addf %479, %478 : vector<8x128xf32>
    %481 = arith.divf %479, %480 : vector<8x128xf32>
    %482 = arith.mulf %473, %422 : vector<8x128xf32>
    %483 = arith.mulf %467, %475 : vector<8x128xf32>
    %484 = arith.addf %482, %483 : vector<8x128xf32>
    %485 = math.tanh %484 : vector<8x128xf32>
    %486 = arith.mulf %481, %485 : vector<8x128xf32>
    %cst_104 = arith.constant dense<0.000000e+00> : vector<8x1024xf32>
    %487 = tpu.matmul %486, %11, %cst_104 {dimension_numbers = #tpu.dot_dimension_numbers<[1], [0], [0], [1], [0, 0, 1, 1], [], []>} : vector<8x128xf32>, vector<128x1024xf32>, vector<8x1024xf32> -> vector<8x1024xf32>
    %488 = vector.extract_strided_slice %487 {offsets = [0, 0], sizes = [8, 512], strides = [1, 1]} : vector<8x1024xf32> to vector<8x512xf32>
    %489 = vector.extract_strided_slice %487 {offsets = [0, 512], sizes = [8, 512], strides = [1, 1]} : vector<8x1024xf32> to vector<8x512xf32>
    %490 = arith.addf %488, %455 : vector<8x512xf32>
    %491 = vector.extract_strided_slice %490 {offsets = [0, 0], sizes = [8, 128], strides = [1, 1]} : vector<8x512xf32> to vector<8x128xf32>
    %492 = arith.negf %491 : vector<8x128xf32>
    %493 = math.exp %492 : vector<8x128xf32>
    %cst_105 = arith.constant 1.000000e+00 : f32
    %494 = vector.broadcast %cst_105 : f32 to vector<8x128xf32>
    %495 = arith.addf %494, %493 : vector<8x128xf32>
    %496 = arith.divf %494, %495 : vector<8x128xf32>
    %497 = vector.extract_strided_slice %490 {offsets = [0, 128], sizes = [8, 128], strides = [1, 1]} : vector<8x512xf32> to vector<8x128xf32>
    %498 = arith.negf %497 : vector<8x128xf32>
    %499 = math.exp %498 : vector<8x128xf32>
    %cst_106 = arith.constant 1.000000e+00 : f32
    %500 = vector.broadcast %cst_106 : f32 to vector<8x128xf32>
    %501 = arith.addf %500, %499 : vector<8x128xf32>
    %502 = arith.divf %500, %501 : vector<8x128xf32>
    %503 = vector.extract_strided_slice %490 {offsets = [0, 256], sizes = [8, 128], strides = [1, 1]} : vector<8x512xf32> to vector<8x128xf32>
    %504 = math.tanh %503 : vector<8x128xf32>
    %505 = vector.extract_strided_slice %490 {offsets = [0, 384], sizes = [8, 128], strides = [1, 1]} : vector<8x512xf32> to vector<8x128xf32>
    %506 = arith.negf %505 : vector<8x128xf32>
    %507 = math.exp %506 : vector<8x128xf32>
    %cst_107 = arith.constant 1.000000e+00 : f32
    %508 = vector.broadcast %cst_107 : f32 to vector<8x128xf32>
    %509 = arith.addf %508, %507 : vector<8x128xf32>
    %510 = arith.divf %508, %509 : vector<8x128xf32>
    %511 = arith.mulf %502, %451 : vector<8x128xf32>
    %512 = arith.mulf %496, %504 : vector<8x128xf32>
    %513 = arith.addf %511, %512 : vector<8x128xf32>
    %514 = math.tanh %513 : vector<8x128xf32>
    %515 = arith.mulf %510, %514 : vector<8x128xf32>
    %cst_108 = arith.constant dense<0.000000e+00> : vector<8x512xf32>
    %516 = tpu.matmul %515, %12, %cst_108 {dimension_numbers = #tpu.dot_dimension_numbers<[1], [0], [0], [1], [0, 0, 1, 1], [], []>} : vector<8x128xf32>, vector<128x512xf32>, vector<8x512xf32> -> vector<8x512xf32>
    %517 = arith.addf %516, %15 : vector<8x512xf32>
    %518 = arith.addf %456, %515 : vector<8x128xf32>
    %c8_i32_109 = arith.constant 8 : i32
    %c0_110 = arith.constant 0 : index
    %c0_111 = arith.constant 0 : index
    %519 = vector.load %arg13[%c0_110, %c0_111] : memref<8x128xf32, #tpu.memory_space<vmem>>, vector<8x128xf32>
    tpu.vector_store %arg13[%c0_110, %c0_111], %486 {strides = array<i32>} : memref<8x128xf32, #tpu.memory_space<vmem>>, vector<8x128xf32>,
    %c0_112 = arith.constant 0 : index
    %c0_113 = arith.constant 0 : index
    %520 = vector.load %arg14[%c0_112, %c0_113] : memref<8x128xf32, #tpu.memory_space<vmem>>, vector<8x128xf32>
    tpu.vector_store %arg14[%c0_112, %c0_113], %484 {strides = array<i32>} : memref<8x128xf32, #tpu.memory_space<vmem>>, vector<8x128xf32>,
    %c0_114 = arith.constant 0 : index
    %c0_115 = arith.constant 0 : index
    %521 = vector.load %arg15[%c0_114, %c0_115] : memref<8x128xf32, #tpu.memory_space<vmem>>, vector<8x128xf32>
    tpu.vector_store %arg15[%c0_114, %c0_115], %515 {strides = array<i32>} : memref<8x128xf32, #tpu.memory_space<vmem>>, vector<8x128xf32>,
    %c0_116 = arith.constant 0 : index
    %c0_117 = arith.constant 0 : index
    %522 = vector.load %arg16[%c0_116, %c0_117] : memref<8x128xf32, #tpu.memory_space<vmem>>, vector<8x128xf32>
    tpu.vector_store %arg16[%c0_116, %c0_117], %513 {strides = array<i32>} : memref<8x128xf32, #tpu.memory_space<vmem>>, vector<8x128xf32>,
    %c0_118 = arith.constant 0 : index
    %c0_119 = arith.constant 0 : index
    %523 = vector.load %arg17[%c0_118, %c0_119] : memref<8x128xf32, #tpu.memory_space<vmem>>, vector<8x128xf32>
    tpu.vector_store %arg17[%c0_118, %c0_119], %518 {strides = array<i32>} : memref<8x128xf32, #tpu.memory_space<vmem>>, vector<8x128xf32>,
    %c0_120 = arith.constant 0 : index
    %c0_121 = arith.constant 0 : index
    %524 = vector.load %arg18[%c0_120, %c0_121] : memref<8x512xf32, #tpu.memory_space<vmem>>, vector<8x512xf32>
    tpu.vector_store %arg18[%c0_120, %c0_121], %489 {strides = array<i32>} : memref<8x512xf32, #tpu.memory_space<vmem>>, vector<8x512xf32>,
    %c0_122 = arith.constant 0 : index
    %c0_123 = arith.constant 0 : index
    %525 = vector.load %arg19[%c0_122, %c0_123] : memref<8x512xf32, #tpu.memory_space<vmem>>, vector<8x512xf32>
    tpu.vector_store %arg19[%c0_122, %c0_123], %517 {strides = array<i32>} : memref<8x512xf32, #tpu.memory_space<vmem>>, vector<8x512xf32>,
    %c0_i32_124 = arith.constant 0 : i32
    %526 = arith.cmpi eq, %arg1, %c0_i32_124 : i32
    %527 = arith.extui %526 : i1 to i32
    %c0_i32_125 = arith.constant 0 : i32
    %528 = arith.cmpi ne, %527, %c0_i32_125 : i32
    scf.if %528 {
      %cst_126 = arith.constant 1.250000e-01 : f32
      %529 = vector.broadcast %cst_126 : f32 to vector<8x128xf32>
      %530 = arith.mulf %518, %529 : vector<8x128xf32>
      %c0_127 = arith.constant 0 : index
      %c0_128 = arith.constant 0 : index
      %531 = vector.load %arg10[%c0_127, %c0_128] : memref<8x128xf32, #tpu.memory_space<vmem>>, vector<8x128xf32>
      tpu.vector_store %arg10[%c0_127, %c0_128], %530 {strides = array<i32>} : memref<8x128xf32, #tpu.memory_space<vmem>>, vector<8x128xf32>,
      %c0_129 = arith.constant 0 : index
      %c0_130 = arith.constant 0 : index
      %532 = vector.load %arg8[%c0_129, %c0_130] : memref<128x128xf32, #tpu.memory_space<vmem>>, vector<128x128xf32>
      %cst_131 = arith.constant dense<0.000000e+00> : vector<8x128xf32>
      %533 = tpu.matmul %530, %532, %cst_131 {dimension_numbers = #tpu.dot_dimension_numbers<[1], [0], [0], [1], [0, 0, 1, 1], [], []>} : vector<8x128xf32>, vector<128x128xf32>, vector<8x128xf32> -> vector<8x128xf32>
      %c0_132 = arith.constant 0 : index
      %c0_133 = arith.constant 0 : index
      %534 = vector.load %arg9[%c0_132, %c0_133] : memref<1x128xf32, #tpu.memory_space<vmem>>, vector<1x128xf32>
      %535 = vector.broadcast %534 : vector<1x128xf32> to vector<8x128xf32>
      %536 = arith.addf %533, %535 : vector<8x128xf32>
      %c0_134 = arith.constant 0 : index
      %c0_135 = arith.constant 0 : index
      %537 = vector.load %arg11[%c0_134, %c0_135] : memref<8x128xf32, #tpu.memory_space<vmem>>, vector<8x128xf32>
      tpu.vector_store %arg11[%c0_134, %c0_135], %536 {strides = array<i32>} : memref<8x128xf32, #tpu.memory_space<vmem>>, vector<8x128xf32>,
    } else {
    }
    return
  }
  func.func @transform_0(%arg0: i32, %arg1: i32) -> (i32, i32, i32) {
    %c0_i32 = arith.constant 0 : i32
    %c0_i32_0 = arith.constant 0 : i32
    return %arg0, %arg1, %c0_i32 : i32, i32, i32
  }
  func.func @transform_1(%arg0: i32, %arg1: i32) -> (i32, i32) {
    %c0_i32 = arith.constant 0 : i32
    %c0_i32_0 = arith.constant 0 : i32
    %c0_i32_1 = arith.constant 0 : i32
    return %c0_i32, %c0_i32_0 : i32, i32
  }
  func.func @transform_2(%arg0: i32, %arg1: i32) -> (i32, i32) {
    %c0_i32 = arith.constant 0 : i32
    %c0_i32_0 = arith.constant 0 : i32
    %c0_i32_1 = arith.constant 0 : i32
    return %c0_i32, %c0_i32_0 : i32, i32
  }
  func.func @transform_3(%arg0: i32, %arg1: i32) -> (i32, i32) {
    %c0_i32 = arith.constant 0 : i32
    %c0_i32_0 = arith.constant 0 : i32
    %c0_i32_1 = arith.constant 0 : i32
    return %c0_i32, %c0_i32_0 : i32, i32
  }
  func.func @transform_4(%arg0: i32, %arg1: i32) -> (i32, i32) {
    %c0_i32 = arith.constant 0 : i32
    %c0_i32_0 = arith.constant 0 : i32
    %c0_i32_1 = arith.constant 0 : i32
    return %c0_i32, %c0_i32_0 : i32, i32
  }
  func.func @transform_5(%arg0: i32, %arg1: i32) -> (i32, i32) {
    %c0_i32 = arith.constant 0 : i32
    %c0_i32_0 = arith.constant 0 : i32
    %c0_i32_1 = arith.constant 0 : i32
    return %c0_i32, %c0_i32_0 : i32, i32
  }
  func.func @transform_6(%arg0: i32, %arg1: i32) -> (i32, i32) {
    %c0_i32 = arith.constant 0 : i32
    %c0_i32_0 = arith.constant 0 : i32
    %c0_i32_1 = arith.constant 0 : i32
    return %c0_i32, %c0_i32_0 : i32, i32
  }
  func.func @transform_7(%arg0: i32, %arg1: i32) -> (i32, i32) {
    %c0_i32 = arith.constant 0 : i32
    %c0_i32_0 = arith.constant 0 : i32
    %c0_i32_1 = arith.constant 0 : i32
    return %c0_i32, %c0_i32_0 : i32, i32
  }
  func.func @transform_8(%arg0: i32, %arg1: i32) -> (i32, i32) {
    %c0_i32 = arith.constant 0 : i32
    %c0_i32_0 = arith.constant 0 : i32
    return %arg0, %c0_i32 : i32, i32
  }
  func.func @transform_9(%arg0: i32, %arg1: i32) -> (i32, i32) {
    %c0_i32 = arith.constant 0 : i32
    %c0_i32_0 = arith.constant 0 : i32
    return %arg0, %c0_i32 : i32, i32
  }
}

</mosaic_0001>

<llo_original>
// kernel: rnn_forward.1
$region0: #{rnn_forward.1}
  #allocation0 [shape = 'u32[]', space=smem, size = 0x4, offset = 0x4, fixed_abs, tag = 'smem constant byte address 0x4 - core index']
  #allocation1 [shape = 'u32[144,128]{1,0:T(1,128)}', space=vmem, size = 0x12000, scoped, tag = 'internal scratch']
  #allocation2 [shape = 'f32[64,512]{1,0:T(8,128)}', space=vmem, size = 0x20000, scoped, tag = 'scratch operand']
  #allocation3 [shape = 'f32[8,128]{1,0:T(8,128)}', space=vmem, size = 0x1000, scoped, tag = 'scratch operand']
  #allocation4 [shape = 'f32[8,128]{1,0:T(8,128)}', space=vmem, size = 0x1000, scoped, tag = 'scratch operand']
  #allocation5 [shape = 'f32[8,128]{1,0:T(8,128)}', space=vmem, size = 0x1000, scoped, tag = 'scratch operand']
  #allocation6 [shape = 'f32[8,128]{1,0:T(8,128)}', space=vmem, size = 0x1000, scoped, tag = 'scratch operand']
  #allocation7 [shape = 'f32[8,128]{1,0:T(8,128)}', space=vmem, size = 0x1000, scoped, tag = 'scratch operand']
  #allocation8 [shape = 'f32[8,512]{1,0:T(8,128)}', space=vmem, size = 0x4000, scoped, tag = 'scratch operand']
  #allocation9 [shape = 'f32[8,512]{1,0:T(8,128)}', space=vmem, size = 0x4000, scoped, tag = 'scratch operand']
  %s0 = inlined_call_operand.vmem [shape: f32[1,64,128], index: 0, kind: input, shape index: {}]
  %s1 = inlined_call_operand.vmem [shape: f32[128,512], index: 1, kind: input, shape index: {}]
  %s2 = inlined_call_operand.vmem [shape: f32[1,512], index: 2, kind: input, shape index: {}]
  %s3 = inlined_call_operand.vmem [shape: f32[128,1024], index: 3, kind: input, shape index: {}]
  %s4 = inlined_call_operand.vmem [shape: f32[128,512], index: 4, kind: input, shape index: {}]
  %s5 = inlined_call_operand.vmem [shape: f32[1,512], index: 5, kind: input, shape index: {}]
  %s6 = inlined_call_operand.vmem [shape: f32[128,128], index: 6, kind: input, shape index: {}]
  %s7 = inlined_call_operand.vmem [shape: f32[1,128], index: 7, kind: input, shape index: {}]
  %s8 = inlined_call_operand.vmem [shape: f32[8,128], index: 8, kind: output, shape index: {0}]
  %s9 = inlined_call_operand.vmem [shape: f32[8,128], index: 9, kind: output, shape index: {1}]
  %10 = xla_tuple %s8, %s9
  %s11 = sld [smem:[#allocation0]]
  $region58: #{rnn_forward.1} parent=0
    _
  %s13 = ssub.s32 1, %s11
  %s14 = scalar_select 0, %s13, %s11
  // Predicated region
  $region2: #{rnn_forward.1} parent=0 // pred_check
    _
  $region3: #{rnn_forward.1} parent=0 // pred_check_branch
    %16 = sbr.rel (0) target = $region5
  $region4: #{rnn_forward.1} parent=0 // pred_region
    _
  $region5: #{rnn_forward.1} parent=0 // pred_fallthru
    _
  // Predicated region
  $region6: #{rnn_forward.1} parent=0 // pred_check
    _
  $region7: #{rnn_forward.1} parent=0 // pred_check_branch
    %18 = sbr.rel (0) target = $region9
  $region8: #{rnn_forward.1} parent=0 // pred_region
    _
  $region9: #{rnn_forward.1} parent=0 // pred_fallthru
    _
  // Predicated region
  $region10: #{rnn_forward.1} parent=0 // pred_check
    _
  $region11: #{rnn_forward.1} parent=0 // pred_check_branch
    %20 = sbr.rel (0) target = $region13
  $region12: #{rnn_forward.1} parent=0 // pred_region
    _
  $region13: #{rnn_forward.1} parent=0 // pred_fallthru
    _
  // Predicated region
  $region14: #{rnn_forward.1} parent=0 // pred_check
    _
  $region15: #{rnn_forward.1} parent=0 // pred_check_branch
    %22 = sbr.rel (0) target = $region17
  $region16: #{rnn_forward.1} parent=0 // pred_region
    _
  $region17: #{rnn_forward.1} parent=0 // pred_fallthru
    _
  // Predicated region
  $region18: #{rnn_forward.1} parent=0 // pred_check
    _
  $region19: #{rnn_forward.1} parent=0 // pred_check_branch
    %24 = sbr.rel (0) target = $region21
  $region20: #{rnn_forward.1} parent=0 // pred_region
    _
  $region21: #{rnn_forward.1} parent=0 // pred_fallthru
    _
  // Predicated region
  $region22: #{rnn_forward.1} parent=0 // pred_check
    _
  $region23: #{rnn_forward.1} parent=0 // pred_check_branch
    %26 = sbr.rel (0) target = $region25
  $region24: #{rnn_forward.1} parent=0 // pred_region
    _
  $region25: #{rnn_forward.1} parent=0 // pred_fallthru
    _
  // Predicated region
  $region26: #{rnn_forward.1} parent=0 // pred_check
    _
  $region27: #{rnn_forward.1} parent=0 // pred_check_branch
    %28 = sbr.rel (0) target = $region29
  $region28: #{rnn_forward.1} parent=0 // pred_region
    _
  $region29: #{rnn_forward.1} parent=0 // pred_fallthru
    _
  // Predicated region
  $region30: #{rnn_forward.1} parent=0 // pred_check
    _
  $region31: #{rnn_forward.1} parent=0 // pred_check_branch
    %30 = sbr.rel (0) target = $region33
  $region32: #{rnn_forward.1} parent=0 // pred_region
    _
  $region33: #{rnn_forward.1} parent=0 // pred_fallthru
    _
  %v31 = vld [vmem:[%s0] sm:$0xff]
  %v32 = vld [vmem:[%s0 + $0x8] sm:$0xff]
  %v33 = vld [vmem:[%s0 + $0x10] sm:$0xff]
  %v34 = vld [vmem:[%s0 + $0x18] sm:$0xff]
  %v35 = vld [vmem:[%s0 + $0x20] sm:$0xff]
  %v36 = vld [vmem:[%s0 + $0x28] sm:$0xff]
  %v37 = vld [vmem:[%s0 + $0x30] sm:$0xff]
  %v38 = vld [vmem:[%s0 + $0x38] sm:$0xff]
  %v39 = vld [vmem:[%s1] sm:$0xff]
  %v40 = vld [vmem:[%s1 + $0x8] sm:$0xff]
  %v41 = vld [vmem:[%s1 + $0x10] sm:$0xff]
  %v42 = vld [vmem:[%s1 + $0x18] sm:$0xff]
  %v43 = vld [vmem:[%s1 + $0x20] sm:$0xff]
  %v44 = vld [vmem:[%s1 + $0x28] sm:$0xff]
  %v45 = vld [vmem:[%s1 + $0x30] sm:$0xff]
  %v46 = vld [vmem:[%s1 + $0x38] sm:$0xff]
  %v47 = vld [vmem:[%s1 + $0x40] sm:$0xff]
  %v48 = vld [vmem:[%s1 + $0x48] sm:$0xff]
  %v49 = vld [vmem:[%s1 + $0x50] sm:$0xff]
  %v50 = vld [vmem:[%s1 + $0x58] sm:$0xff]
  %v51 = vld [vmem:[%s1 + $0x60] sm:$0xff]
  %v52 = vld [vmem:[%s1 + $0x68] sm:$0xff]
  %v53 = vld [vmem:[%s1 + $0x70] sm:$0xff]
  %v54 = vld [vmem:[%s1 + $0x78] sm:$0xff]
  %v55 = vld [vmem:[%s1 + $0x80] sm:$0xff]
  %v56 = vld [vmem:[%s1 + $0x88] sm:$0xff]
  %v57 = vld [vmem:[%s1 + $0x90] sm:$0xff]
  %v58 = vld [vmem:[%s1 + $0x98] sm:$0xff]
  %v59 = vld [vmem:[%s1 + $0xa0] sm:$0xff]
  %v60 = vld [vmem:[%s1 + $0xa8] sm:$0xff]
  %v61 = vld [vmem:[%s1 + $0xb0] sm:$0xff]
  %v62 = vld [vmem:[%s1 + $0xb8] sm:$0xff]
  %v63 = vld [vmem:[%s1 + $0xc0] sm:$0xff]
  %v64 = vld [vmem:[%s1 + $0xc8] sm:$0xff]
  %v65 = vld [vmem:[%s1 + $0xd0] sm:$0xff]
  %v66 = vld [vmem:[%s1 + $0xd8] sm:$0xff]
  %v67 = vld [vmem:[%s1 + $0xe0] sm:$0xff]
  %v68 = vld [vmem:[%s1 + $0xe8] sm:$0xff]
  %v69 = vld [vmem:[%s1 + $0xf0] sm:$0xff]
  %v70 = vld [vmem:[%s1 + $0xf8] sm:$0xff]
  %v71 = vld [vmem:[%s1 + $0x100] sm:$0xff]
  %v72 = vld [vmem:[%s1 + $0x108] sm:$0xff]
  %v73 = vld [vmem:[%s1 + $0x110] sm:$0xff]
  %v74 = vld [vmem:[%s1 + $0x118] sm:$0xff]
  %v75 = vld [vmem:[%s1 + $0x120] sm:$0xff]
  %v76 = vld [vmem:[%s1 + $0x128] sm:$0xff]
  %v77 = vld [vmem:[%s1 + $0x130] sm:$0xff]
  %v78 = vld [vmem:[%s1 + $0x138] sm:$0xff]
  %v79 = vld [vmem:[%s1 + $0x140] sm:$0xff]
  %v80 = vld [vmem:[%s1 + $0x148] sm:$0xff]
  %v81 = vld [vmem:[%s1 + $0x150] sm:$0xff]
  %v82 = vld [vmem:[%s1 + $0x158] sm:$0xff]
  %v83 = vld [vmem:[%s1 + $0x160] sm:$0xff]
  %v84 = vld [vmem:[%s1 + $0x168] sm:$0xff]
  %v85 = vld [vmem:[%s1 + $0x170] sm:$0xff]
  %v86 = vld [vmem:[%s1 + $0x178] sm:$0xff]
  %v87 = vld [vmem:[%s1 + $0x180] sm:$0xff]
  %v88 = vld [vmem:[%s1 + $0x188] sm:$0xff]
  %v89 = vld [vmem:[%s1 + $0x190] sm:$0xff]
  %v90 = vld [vmem:[%s1 + $0x198] sm:$0xff]
  %v91 = vld [vmem:[%s1 + $0x1a0] sm:$0xff]
  %v92 = vld [vmem:[%s1 + $0x1a8] sm:$0xff]
  %v93 = vld [vmem:[%s1 + $0x1b0] sm:$0xff]
  %v94 = vld [vmem:[%s1 + $0x1b8] sm:$0xff]
  %v95 = vld [vmem:[%s1 + $0x1c0] sm:$0xff]
  %v96 = vld [vmem:[%s1 + $0x1c8] sm:$0xff]
  %v97 = vld [vmem:[%s1 + $0x1d0] sm:$0xff]
  %v98 = vld [vmem:[%s1 + $0x1d8] sm:$0xff]
  %v99 = vld [vmem:[%s1 + $0x1e0] sm:$0xff]
  %v100 = vld [vmem:[%s1 + $0x1e8] sm:$0xff]
  %v101 = vld [vmem:[%s1 + $0x1f0] sm:$0xff]
  %v102 = vld [vmem:[%s1 + $0x1f8] sm:$0xff]
  %v103 = vld [vmem:[%s2] sm:$0xf]
  %v105 = vlaneseq
  %v106 = vshrl.u32 %v105, 7
  %v107 = vsub.s32 0, %v106
  %v108 = vrot.slane %v103, %v107
  %v109 = vlaneseq
  %v110 = vshrl.u32 %v109, 7
  %v111 = vsub.s32 1, %v110
  %v112 = vrot.slane %v103, %v111
  %v113 = vlaneseq
  %v114 = vshrl.u32 %v113, 7
  %v115 = vsub.s32 2, %v114
  %v116 = vrot.slane %v103, %v115
  %v117 = vlaneseq
  %v118 = vshrl.u32 %v117, 7
  %v119 = vsub.s32 3, %v118
  %v120 = vrot.slane %v103, %v119
  %125 = vmatprep.subr.mxu0 %v100
  %126 = vmatpush1.msra.mxu0 %v99
  %127 = vmatprep.subr.mxu0 %v96
  %128 = vmatpush1.msra.mxu0 %v95
  %129 = vmatprep.subr.mxu0 %v92
  %130 = vmatpush1.msra.mxu0 %v91
  %131 = vmatprep.subr.mxu0 %v88
  %132 = vmatpush1.msra.mxu0 %v87
  %133 = vmatprep.subr.mxu0 %v84
  %134 = vmatpush1.msra.mxu0 %v83
  %135 = vmatprep.subr.mxu0 %v80
  %136 = vmatpush1.msra.mxu0 %v79
  %137 = vmatprep.subr.mxu0 %v76
  %138 = vmatpush1.msra.mxu0 %v75
  %139 = vmatprep.subr.mxu0 %v72
  %140 = vmatpush1.msra.mxu0 %v71
  %141 = vmatprep.subr.mxu0 %v68
  %142 = vmatpush1.msra.mxu0 %v67
  %143 = vmatprep.subr.mxu0 %v64
  %144 = vmatpush1.msra.mxu0 %v63
  %145 = vmatprep.subr.mxu0 %v60
  %146 = vmatpush1.msra.mxu0 %v59
  %147 = vmatprep.subr.mxu0 %v56
  %148 = vmatpush1.msra.mxu0 %v55
  %149 = vmatprep.subr.mxu0 %v52
  %150 = vmatpush1.msra.mxu0 %v51
  %151 = vmatprep.subr.mxu0 %v48
  %152 = vmatpush1.msra.mxu0 %v47
  %153 = vmatprep.subr.mxu0 %v44
  %154 = vmatpush1.msra.mxu0 %v43
  %155 = vmatprep.subr.mxu0 %v40
  %156 = vmatpush1.msra.mxu0 %v39
  %157 = vmatprep.subr.mxu0 0.0
  %158 = vmatpush2.msra.mxu0 0.0
  %159 = vmatprep.subr.mxu0 0.0
  %160 = vmatpush2.msra.mxu0 0.0
  %161 = vmatprep.subr.mxu0 0.0
  %162 = vmatpush2.msra.mxu0 0.0
  %163 = vmatprep.subr.mxu0 0.0
  %164 = vmatpush2.msra.mxu0 0.0
  %165 = vmatprep.subr.mxu0 0.0
  %166 = vmatpush2.msra.mxu0 0.0
  %167 = vmatprep.subr.mxu0 0.0
  %168 = vmatpush2.msra.mxu0 0.0
  %169 = vmatprep.subr.mxu0 0.0
  %170 = vmatpush2.msra.mxu0 0.0
  %171 = vmatprep.subr.mxu0 0.0
  %172 = vmatpush2.msra.mxu0 0.0
  %173 = vmatprep.subr.mxu0 0.0
  %174 = vmatpush2.msra.mxu0 0.0
  %175 = vmatprep.subr.mxu0 0.0
  %176 = vmatpush2.msra.mxu0 0.0
  %177 = vmatprep.subr.mxu0 0.0
  %178 = vmatpush2.msra.mxu0 0.0
  %179 = vmatprep.subr.mxu0 0.0
  %180 = vmatpush2.msra.mxu0 0.0
  %181 = vmatprep.subr.mxu0 0.0
  %182 = vmatpush2.msra.mxu0 0.0
  %183 = vmatprep.subr.mxu0 0.0
  %184 = vmatpush2.msra.mxu0 0.0
  %185 = vmatprep.subr.mxu0 0.0
  %186 = vmatpush2.msra.mxu0 0.0
  %187 = vmatprep.subr.mxu0 0.0
  %188 = vmatpush2.msra.mxu0 0.0
  %189 = vmatprep.mubr.f32.mxu0 0.0
  %190 = vmatmul.mubr.f32.gmra.mxu0 %v31
  %v191 = vpop.f32.mrf.mxu0
  %v192 = vadd.f32 %v108, %v191
  %v193 = vpop.f32.mrf.mxu0
  %v194 = vadd.f32 %v112, %v193
  %195 = vmatprep.mubr.f32.mxu0 0.0
  %196 = vmatmul.mubr.f32.gmra.mxu0 %v32
  %v197 = vpop.f32.mrf.mxu0
  %v198 = vadd.f32 %v108, %v197
  %v199 = vpop.f32.mrf.mxu0
  %v200 = vadd.f32 %v112, %v199
  %201 = vmatprep.mubr.f32.mxu0 0.0
  %202 = vmatmul.mubr.f32.gmra.mxu0 %v33
  %v203 = vpop.f32.mrf.mxu0
  %v204 = vadd.f32 %v108, %v203
  %v205 = vpop.f32.mrf.mxu0
  %v206 = vadd.f32 %v112, %v205
  %207 = vmatprep.mubr.f32.mxu0 0.0
  %208 = vmatmul.mubr.f32.gmra.mxu0 %v34
  %v209 = vpop.f32.mrf.mxu0
  %v210 = vadd.f32 %v108, %v209
  %v211 = vpop.f32.mrf.mxu0
  %v212 = vadd.f32 %v112, %v211
  %213 = vmatprep.mubr.f32.mxu0 0.0
  %214 = vmatmul.mubr.f32.gmra.mxu0 %v35
  %v215 = vpop.f32.mrf.mxu0
  %v216 = vadd.f32 %v108, %v215
  %v217 = vpop.f32.mrf.mxu0
  %v218 = vadd.f32 %v112, %v217
  %219 = vmatprep.mubr.f32.mxu0 0.0
  %220 = vmatmul.mubr.f32.gmra.mxu0 %v36
  %v221 = vpop.f32.mrf.mxu0
  %v222 = vadd.f32 %v108, %v221
  %v223 = vpop.f32.mrf.mxu0
  %v224 = vadd.f32 %v112, %v223
  %225 = vmatprep.mubr.f32.mxu0 0.0
  %226 = vmatmul.mubr.f32.gmra.mxu0 %v37
  %v227 = vpop.f32.mrf.mxu0
  %v228 = vadd.f32 %v108, %v227
  %v229 = vpop.f32.mrf.mxu0
  %v230 = vadd.f32 %v112, %v229
  %231 = vmatprep.mubr.f32.mxu0 0.0
  %232 = vmatmul.mubr.f32.gmra.mxu0 %v38
  %v233 = vpop.f32.mrf.mxu0
  %v234 = vadd.f32 %v108, %v233
  %v235 = vpop.f32.mrf.mxu0
  %v236 = vadd.f32 %v112, %v235
  %237 = vdwg.mxu0
  %238 = vmatprep.subr.mxu0 %v102
  %239 = vmatpush1.msra.mxu0 %v101
  %240 = vmatprep.subr.mxu0 %v98
  %241 = vmatpush1.msra.mxu0 %v97
  %242 = vmatprep.subr.mxu0 %v94
  %243 = vmatpush1.msra.mxu0 %v93
  %244 = vmatprep.subr.mxu0 %v90
  %245 = vmatpush1.msra.mxu0 %v89
  %246 = vmatprep.subr.mxu0 %v86
  %247 = vmatpush1.msra.mxu0 %v85
  %248 = vmatprep.subr.mxu0 %v82
  %249 = vmatpush1.msra.mxu0 %v81
  %250 = vmatprep.subr.mxu0 %v78
  %251 = vmatpush1.msra.mxu0 %v77
  %252 = vmatprep.subr.mxu0 %v74
  %253 = vmatpush1.msra.mxu0 %v73
  %254 = vmatprep.subr.mxu0 %v70
  %255 = vmatpush1.msra.mxu0 %v69
  %256 = vmatprep.subr.mxu0 %v66
  %257 = vmatpush1.msra.mxu0 %v65
  %258 = vmatprep.subr.mxu0 %v62
  %259 = vmatpush1.msra.mxu0 %v61
  %260 = vmatprep.subr.mxu0 %v58
  %261 = vmatpush1.msra.mxu0 %v57
  %262 = vmatprep.subr.mxu0 %v54
  %263 = vmatpush1.msra.mxu0 %v53
  %264 = vmatprep.subr.mxu0 %v50
  %265 = vmatpush1.msra.mxu0 %v49
  %266 = vmatprep.subr.mxu0 %v46
  %267 = vmatpush1.msra.mxu0 %v45
  %268 = vmatprep.subr.mxu0 %v42
  %269 = vmatpush1.msra.mxu0 %v41
  %270 = vmatprep.subr.mxu0 0.0
  %271 = vmatpush2.msra.mxu0 0.0
  %272 = vmatprep.subr.mxu0 0.0
  %273 = vmatpush2.msra.mxu0 0.0
  %274 = vmatprep.subr.mxu0 0.0
  %275 = vmatpush2.msra.mxu0 0.0
  %276 = vmatprep.subr.mxu0 0.0
  %277 = vmatpush2.msra.mxu0 0.0
  %278 = vmatprep.subr.mxu0 0.0
  %279 = vmatpush2.msra.mxu0 0.0
  %280 = vmatprep.subr.mxu0 0.0
  %281 = vmatpush2.msra.mxu0 0.0
  %282 = vmatprep.subr.mxu0 0.0
  %283 = vmatpush2.msra.mxu0 0.0
  %284 = vmatprep.subr.mxu0 0.0
  %285 = vmatpush2.msra.mxu0 0.0
  %286 = vmatprep.subr.mxu0 0.0
  %287 = vmatpush2.msra.mxu0 0.0
  %288 = vmatprep.subr.mxu0 0.0
  %289 = vmatpush2.msra.mxu0 0.0
  %290 = vmatprep.subr.mxu0 0.0
  %291 = vmatpush2.msra.mxu0 0.0
  %292 = vmatprep.subr.mxu0 0.0
  %293 = vmatpush2.msra.mxu0 0.0
  %294 = vmatprep.subr.mxu0 0.0
  %295 = vmatpush2.msra.mxu0 0.0
  %296 = vmatprep.subr.mxu0 0.0
  %297 = vmatpush2.msra.mxu0 0.0
  %298 = vmatprep.subr.mxu0 0.0
  %299 = vmatpush2.msra.mxu0 0.0
  %300 = vmatprep.subr.mxu0 0.0
  %301 = vmatpush2.msra.mxu0 0.0
  %302 = vmatprep.mubr.f32.mxu0 0.0
  %303 = vmatmul.mubr.f32.gmra.mxu0 %v31
  %v304 = vpop.f32.mrf.mxu0
  %v305 = vadd.f32 %v116, %v304
  %v306 = vpop.f32.mrf.mxu0
  %v307 = vadd.f32 %v120, %v306
  %308 = vmatprep.mubr.f32.mxu0 0.0
  %309 = vmatmul.mubr.f32.gmra.mxu0 %v32
  %v310 = vpop.f32.mrf.mxu0
  %v311 = vadd.f32 %v116, %v310
  %v312 = vpop.f32.mrf.mxu0
  %v313 = vadd.f32 %v120, %v312
  %314 = vmatprep.mubr.f32.mxu0 0.0
  %315 = vmatmul.mubr.f32.gmra.mxu0 %v33
  %v316 = vpop.f32.mrf.mxu0
  %v317 = vadd.f32 %v116, %v316
  %v318 = vpop.f32.mrf.mxu0
  %v319 = vadd.f32 %v120, %v318
  %320 = vmatprep.mubr.f32.mxu0 0.0
  %321 = vmatmul.mubr.f32.gmra.mxu0 %v34
  %v322 = vpop.f32.mrf.mxu0
  %v323 = vadd.f32 %v116, %v322
  %v324 = vpop.f32.mrf.mxu0
  %v325 = vadd.f32 %v120, %v324
  %326 = vmatprep.mubr.f32.mxu0 0.0
  %327 = vmatmul.mubr.f32.gmra.mxu0 %v35
  %v328 = vpop.f32.mrf.mxu0
  %v329 = vadd.f32 %v116, %v328
  %v330 = vpop.f32.mrf.mxu0
  %v331 = vadd.f32 %v120, %v330
  %332 = vmatprep.mubr.f32.mxu0 0.0
  %333 = vmatmul.mubr.f32.gmra.mxu0 %v36
  %v334 = vpop.f32.mrf.mxu0
  %v335 = vadd.f32 %v116, %v334
  %v336 = vpop.f32.mrf.mxu0
  %v337 = vadd.f32 %v120, %v336
  %338 = vmatprep.mubr.f32.mxu0 0.0
  %339 = vmatmul.mubr.f32.gmra.mxu0 %v37
  %v340 = vpop.f32.mrf.mxu0
  %v341 = vadd.f32 %v116, %v340
  %v342 = vpop.f32.mrf.mxu0
  %v343 = vadd.f32 %v120, %v342
  %344 = vmatprep.mubr.f32.mxu0 0.0
  %345 = vmatmul.mubr.f32.gmra.mxu0 %v38
  %v346 = vpop.f32.mrf.mxu0
  %v347 = vadd.f32 %v116, %v346
  %v348 = vpop.f32.mrf.mxu0
  %v349 = vadd.f32 %v120, %v348
  %350 = vdwg.mxu0
  %351 = vst [vmem:[#allocation2] sm:$0xff] %v192
  %352 = vst [vmem:[#allocation2 + $0x8] sm:$0xff] %v194
  %353 = vst [vmem:[#allocation2 + $0x10] sm:$0xff] %v305
  %354 = vst [vmem:[#allocation2 + $0x18] sm:$0xff] %v307
  %355 = vst [vmem:[#allocation2 + $0x20] sm:$0xff] %v198
  %356 = vst [vmem:[#allocation2 + $0x28] sm:$0xff] %v200
  %357 = vst [vmem:[#allocation2 + $0x30] sm:$0xff] %v311
  %358 = vst [vmem:[#allocation2 + $0x38] sm:$0xff] %v313
  %359 = vst [vmem:[#allocation2 + $0x40] sm:$0xff] %v204
  %360 = vst [vmem:[#allocation2 + $0x48] sm:$0xff] %v206
  %361 = vst [vmem:[#allocation2 + $0x50] sm:$0xff] %v317
  %362 = vst [vmem:[#allocation2 + $0x58] sm:$0xff] %v319
  %363 = vst [vmem:[#allocation2 + $0x60] sm:$0xff] %v210
  %364 = vst [vmem:[#allocation2 + $0x68] sm:$0xff] %v212
  %365 = vst [vmem:[#allocation2 + $0x70] sm:$0xff] %v323
  %366 = vst [vmem:[#allocation2 + $0x78] sm:$0xff] %v325
  %367 = vst [vmem:[#allocation2 + $0x80] sm:$0xff] %v216
  %368 = vst [vmem:[#allocation2 + $0x88] sm:$0xff] %v218
  %369 = vst [vmem:[#allocation2 + $0x90] sm:$0xff] %v329
  %370 = vst [vmem:[#allocation2 + $0x98] sm:$0xff] %v331
  %371 = vst [vmem:[#allocation2 + $0xa0] sm:$0xff] %v222
  %372 = vst [vmem:[#allocation2 + $0xa8] sm:$0xff] %v224
  %373 = vst [vmem:[#allocation2 + $0xb0] sm:$0xff] %v335
  %374 = vst [vmem:[#allocation2 + $0xb8] sm:$0xff] %v337
  %375 = vst [vmem:[#allocation2 + $0xc0] sm:$0xff] %v228
  %376 = vst [vmem:[#allocation2 + $0xc8] sm:$0xff] %v230
  %377 = vst [vmem:[#allocation2 + $0xd0] sm:$0xff] %v341
  %378 = vst [vmem:[#allocation2 + $0xd8] sm:$0xff] %v343
  %379 = vst [vmem:[#allocation2 + $0xe0] sm:$0xff] %v234
  %380 = vst [vmem:[#allocation2 + $0xe8] sm:$0xff] %v236
  %381 = vst [vmem:[#allocation2 + $0xf0] sm:$0xff] %v347
  %382 = vst [vmem:[#allocation2 + $0xf8] sm:$0xff] %v349
  %p383 = scmp.eq.s32.totalorder 0, 0
  // Predicated region
  $region34: #{rnn_forward.1} parent=0 // pred_check
    %p384 = pneg %p383
  $region35: #{rnn_forward.1} parent=0 // pred_check_branch
    %386 = sbr.rel (%p384) target = $region37
  $region36: #{rnn_forward.1} parent=0 // pred_region
    %387 = vst [vmem:[#allocation3] sm:$0xff] 0.0
    %388 = vst [vmem:[#allocation4] sm:$0xff] 0.0
    %389 = vst [vmem:[#allocation5] sm:$0xff] 0.0
    %390 = vst [vmem:[#allocation6] sm:$0xff] 0.0
    %391 = vst [vmem:[#allocation7] sm:$0xff] 0.0
    %392 = vst [vmem:[#allocation8] sm:$0xff] 0.0
    %393 = vst [vmem:[#allocation8 + $0x8] sm:$0xff] 0.0
    %394 = vst [vmem:[#allocation8 + $0x10] sm:$0xff] 0.0
    %395 = vst [vmem:[#allocation8 + $0x18] sm:$0xff] 0.0
    %v396 = vld [vmem:[%s5] sm:$0xf]
    %v398 = vlaneseq
    %v399 = vshrl.u32 %v398, 7
    %v400 = vsub.s32 0, %v399
    %v401 = vrot.slane %v396, %v400
    %v402 = vlaneseq
    %v403 = vshrl.u32 %v402, 7
    %v404 = vsub.s32 1, %v403
    %v405 = vrot.slane %v396, %v404
    %v406 = vlaneseq
    %v407 = vshrl.u32 %v406, 7
    %v408 = vsub.s32 2, %v407
    %v409 = vrot.slane %v396, %v408
    %v410 = vlaneseq
    %v411 = vshrl.u32 %v410, 7
    %v412 = vsub.s32 3, %v411
    %v413 = vrot.slane %v396, %v412
    %418 = vst [vmem:[#allocation9] sm:$0xff] %v401
    %419 = vst [vmem:[#allocation9 + $0x8] sm:$0xff] %v405
    %420 = vst [vmem:[#allocation9 + $0x10] sm:$0xff] %v409
    %421 = vst [vmem:[#allocation9 + $0x18] sm:$0xff] %v413
  $region37: #{rnn_forward.1} parent=0 // pred_fallthru
    _
  %v422 = vld [vmem:[%s3] sm:$0xff]
  %v423 = vld [vmem:[%s3 + $0x8] sm:$0xff]
  %v424 = vld [vmem:[%s3 + $0x10] sm:$0xff]
  %v425 = vld [vmem:[%s3 + $0x18] sm:$0xff]
  %v426 = vld [vmem:[%s3 + $0x20] sm:$0xff]
  %v427 = vld [vmem:[%s3 + $0x28] sm:$0xff]
  %v428 = vld [vmem:[%s3 + $0x30] sm:$0xff]
  %v429 = vld [vmem:[%s3 + $0x38] sm:$0xff]
  %v430 = vld [vmem:[%s3 + $0x40] sm:$0xff]
  %v431 = vld [vmem:[%s3 + $0x48] sm:$0xff]
  %v432 = vld [vmem:[%s3 + $0x50] sm:$0xff]
  %v433 = vld [vmem:[%s3 + $0x58] sm:$0xff]
  %v434 = vld [vmem:[%s3 + $0x60] sm:$0xff]
  %v435 = vld [vmem:[%s3 + $0x68] sm:$0xff]
  %v436 = vld [vmem:[%s3 + $0x70] sm:$0xff]
  %v437 = vld [vmem:[%s3 + $0x78] sm:$0xff]
  %v438 = vld [vmem:[%s3 + $0x80] sm:$0xff]
  %v439 = vld [vmem:[%s3 + $0x88] sm:$0xff]
  %v440 = vld [vmem:[%s3 + $0x90] sm:$0xff]
  %v441 = vld [vmem:[%s3 + $0x98] sm:$0xff]
  %v442 = vld [vmem:[%s3 + $0xa0] sm:$0xff]
  %v443 = vld [vmem:[%s3 + $0xa8] sm:$0xff]
  %v444 = vld [vmem:[%s3 + $0xb0] sm:$0xff]
  %v445 = vld [vmem:[%s3 + $0xb8] sm:$0xff]
  %v446 = vld [vmem:[%s3 + $0xc0] sm:$0xff]
  %v447 = vld [vmem:[%s3 + $0xc8] sm:$0xff]
  %v448 = vld [vmem:[%s3 + $0xd0] sm:$0xff]
  %v449 = vld [vmem:[%s3 + $0xd8] sm:$0xff]
  %v450 = vld [vmem:[%s3 + $0xe0] sm:$0xff]
  %v451 = vld [vmem:[%s3 + $0xe8] sm:$0xff]
  %v452 = vld [vmem:[%s3 + $0xf0] sm:$0xff]
  %v453 = vld [vmem:[%s3 + $0xf8] sm:$0xff]
  %v454 = vld [vmem:[%s3 + $0x100] sm:$0xff]
  %v455 = vld [vmem:[%s3 + $0x108] sm:$0xff]
  %v456 = vld [vmem:[%s3 + $0x110] sm:$0xff]
  %v457 = vld [vmem:[%s3 + $0x118] sm:$0xff]
  %v458 = vld [vmem:[%s3 + $0x120] sm:$0xff]
  %v459 = vld [vmem:[%s3 + $0x128] sm:$0xff]
  %v460 = vld [vmem:[%s3 + $0x130] sm:$0xff]
  %v461 = vld [vmem:[%s3 + $0x138] sm:$0xff]
  %v462 = vld [vmem:[%s3 + $0x140] sm:$0xff]
  %v463 = vld [vmem:[%s3 + $0x148] sm:$0xff]
  %v464 = vld [vmem:[%s3 + $0x150] sm:$0xff]
  %v465 = vld [vmem:[%s3 + $0x158] sm:$0xff]
  %v466 = vld [vmem:[%s3 + $0x160] sm:$0xff]
  %v467 = vld [vmem:[%s3 + $0x168] sm:$0xff]
  %v468 = vld [vmem:[%s3 + $0x170] sm:$0xff]
  %v469 = vld [vmem:[%s3 + $0x178] sm:$0xff]
  %v470 = vld [vmem:[%s3 + $0x180] sm:$0xff]
  %v471 = vld [vmem:[%s3 + $0x188] sm:$0xff]
  %v472 = vld [vmem:[%s3 + $0x190] sm:$0xff]
  %v473 = vld [vmem:[%s3 + $0x198] sm:$0xff]
  %v474 = vld [vmem:[%s3 + $0x1a0] sm:$0xff]
  %v475 = vld [vmem:[%s3 + $0x1a8] sm:$0xff]
  %v476 = vld [vmem:[%s3 + $0x1b0] sm:$0xff]
  %v477 = vld [vmem:[%s3 + $0x1b8] sm:$0xff]
  %v478 = vld [vmem:[%s3 + $0x1c0] sm:$0xff]
  %v479 = vld [vmem:[%s3 + $0x1c8] sm:$0xff]
  %v480 = vld [vmem:[%s3 + $0x1d0] sm:$0xff]
  %v481 = vld [vmem:[%s3 + $0x1d8] sm:$0xff]
  %v482 = vld [vmem:[%s3 + $0x1e0] sm:$0xff]
  %v483 = vld [vmem:[%s3 + $0x1e8] sm:$0xff]
  %v484 = vld [vmem:[%s3 + $0x1f0] sm:$0xff]
  %v485 = vld [vmem:[%s3 + $0x1f8] sm:$0xff]
  %v486 = vld [vmem:[%s3 + $0x200] sm:$0xff]
  %v487 = vld [vmem:[%s3 + $0x208] sm:$0xff]
  %v488 = vld [vmem:[%s3 + $0x210] sm:$0xff]
  %v489 = vld [vmem:[%s3 + $0x218] sm:$0xff]
  %v490 = vld [vmem:[%s3 + $0x220] sm:$0xff]
  %v491 = vld [vmem:[%s3 + $0x228] sm:$0xff]
  %v492 = vld [vmem:[%s3 + $0x230] sm:$0xff]
  %v493 = vld [vmem:[%s3 + $0x238] sm:$0xff]
  %v494 = vld [vmem:[%s3 + $0x240] sm:$0xff]
  %v495 = vld [vmem:[%s3 + $0x248] sm:$0xff]
  %v496 = vld [vmem:[%s3 + $0x250] sm:$0xff]
  %v497 = vld [vmem:[%s3 + $0x258] sm:$0xff]
  %v498 = vld [vmem:[%s3 + $0x260] sm:$0xff]
  %v499 = vld [vmem:[%s3 + $0x268] sm:$0xff]
  %v500 = vld [vmem:[%s3 + $0x270] sm:$0xff]
  %v501 = vld [vmem:[%s3 + $0x278] sm:$0xff]
  %v502 = vld [vmem:[%s3 + $0x280] sm:$0xff]
  %v503 = vld [vmem:[%s3 + $0x288] sm:$0xff]
  %v504 = vld [vmem:[%s3 + $0x290] sm:$0xff]
  %v505 = vld [vmem:[%s3 + $0x298] sm:$0xff]
  %v506 = vld [vmem:[%s3 + $0x2a0] sm:$0xff]
  %v507 = vld [vmem:[%s3 + $0x2a8] sm:$0xff]
  %v508 = vld [vmem:[%s3 + $0x2b0] sm:$0xff]
  %v509 = vld [vmem:[%s3 + $0x2b8] sm:$0xff]
  %v510 = vld [vmem:[%s3 + $0x2c0] sm:$0xff]
  %v511 = vld [vmem:[%s3 + $0x2c8] sm:$0xff]
  %v512 = vld [vmem:[%s3 + $0x2d0] sm:$0xff]
  %v513 = vld [vmem:[%s3 + $0x2d8] sm:$0xff]
  %v514 = vld [vmem:[%s3 + $0x2e0] sm:$0xff]
  %v515 = vld [vmem:[%s3 + $0x2e8] sm:$0xff]
  %v516 = vld [vmem:[%s3 + $0x2f0] sm:$0xff]
  %v517 = vld [vmem:[%s3 + $0x2f8] sm:$0xff]
  %v518 = vld [vmem:[%s3 + $0x300] sm:$0xff]
  %v519 = vld [vmem:[%s3 + $0x308] sm:$0xff]
  %v520 = vld [vmem:[%s3 + $0x310] sm:$0xff]
  %v521 = vld [vmem:[%s3 + $0x318] sm:$0xff]
  %v522 = vld [vmem:[%s3 + $0x320] sm:$0xff]
  %v523 = vld [vmem:[%s3 + $0x328] sm:$0xff]
  %v524 = vld [vmem:[%s3 + $0x330] sm:$0xff]
  %v525 = vld [vmem:[%s3 + $0x338] sm:$0xff]
  %v526 = vld [vmem:[%s3 + $0x340] sm:$0xff]
  %v527 = vld [vmem:[%s3 + $0x348] sm:$0xff]
  %v528 = vld [vmem:[%s3 + $0x350] sm:$0xff]
  %v529 = vld [vmem:[%s3 + $0x358] sm:$0xff]
  %v530 = vld [vmem:[%s3 + $0x360] sm:$0xff]
  %v531 = vld [vmem:[%s3 + $0x368] sm:$0xff]
  %v532 = vld [vmem:[%s3 + $0x370] sm:$0xff]
  %v533 = vld [vmem:[%s3 + $0x378] sm:$0xff]
  %v534 = vld [vmem:[%s3 + $0x380] sm:$0xff]
  %v535 = vld [vmem:[%s3 + $0x388] sm:$0xff]
  %v536 = vld [vmem:[%s3 + $0x390] sm:$0xff]
  %v537 = vld [vmem:[%s3 + $0x398] sm:$0xff]
  %v538 = vld [vmem:[%s3 + $0x3a0] sm:$0xff]
  %v539 = vld [vmem:[%s3 + $0x3a8] sm:$0xff]
  %v540 = vld [vmem:[%s3 + $0x3b0] sm:$0xff]
  %v541 = vld [vmem:[%s3 + $0x3b8] sm:$0xff]
  %v542 = vld [vmem:[%s3 + $0x3c0] sm:$0xff]
  %v543 = vld [vmem:[%s3 + $0x3c8] sm:$0xff]
  %v544 = vld [vmem:[%s3 + $0x3d0] sm:$0xff]
  %v545 = vld [vmem:[%s3 + $0x3d8] sm:$0xff]
  %v546 = vld [vmem:[%s3 + $0x3e0] sm:$0xff]
  %v547 = vld [vmem:[%s3 + $0x3e8] sm:$0xff]
  %v548 = vld [vmem:[%s3 + $0x3f0] sm:$0xff]
  %v549 = vld [vmem:[%s3 + $0x3f8] sm:$0xff]
  %v550 = vld [vmem:[%s4] sm:$0xff]
  %v551 = vld [vmem:[%s4 + $0x8] sm:$0xff]
  %v552 = vld [vmem:[%s4 + $0x10] sm:$0xff]
  %v553 = vld [vmem:[%s4 + $0x18] sm:$0xff]
  %v554 = vld [vmem:[%s4 + $0x20] sm:$0xff]
  %v555 = vld [vmem:[%s4 + $0x28] sm:$0xff]
  %v556 = vld [vmem:[%s4 + $0x30] sm:$0xff]
  %v557 = vld [vmem:[%s4 + $0x38] sm:$0xff]
  %v558 = vld [vmem:[%s4 + $0x40] sm:$0xff]
  %v559 = vld [vmem:[%s4 + $0x48] sm:$0xff]
  %v560 = vld [vmem:[%s4 + $0x50] sm:$0xff]
  %v561 = vld [vmem:[%s4 + $0x58] sm:$0xff]
  %v562 = vld [vmem:[%s4 + $0x60] sm:$0xff]
  %v563 = vld [vmem:[%s4 + $0x68] sm:$0xff]
  %v564 = vld [vmem:[%s4 + $0x70] sm:$0xff]
  %v565 = vld [vmem:[%s4 + $0x78] sm:$0xff]
  %v566 = vld [vmem:[%s4 + $0x80] sm:$0xff]
  %v567 = vld [vmem:[%s4 + $0x88] sm:$0xff]
  %v568 = vld [vmem:[%s4 + $0x90] sm:$0xff]
  %v569 = vld [vmem:[%s4 + $0x98] sm:$0xff]
  %v570 = vld [vmem:[%s4 + $0xa0] sm:$0xff]
  %v571 = vld [vmem:[%s4 + $0xa8] sm:$0xff]
  %v572 = vld [vmem:[%s4 + $0xb0] sm:$0xff]
  %v573 = vld [vmem:[%s4 + $0xb8] sm:$0xff]
  %v574 = vld [vmem:[%s4 + $0xc0] sm:$0xff]
  %v575 = vld [vmem:[%s4 + $0xc8] sm:$0xff]
  %v576 = vld [vmem:[%s4 + $0xd0] sm:$0xff]
  %v577 = vld [vmem:[%s4 + $0xd8] sm:$0xff]
  %v578 = vld [vmem:[%s4 + $0xe0] sm:$0xff]
  %v579 = vld [vmem:[%s4 + $0xe8] sm:$0xff]
  %v580 = vld [vmem:[%s4 + $0xf0] sm:$0xff]
  %v581 = vld [vmem:[%s4 + $0xf8] sm:$0xff]
  %v582 = vld [vmem:[%s4 + $0x100] sm:$0xff]
  %v583 = vld [vmem:[%s4 + $0x108] sm:$0xff]
  %v584 = vld [vmem:[%s4 + $0x110] sm:$0xff]
  %v585 = vld [vmem:[%s4 + $0x118] sm:$0xff]
  %v586 = vld [vmem:[%s4 + $0x120] sm:$0xff]
  %v587 = vld [vmem:[%s4 + $0x128] sm:$0xff]
  %v588 = vld [vmem:[%s4 + $0x130] sm:$0xff]
  %v589 = vld [vmem:[%s4 + $0x138] sm:$0xff]
  %v590 = vld [vmem:[%s4 + $0x140] sm:$0xff]
  %v591 = vld [vmem:[%s4 + $0x148] sm:$0xff]
  %v592 = vld [vmem:[%s4 + $0x150] sm:$0xff]
  %v593 = vld [vmem:[%s4 + $0x158] sm:$0xff]
  %v594 = vld [vmem:[%s4 + $0x160] sm:$0xff]
  %v595 = vld [vmem:[%s4 + $0x168] sm:$0xff]
  %v596 = vld [vmem:[%s4 + $0x170] sm:$0xff]
  %v597 = vld [vmem:[%s4 + $0x178] sm:$0xff]
  %v598 = vld [vmem:[%s4 + $0x180] sm:$0xff]
  %v599 = vld [vmem:[%s4 + $0x188] sm:$0xff]
  %v600 = vld [vmem:[%s4 + $0x190] sm:$0xff]
  %v601 = vld [vmem:[%s4 + $0x198] sm:$0xff]
  %v602 = vld [vmem:[%s4 + $0x1a0] sm:$0xff]
  %v603 = vld [vmem:[%s4 + $0x1a8] sm:$0xff]
  %v604 = vld [vmem:[%s4 + $0x1b0] sm:$0xff]
  %v605 = vld [vmem:[%s4 + $0x1b8] sm:$0xff]
  %v606 = vld [vmem:[%s4 + $0x1c0] sm:$0xff]
  %v607 = vld [vmem:[%s4 + $0x1c8] sm:$0xff]
  %v608 = vld [vmem:[%s4 + $0x1d0] sm:$0xff]
  %v609 = vld [vmem:[%s4 + $0x1d8] sm:$0xff]
  %v610 = vld [vmem:[%s4 + $0x1e0] sm:$0xff]
  %v611 = vld [vmem:[%s4 + $0x1e8] sm:$0xff]
  %v612 = vld [vmem:[%s4 + $0x1f0] sm:$0xff]
  %v613 = vld [vmem:[%s4 + $0x1f8] sm:$0xff]
  %v614 = vld [vmem:[%s5] sm:$0xf]
  %v616 = vlaneseq
  %v617 = vshrl.u32 %v616, 7
  %v618 = vsub.s32 0, %v617
  %v619 = vrot.slane %v614, %v618
  %v620 = vlaneseq
  %v621 = vshrl.u32 %v620, 7
  %v622 = vsub.s32 1, %v621
  %v623 = vrot.slane %v614, %v622
  %v624 = vlaneseq
  %v625 = vshrl.u32 %v624, 7
  %v626 = vsub.s32 2, %v625
  %v627 = vrot.slane %v614, %v626
  %v628 = vlaneseq
  %v629 = vshrl.u32 %v628, 7
  %v630 = vsub.s32 3, %v629
  %v631 = vrot.slane %v614, %v630
  %v636 = vld [vmem:[#allocation4] sm:$0xff]
  %v637 = vld [vmem:[#allocation6] sm:$0xff]
  %v638 = vld [vmem:[#allocation7] sm:$0xff]
  %v639 = vld [vmem:[#allocation8] sm:$0xff]
  %v640 = vld [vmem:[#allocation8 + $0x8] sm:$0xff]
  %v641 = vld [vmem:[#allocation8 + $0x10] sm:$0xff]
  %v642 = vld [vmem:[#allocation8 + $0x18] sm:$0xff]
  %v643 = vld [vmem:[#allocation9] sm:$0xff]
  %v644 = vld [vmem:[#allocation9 + $0x8] sm:$0xff]
  %v645 = vld [vmem:[#allocation9 + $0x10] sm:$0xff]
  %v646 = vld [vmem:[#allocation9 + $0x18] sm:$0xff]
  %s647 = smul.u32 0, 4
  %s648 = smul.addr %s647, 8
  %s649 = scalar_lea.vmem [#allocation2], %s648
  %v650 = vld [vmem:[%s649] sm:$0xff]
  %v651 = vld [vmem:[%s649 + $0x8] sm:$0xff]
  %v652 = vld [vmem:[%s649 + $0x10] sm:$0xff]
  %v653 = vld [vmem:[%s649 + $0x18] sm:$0xff]
  %v654 = vadd.f32 %v650, %v639
  %v655 = vadd.f32 %v651, %v640
  %v656 = vadd.f32 %v652, %v641
  %v657 = vadd.f32 %v653, %v642
  %v658 = vxor.u32 %v654, 2147483648
  %v659 = vmul.f32 %v658, 1.442695
  %v660 = vpow.pop %v659
  %v661 = vadd.f32 %v660, 1.0
  %v662 = vrcp.pop %v661
  %v663 = vmul.f32 1.0, %v662
  %v664 = vxor.u32 %v655, 2147483648
  %v665 = vmul.f32 %v664, 1.442695
  %v666 = vpow.pop %v665
  %v667 = vadd.f32 %v666, 1.0
  %v668 = vrcp.pop %v667
  %v669 = vmul.f32 1.0, %v668
  %v670 = vtanh.pop %v656
  %v671 = vxor.u32 %v657, 2147483648
  %v672 = vmul.f32 %v671, 1.442695
  %v673 = vpow.pop %v672
  %v674 = vadd.f32 %v673, 1.0
  %v675 = vrcp.pop %v674
  %v676 = vmul.f32 1.0, %v675
  %v677 = vmul.f32 %v669, %v636
  %v678 = vmul.f32 %v663, %v670
  %v679 = vadd.f32 %v677, %v678
  %v680 = vtanh.pop %v679
  %v681 = vmul.f32 %v676, %v680
  %682 = vmatprep.subr.mxu0 %v543
  %683 = vmatpush1.msra.mxu0 %v542
  %684 = vmatprep.subr.mxu0 %v535
  %685 = vmatpush1.msra.mxu0 %v534
  %686 = vmatprep.subr.mxu0 %v527
  %687 = vmatpush1.msra.mxu0 %v526
  %688 = vmatprep.subr.mxu0 %v519
  %689 = vmatpush1.msra.mxu0 %v518
  %690 = vmatprep.subr.mxu0 %v511
  %691 = vmatpush1.msra.mxu0 %v510
  %692 = vmatprep.subr.mxu0 %v503
  %693 = vmatpush1.msra.mxu0 %v502
  %694 = vmatprep.subr.mxu0 %v495
  %695 = vmatpush1.msra.mxu0 %v494
  %696 = vmatprep.subr.mxu0 %v487
  %697 = vmatpush1.msra.mxu0 %v486
  %698 = vmatprep.subr.mxu0 %v479
  %699 = vmatpush1.msra.mxu0 %v478
  %700 = vmatprep.subr.mxu0 %v471
  %701 = vmatpush1.msra.mxu0 %v470
  %702 = vmatprep.subr.mxu0 %v463
  %703 = vmatpush1.msra.mxu0 %v462
  %704 = vmatprep.subr.mxu0 %v455
  %705 = vmatpush1.msra.mxu0 %v454
  %706 = vmatprep.subr.mxu0 %v447
  %707 = vmatpush1.msra.mxu0 %v446
  %708 = vmatprep.subr.mxu0 %v439
  %709 = vmatpush1.msra.mxu0 %v438
  %710 = vmatprep.subr.mxu0 %v431
  %711 = vmatpush1.msra.mxu0 %v430
  %712 = vmatprep.subr.mxu0 %v423
  %713 = vmatpush1.msra.mxu0 %v422
  %714 = vmatprep.subr.mxu0 0.0
  %715 = vmatpush2.msra.mxu0 0.0
  %716 = vmatprep.subr.mxu0 0.0
  %717 = vmatpush2.msra.mxu0 0.0
  %718 = vmatprep.subr.mxu0 0.0
  %719 = vmatpush2.msra.mxu0 0.0
  %720 = vmatprep.subr.mxu0 0.0
  %721 = vmatpush2.msra.mxu0 0.0
  %722 = vmatprep.subr.mxu0 0.0
  %723 = vmatpush2.msra.mxu0 0.0
  %724 = vmatprep.subr.mxu0 0.0
  %725 = vmatpush2.msra.mxu0 0.0
  %726 = vmatprep.subr.mxu0 0.0
  %727 = vmatpush2.msra.mxu0 0.0
  %728 = vmatprep.subr.mxu0 0.0
  %729 = vmatpush2.msra.mxu0 0.0
  %730 = vmatprep.subr.mxu0 0.0
  %731 = vmatpush2.msra.mxu0 0.0
  %732 = vmatprep.subr.mxu0 0.0
  %733 = vmatpush2.msra.mxu0 0.0
  %734 = vmatprep.subr.mxu0 0.0
  %735 = vmatpush2.msra.mxu0 0.0
  %736 = vmatprep.subr.mxu0 0.0
  %737 = vmatpush2.msra.mxu0 0.0
  %738 = vmatprep.subr.mxu0 0.0
  %739 = vmatpush2.msra.mxu0 0.0
  %740 = vmatprep.subr.mxu0 0.0
  %741 = vmatpush2.msra.mxu0 0.0
  %742 = vmatprep.subr.mxu0 0.0
  %743 = vmatpush2.msra.mxu0 0.0
  %744 = vmatprep.subr.mxu0 0.0
  %745 = vmatpush2.msra.mxu0 0.0
  %746 = vmatprep.mubr.f32.mxu0 0.0
  %747 = vmatmul.mubr.f32.gmra.mxu0 %v681
  %v748 = vpop.f32.mrf.mxu0
  %v749 = vadd.f32 0.0, %v748
  %v750 = vpop.f32.mrf.mxu0
  %v751 = vadd.f32 0.0, %v750
  %752 = vdwg.mxu0
  %753 = vmatprep.subr.mxu0 %v545
  %754 = vmatpush1.msra.mxu0 %v544
  %755 = vmatprep.subr.mxu0 %v537
  %756 = vmatpush1.msra.mxu0 %v536
  %757 = vmatprep.subr.mxu0 %v529
  %758 = vmatpush1.msra.mxu0 %v528
  %759 = vmatprep.subr.mxu0 %v521
  %760 = vmatpush1.msra.mxu0 %v520
  %761 = vmatprep.subr.mxu0 %v513
  %762 = vmatpush1.msra.mxu0 %v512
  %763 = vmatprep.subr.mxu0 %v505
  %764 = vmatpush1.msra.mxu0 %v504
  %765 = vmatprep.subr.mxu0 %v497
  %766 = vmatpush1.msra.mxu0 %v496
  %767 = vmatprep.subr.mxu0 %v489
  %768 = vmatpush1.msra.mxu0 %v488
  %769 = vmatprep.subr.mxu0 %v481
  %770 = vmatpush1.msra.mxu0 %v480
  %771 = vmatprep.subr.mxu0 %v473
  %772 = vmatpush1.msra.mxu0 %v472
  %773 = vmatprep.subr.mxu0 %v465
  %774 = vmatpush1.msra.mxu0 %v464
  %775 = vmatprep.subr.mxu0 %v457
  %776 = vmatpush1.msra.mxu0 %v456
  %777 = vmatprep.subr.mxu0 %v449
  %778 = vmatpush1.msra.mxu0 %v448
  %779 = vmatprep.subr.mxu0 %v441
  %780 = vmatpush1.msra.mxu0 %v440
  %781 = vmatprep.subr.mxu0 %v433
  %782 = vmatpush1.msra.mxu0 %v432
  %783 = vmatprep.subr.mxu0 %v425
  %784 = vmatpush1.msra.mxu0 %v424
  %785 = vmatprep.subr.mxu0 0.0
  %786 = vmatpush2.msra.mxu0 0.0
  %787 = vmatprep.subr.mxu0 0.0
  %788 = vmatpush2.msra.mxu0 0.0
  %789 = vmatprep.subr.mxu0 0.0
  %790 = vmatpush2.msra.mxu0 0.0
  %791 = vmatprep.subr.mxu0 0.0
  %792 = vmatpush2.msra.mxu0 0.0
  %793 = vmatprep.subr.mxu0 0.0
  %794 = vmatpush2.msra.mxu0 0.0
  %795 = vmatprep.subr.mxu0 0.0
  %796 = vmatpush2.msra.mxu0 0.0
  %797 = vmatprep.subr.mxu0 0.0
  %798 = vmatpush2.msra.mxu0 0.0
  %799 = vmatprep.subr.mxu0 0.0
  %800 = vmatpush2.msra.mxu0 0.0
  %801 = vmatprep.subr.mxu0 0.0
  %802 = vmatpush2.msra.mxu0 0.0
  %803 = vmatprep.subr.mxu0 0.0
  %804 = vmatpush2.msra.mxu0 0.0
  %805 = vmatprep.subr.mxu0 0.0
  %806 = vmatpush2.msra.mxu0 0.0
  %807 = vmatprep.subr.mxu0 0.0
  %808 = vmatpush2.msra.mxu0 0.0
  %809 = vmatprep.subr.mxu0 0.0
  %810 = vmatpush2.msra.mxu0 0.0
  %811 = vmatprep.subr.mxu0 0.0
  %812 = vmatpush2.msra.mxu0 0.0
  %813 = vmatprep.subr.mxu0 0.0
  %814 = vmatpush2.msra.mxu0 0.0
  %815 = vmatprep.subr.mxu0 0.0
  %816 = vmatpush2.msra.mxu0 0.0
  %817 = vmatprep.mubr.f32.mxu0 0.0
  %818 = vmatmul.mubr.f32.gmra.mxu0 %v681
  %v819 = vpop.f32.mrf.mxu0
  %v820 = vadd.f32 0.0, %v819
  %v821 = vpop.f32.mrf.mxu0
  %v822 = vadd.f32 0.0, %v821
  %823 = vdwg.mxu0
  %824 = vmatprep.subr.mxu0 %v547
  %825 = vmatpush1.msra.mxu0 %v546
  %826 = vmatprep.subr.mxu0 %v539
  %827 = vmatpush1.msra.mxu0 %v538
  %828 = vmatprep.subr.mxu0 %v531
  %829 = vmatpush1.msra.mxu0 %v530
  %830 = vmatprep.subr.mxu0 %v523
  %831 = vmatpush1.msra.mxu0 %v522
  %832 = vmatprep.subr.mxu0 %v515
  %833 = vmatpush1.msra.mxu0 %v514
  %834 = vmatprep.subr.mxu0 %v507
  %835 = vmatpush1.msra.mxu0 %v506
  %836 = vmatprep.subr.mxu0 %v499
  %837 = vmatpush1.msra.mxu0 %v498
  %838 = vmatprep.subr.mxu0 %v491
  %839 = vmatpush1.msra.mxu0 %v490
  %840 = vmatprep.subr.mxu0 %v483
  %841 = vmatpush1.msra.mxu0 %v482
  %842 = vmatprep.subr.mxu0 %v475
  %843 = vmatpush1.msra.mxu0 %v474
  %844 = vmatprep.subr.mxu0 %v467
  %845 = vmatpush1.msra.mxu0 %v466
  %846 = vmatprep.subr.mxu0 %v459
  %847 = vmatpush1.msra.mxu0 %v458
  %848 = vmatprep.subr.mxu0 %v451
  %849 = vmatpush1.msra.mxu0 %v450
  %850 = vmatprep.subr.mxu0 %v443
  %851 = vmatpush1.msra.mxu0 %v442
  %852 = vmatprep.subr.mxu0 %v435
  %853 = vmatpush1.msra.mxu0 %v434
  %854 = vmatprep.subr.mxu0 %v427
  %855 = vmatpush1.msra.mxu0 %v426
  %856 = vmatprep.subr.mxu0 0.0
  %857 = vmatpush2.msra.mxu0 0.0
  %858 = vmatprep.subr.mxu0 0.0
  %859 = vmatpush2.msra.mxu0 0.0
  %860 = vmatprep.subr.mxu0 0.0
  %861 = vmatpush2.msra.mxu0 0.0
  %862 = vmatprep.subr.mxu0 0.0
  %863 = vmatpush2.msra.mxu0 0.0
  %864 = vmatprep.subr.mxu0 0.0
  %865 = vmatpush2.msra.mxu0 0.0
  %866 = vmatprep.subr.mxu0 0.0
  %867 = vmatpush2.msra.mxu0 0.0
  %868 = vmatprep.subr.mxu0 0.0
  %869 = vmatpush2.msra.mxu0 0.0
  %870 = vmatprep.subr.mxu0 0.0
  %871 = vmatpush2.msra.mxu0 0.0
  %872 = vmatprep.subr.mxu0 0.0
  %873 = vmatpush2.msra.mxu0 0.0
  %874 = vmatprep.subr.mxu0 0.0
  %875 = vmatpush2.msra.mxu0 0.0
  %876 = vmatprep.subr.mxu0 0.0
  %877 = vmatpush2.msra.mxu0 0.0
  %878 = vmatprep.subr.mxu0 0.0
  %879 = vmatpush2.msra.mxu0 0.0
  %880 = vmatprep.subr.mxu0 0.0
  %881 = vmatpush2.msra.mxu0 0.0
  %882 = vmatprep.subr.mxu0 0.0
  %883 = vmatpush2.msra.mxu0 0.0
  %884 = vmatprep.subr.mxu0 0.0
  %885 = vmatpush2.msra.mxu0 0.0
  %886 = vmatprep.subr.mxu0 0.0
  %887 = vmatpush2.msra.mxu0 0.0
  %888 = vmatprep.mubr.f32.mxu0 0.0
  %889 = vmatmul.mubr.f32.gmra.mxu0 %v681
  %v890 = vpop.f32.mrf.mxu0
  %v891 = vadd.f32 0.0, %v890
  %v892 = vpop.f32.mrf.mxu0
  %v893 = vadd.f32 0.0, %v892
  %894 = vdwg.mxu0
  %895 = vmatprep.subr.mxu0 %v549
  %896 = vmatpush1.msra.mxu0 %v548
  %897 = vmatprep.subr.mxu0 %v541
  %898 = vmatpush1.msra.mxu0 %v540
  %899 = vmatprep.subr.mxu0 %v533
  %900 = vmatpush1.msra.mxu0 %v532
  %901 = vmatprep.subr.mxu0 %v525
  %902 = vmatpush1.msra.mxu0 %v524
  %903 = vmatprep.subr.mxu0 %v517
  %904 = vmatpush1.msra.mxu0 %v516
  %905 = vmatprep.subr.mxu0 %v509
  %906 = vmatpush1.msra.mxu0 %v508
  %907 = vmatprep.subr.mxu0 %v501
  %908 = vmatpush1.msra.mxu0 %v500
  %909 = vmatprep.subr.mxu0 %v493
  %910 = vmatpush1.msra.mxu0 %v492
  %911 = vmatprep.subr.mxu0 %v485
  %912 = vmatpush1.msra.mxu0 %v484
  %913 = vmatprep.subr.mxu0 %v477
  %914 = vmatpush1.msra.mxu0 %v476
  %915 = vmatprep.subr.mxu0 %v469
  %916 = vmatpush1.msra.mxu0 %v468
  %917 = vmatprep.subr.mxu0 %v461
  %918 = vmatpush1.msra.mxu0 %v460
  %919 = vmatprep.subr.mxu0 %v453
  %920 = vmatpush1.msra.mxu0 %v452
  %921 = vmatprep.subr.mxu0 %v445
  %922 = vmatpush1.msra.mxu0 %v444
  %923 = vmatprep.subr.mxu0 %v437
  %924 = vmatpush1.msra.mxu0 %v436
  %925 = vmatprep.subr.mxu0 %v429
  %926 = vmatpush1.msra.mxu0 %v428
  %927 = vmatprep.subr.mxu0 0.0
  %928 = vmatpush2.msra.mxu0 0.0
  %929 = vmatprep.subr.mxu0 0.0
  %930 = vmatpush2.msra.mxu0 0.0
  %931 = vmatprep.subr.mxu0 0.0
  %932 = vmatpush2.msra.mxu0 0.0
  %933 = vmatprep.subr.mxu0 0.0
  %934 = vmatpush2.msra.mxu0 0.0
  %935 = vmatprep.subr.mxu0 0.0
  %936 = vmatpush2.msra.mxu0 0.0
  %937 = vmatprep.subr.mxu0 0.0
  %938 = vmatpush2.msra.mxu0 0.0
  %939 = vmatprep.subr.mxu0 0.0
  %940 = vmatpush2.msra.mxu0 0.0
  %941 = vmatprep.subr.mxu0 0.0
  %942 = vmatpush2.msra.mxu0 0.0
  %943 = vmatprep.subr.mxu0 0.0
  %944 = vmatpush2.msra.mxu0 0.0
  %945 = vmatprep.subr.mxu0 0.0
  %946 = vmatpush2.msra.mxu0 0.0
  %947 = vmatprep.subr.mxu0 0.0
  %948 = vmatpush2.msra.mxu0 0.0
  %949 = vmatprep.subr.mxu0 0.0
  %950 = vmatpush2.msra.mxu0 0.0
  %951 = vmatprep.subr.mxu0 0.0
  %952 = vmatpush2.msra.mxu0 0.0
  %953 = vmatprep.subr.mxu0 0.0
  %954 = vmatpush2.msra.mxu0 0.0
  %955 = vmatprep.subr.mxu0 0.0
  %956 = vmatpush2.msra.mxu0 0.0
  %957 = vmatprep.subr.mxu0 0.0
  %958 = vmatpush2.msra.mxu0 0.0
  %959 = vmatprep.mubr.f32.mxu0 0.0
  %960 = vmatmul.mubr.f32.gmra.mxu0 %v681
  %v961 = vpop.f32.mrf.mxu0
  %v962 = vadd.f32 0.0, %v961
  %v963 = vpop.f32.mrf.mxu0
  %v964 = vadd.f32 0.0, %v963
  %965 = vdwg.mxu0
  %v966 = vadd.f32 %v749, %v643
  %v967 = vadd.f32 %v751, %v644
  %v968 = vadd.f32 %v820, %v645
  %v969 = vadd.f32 %v822, %v646
  %v970 = vxor.u32 %v966, 2147483648
  %v971 = vmul.f32 %v970, 1.442695
  %v972 = vpow.pop %v971
  %v973 = vadd.f32 %v972, 1.0
  %v974 = vrcp.pop %v973
  %v975 = vmul.f32 1.0, %v974
  %v976 = vxor.u32 %v967, 2147483648
  %v977 = vmul.f32 %v976, 1.442695
  %v978 = vpow.pop %v977
  %v979 = vadd.f32 %v978, 1.0
  %v980 = vrcp.pop %v979
  %v981 = vmul.f32 1.0, %v980
  %v982 = vtanh.pop %v968
  %v983 = vxor.u32 %v969, 2147483648
  %v984 = vmul.f32 %v983, 1.442695
  %v985 = vpow.pop %v984
  %v986 = vadd.f32 %v985, 1.0
  %v987 = vrcp.pop %v986
  %v988 = vmul.f32 1.0, %v987
  %v989 = vmul.f32 %v981, %v637
  %v990 = vmul.f32 %v975, %v982
  %v991 = vadd.f32 %v989, %v990
  %v992 = vtanh.pop %v991
  %v993 = vmul.f32 %v988, %v992
  %994 = vmatprep.subr.mxu0 %v611
  %995 = vmatpush1.msra.mxu0 %v610
  %996 = vmatprep.subr.mxu0 %v607
  %997 = vmatpush1.msra.mxu0 %v606
  %998 = vmatprep.subr.mxu0 %v603
  %999 = vmatpush1.msra.mxu0 %v602
  %1000 = vmatprep.subr.mxu0 %v599
  %1001 = vmatpush1.msra.mxu0 %v598
  %1002 = vmatprep.subr.mxu0 %v595
  %1003 = vmatpush1.msra.mxu0 %v594
  %1004 = vmatprep.subr.mxu0 %v591
  %1005 = vmatpush1.msra.mxu0 %v590
  %1006 = vmatprep.subr.mxu0 %v587
  %1007 = vmatpush1.msra.mxu0 %v586
  %1008 = vmatprep.subr.mxu0 %v583
  %1009 = vmatpush1.msra.mxu0 %v582
  %1010 = vmatprep.subr.mxu0 %v579
  %1011 = vmatpush1.msra.mxu0 %v578
  %1012 = vmatprep.subr.mxu0 %v575
  %1013 = vmatpush1.msra.mxu0 %v574
  %1014 = vmatprep.subr.mxu0 %v571
  %1015 = vmatpush1.msra.mxu0 %v570
  %1016 = vmatprep.subr.mxu0 %v567
  %1017 = vmatpush1.msra.mxu0 %v566
  %1018 = vmatprep.subr.mxu0 %v563
  %1019 = vmatpush1.msra.mxu0 %v562
  %1020 = vmatprep.subr.mxu0 %v559
  %1021 = vmatpush1.msra.mxu0 %v558
  %1022 = vmatprep.subr.mxu0 %v555
  %1023 = vmatpush1.msra.mxu0 %v554
  %1024 = vmatprep.subr.mxu0 %v551
  %1025 = vmatpush1.msra.mxu0 %v550
  %1026 = vmatprep.subr.mxu0 0.0
  %1027 = vmatpush2.msra.mxu0 0.0
  %1028 = vmatprep.subr.mxu0 0.0
  %1029 = vmatpush2.msra.mxu0 0.0
  %1030 = vmatprep.subr.mxu0 0.0
  %1031 = vmatpush2.msra.mxu0 0.0
  %1032 = vmatprep.subr.mxu0 0.0
  %1033 = vmatpush2.msra.mxu0 0.0
  %1034 = vmatprep.subr.mxu0 0.0
  %1035 = vmatpush2.msra.mxu0 0.0
  %1036 = vmatprep.subr.mxu0 0.0
  %1037 = vmatpush2.msra.mxu0 0.0
  %1038 = vmatprep.subr.mxu0 0.0
  %1039 = vmatpush2.msra.mxu0 0.0
  %1040 = vmatprep.subr.mxu0 0.0
  %1041 = vmatpush2.msra.mxu0 0.0
  %1042 = vmatprep.subr.mxu0 0.0
  %1043 = vmatpush2.msra.mxu0 0.0
  %1044 = vmatprep.subr.mxu0 0.0
  %1045 = vmatpush2.msra.mxu0 0.0
  %1046 = vmatprep.subr.mxu0 0.0
  %1047 = vmatpush2.msra.mxu0 0.0
  %1048 = vmatprep.subr.mxu0 0.0
  %1049 = vmatpush2.msra.mxu0 0.0
  %1050 = vmatprep.subr.mxu0 0.0
  %1051 = vmatpush2.msra.mxu0 0.0
  %1052 = vmatprep.subr.mxu0 0.0
  %1053 = vmatpush2.msra.mxu0 0.0
  %1054 = vmatprep.subr.mxu0 0.0
  %1055 = vmatpush2.msra.mxu0 0.0
  %1056 = vmatprep.subr.mxu0 0.0
  %1057 = vmatpush2.msra.mxu0 0.0
  %1058 = vmatprep.mubr.f32.mxu0 0.0
  %1059 = vmatmul.mubr.f32.gmra.mxu0 %v993
  %v1060 = vpop.f32.mrf.mxu0
  %v1061 = vadd.f32 %v619, %v1060
  %v1062 = vpop.f32.mrf.mxu0
  %v1063 = vadd.f32 %v623, %v1062
  %1064 = vdwg.mxu0
  %1065 = vmatprep.subr.mxu0 %v613
  %1066 = vmatpush1.msra.mxu0 %v612
  %1067 = vmatprep.subr.mxu0 %v609
  %1068 = vmatpush1.msra.mxu0 %v608
  %1069 = vmatprep.subr.mxu0 %v605
  %1070 = vmatpush1.msra.mxu0 %v604
  %1071 = vmatprep.subr.mxu0 %v601
  %1072 = vmatpush1.msra.mxu0 %v600
  %1073 = vmatprep.subr.mxu0 %v597
  %1074 = vmatpush1.msra.mxu0 %v596
  %1075 = vmatprep.subr.mxu0 %v593
  %1076 = vmatpush1.msra.mxu0 %v592
  %1077 = vmatprep.subr.mxu0 %v589
  %1078 = vmatpush1.msra.mxu0 %v588
  %1079 = vmatprep.subr.mxu0 %v585
  %1080 = vmatpush1.msra.mxu0 %v584
  %1081 = vmatprep.subr.mxu0 %v581
  %1082 = vmatpush1.msra.mxu0 %v580
  %1083 = vmatprep.subr.mxu0 %v577
  %1084 = vmatpush1.msra.mxu0 %v576
  %1085 = vmatprep.subr.mxu0 %v573
  %1086 = vmatpush1.msra.mxu0 %v572
  %1087 = vmatprep.subr.mxu0 %v569
  %1088 = vmatpush1.msra.mxu0 %v568
  %1089 = vmatprep.subr.mxu0 %v565
  %1090 = vmatpush1.msra.mxu0 %v564
  %1091 = vmatprep.subr.mxu0 %v561
  %1092 = vmatpush1.msra.mxu0 %v560
  %1093 = vmatprep.subr.mxu0 %v557
  %1094 = vmatpush1.msra.mxu0 %v556
  %1095 = vmatprep.subr.mxu0 %v553
  %1096 = vmatpush1.msra.mxu0 %v552
  %1097 = vmatprep.subr.mxu0 0.0
  %1098 = vmatpush2.msra.mxu0 0.0
  %1099 = vmatprep.subr.mxu0 0.0
  %1100 = vmatpush2.msra.mxu0 0.0
  %1101 = vmatprep.subr.mxu0 0.0
  %1102 = vmatpush2.msra.mxu0 0.0
  %1103 = vmatprep.subr.mxu0 0.0
  %1104 = vmatpush2.msra.mxu0 0.0
  %1105 = vmatprep.subr.mxu0 0.0
  %1106 = vmatpush2.msra.mxu0 0.0
  %1107 = vmatprep.subr.mxu0 0.0
  %1108 = vmatpush2.msra.mxu0 0.0
  %1109 = vmatprep.subr.mxu0 0.0
  %1110 = vmatpush2.msra.mxu0 0.0
  %1111 = vmatprep.subr.mxu0 0.0
  %1112 = vmatpush2.msra.mxu0 0.0
  %1113 = vmatprep.subr.mxu0 0.0
  %1114 = vmatpush2.msra.mxu0 0.0
  %1115 = vmatprep.subr.mxu0 0.0
  %1116 = vmatpush2.msra.mxu0 0.0
  %1117 = vmatprep.subr.mxu0 0.0
  %1118 = vmatpush2.msra.mxu0 0.0
  %1119 = vmatprep.subr.mxu0 0.0
  %1120 = vmatpush2.msra.mxu0 0.0
  %1121 = vmatprep.subr.mxu0 0.0
  %1122 = vmatpush2.msra.mxu0 0.0
  %1123 = vmatprep.subr.mxu0 0.0
  %1124 = vmatpush2.msra.mxu0 0.0
  %1125 = vmatprep.subr.mxu0 0.0
  %1126 = vmatpush2.msra.mxu0 0.0
  %1127 = vmatprep.subr.mxu0 0.0
  %1128 = vmatpush2.msra.mxu0 0.0
  %1129 = vmatprep.mubr.f32.mxu0 0.0
  %1130 = vmatmul.mubr.f32.gmra.mxu0 %v993
  %v1131 = vpop.f32.mrf.mxu0
  %v1132 = vadd.f32 %v627, %v1131
  %v1133 = vpop.f32.mrf.mxu0
  %v1134 = vadd.f32 %v631, %v1133
  %1135 = vdwg.mxu0
  %v1136 = vadd.f32 %v638, %v993
  %s1137 = smul.u32 1, 4
  %s1138 = smul.addr %s1137, 8
  %s1139 = scalar_lea.vmem [#allocation2], %s1138
  %v1140 = vld [vmem:[%s1139] sm:$0xff]
  %v1141 = vld [vmem:[%s1139 + $0x8] sm:$0xff]
  %v1142 = vld [vmem:[%s1139 + $0x10] sm:$0xff]
  %v1143 = vld [vmem:[%s1139 + $0x18] sm:$0xff]
  %v1144 = vadd.f32 %v1140, %v891
  %v1145 = vadd.f32 %v1141, %v893
  %v1146 = vadd.f32 %v1142, %v962
  %v1147 = vadd.f32 %v1143, %v964
  %v1148 = vxor.u32 %v1144, 2147483648
  %v1149 = vmul.f32 %v1148, 1.442695
  %v1150 = vpow.pop %v1149
  %v1151 = vadd.f32 %v1150, 1.0
  %v1152 = vrcp.pop %v1151
  %v1153 = vmul.f32 1.0, %v1152
  %v1154 = vxor.u32 %v1145, 2147483648
  %v1155 = vmul.f32 %v1154, 1.442695
  %v1156 = vpow.pop %v1155
  %v1157 = vadd.f32 %v1156, 1.0
  %v1158 = vrcp.pop %v1157
  %v1159 = vmul.f32 1.0, %v1158
  %v1160 = vtanh.pop %v1146
  %v1161 = vxor.u32 %v1147, 2147483648
  %v1162 = vmul.f32 %v1161, 1.442695
  %v1163 = vpow.pop %v1162
  %v1164 = vadd.f32 %v1163, 1.0
  %v1165 = vrcp.pop %v1164
  %v1166 = vmul.f32 1.0, %v1165
  %v1167 = vmul.f32 %v1159, %v679
  %v1168 = vmul.f32 %v1153, %v1160
  %v1169 = vadd.f32 %v1167, %v1168
  %v1170 = vtanh.pop %v1169
  %v1171 = vmul.f32 %v1166, %v1170
  %1172 = vmatprep.subr.mxu0 %v543
  %1173 = vmatpush1.msra.mxu0 %v542
  %1174 = vmatprep.subr.mxu0 %v535
  %1175 = vmatpush1.msra.mxu0 %v534
  %1176 = vmatprep.subr.mxu0 %v527
  %1177 = vmatpush1.msra.mxu0 %v526
  %1178 = vmatprep.subr.mxu0 %v519
  %1179 = vmatpush1.msra.mxu0 %v518
  %1180 = vmatprep.subr.mxu0 %v511
  %1181 = vmatpush1.msra.mxu0 %v510
  %1182 = vmatprep.subr.mxu0 %v503
  %1183 = vmatpush1.msra.mxu0 %v502
  %1184 = vmatprep.subr.mxu0 %v495
  %1185 = vmatpush1.msra.mxu0 %v494
  %1186 = vmatprep.subr.mxu0 %v487
  %1187 = vmatpush1.msra.mxu0 %v486
  %1188 = vmatprep.subr.mxu0 %v479
  %1189 = vmatpush1.msra.mxu0 %v478
  %1190 = vmatprep.subr.mxu0 %v471
  %1191 = vmatpush1.msra.mxu0 %v470
  %1192 = vmatprep.subr.mxu0 %v463
  %1193 = vmatpush1.msra.mxu0 %v462
  %1194 = vmatprep.subr.mxu0 %v455
  %1195 = vmatpush1.msra.mxu0 %v454
  %1196 = vmatprep.subr.mxu0 %v447
  %1197 = vmatpush1.msra.mxu0 %v446
  %1198 = vmatprep.subr.mxu0 %v439
  %1199 = vmatpush1.msra.mxu0 %v438
  %1200 = vmatprep.subr.mxu0 %v431
  %1201 = vmatpush1.msra.mxu0 %v430
  %1202 = vmatprep.subr.mxu0 %v423
  %1203 = vmatpush1.msra.mxu0 %v422
  %1204 = vmatprep.subr.mxu0 0.0
  %1205 = vmatpush2.msra.mxu0 0.0
  %1206 = vmatprep.subr.mxu0 0.0
  %1207 = vmatpush2.msra.mxu0 0.0
  %1208 = vmatprep.subr.mxu0 0.0
  %1209 = vmatpush2.msra.mxu0 0.0
  %1210 = vmatprep.subr.mxu0 0.0
  %1211 = vmatpush2.msra.mxu0 0.0
  %1212 = vmatprep.subr.mxu0 0.0
  %1213 = vmatpush2.msra.mxu0 0.0
  %1214 = vmatprep.subr.mxu0 0.0
  %1215 = vmatpush2.msra.mxu0 0.0
  %1216 = vmatprep.subr.mxu0 0.0
  %1217 = vmatpush2.msra.mxu0 0.0
  %1218 = vmatprep.subr.mxu0 0.0
  %1219 = vmatpush2.msra.mxu0 0.0
  %1220 = vmatprep.subr.mxu0 0.0
  %1221 = vmatpush2.msra.mxu0 0.0
  %1222 = vmatprep.subr.mxu0 0.0
  %1223 = vmatpush2.msra.mxu0 0.0
  %1224 = vmatprep.subr.mxu0 0.0
  %1225 = vmatpush2.msra.mxu0 0.0
  %1226 = vmatprep.subr.mxu0 0.0
  %1227 = vmatpush2.msra.mxu0 0.0
  %1228 = vmatprep.subr.mxu0 0.0
  %1229 = vmatpush2.msra.mxu0 0.0
  %1230 = vmatprep.subr.mxu0 0.0
  %1231 = vmatpush2.msra.mxu0 0.0
  %1232 = vmatprep.subr.mxu0 0.0
  %1233 = vmatpush2.msra.mxu0 0.0
  %1234 = vmatprep.subr.mxu0 0.0
  %1235 = vmatpush2.msra.mxu0 0.0
  %1236 = vmatprep.mubr.f32.mxu0 0.0
  %1237 = vmatmul.mubr.f32.gmra.mxu0 %v1171
  %v1238 = vpop.f32.mrf.mxu0
  %v1239 = vadd.f32 0.0, %v1238
  %v1240 = vpop.f32.mrf.mxu0
  %v1241 = vadd.f32 0.0, %v1240
  %1242 = vdwg.mxu0
  %1243 = vmatprep.subr.mxu0 %v545
  %1244 = vmatpush1.msra.mxu0 %v544
  %1245 = vmatprep.subr.mxu0 %v537
  %1246 = vmatpush1.msra.mxu0 %v536
  %1247 = vmatprep.subr.mxu0 %v529
  %1248 = vmatpush1.msra.mxu0 %v528
  %1249 = vmatprep.subr.mxu0 %v521
  %1250 = vmatpush1.msra.mxu0 %v520
  %1251 = vmatprep.subr.mxu0 %v513
  %1252 = vmatpush1.msra.mxu0 %v512
  %1253 = vmatprep.subr.mxu0 %v505
  %1254 = vmatpush1.msra.mxu0 %v504
  %1255 = vmatprep.subr.mxu0 %v497
  %1256 = vmatpush1.msra.mxu0 %v496
  %1257 = vmatprep.subr.mxu0 %v489
  %1258 = vmatpush1.msra.mxu0 %v488
  %1259 = vmatprep.subr.mxu0 %v481
  %1260 = vmatpush1.msra.mxu0 %v480
  %1261 = vmatprep.subr.mxu0 %v473
  %1262 = vmatpush1.msra.mxu0 %v472
  %1263 = vmatprep.subr.mxu0 %v465
  %1264 = vmatpush1.msra.mxu0 %v464
  %1265 = vmatprep.subr.mxu0 %v457
  %1266 = vmatpush1.msra.mxu0 %v456
  %1267 = vmatprep.subr.mxu0 %v449
  %1268 = vmatpush1.msra.mxu0 %v448
  %1269 = vmatprep.subr.mxu0 %v441
  %1270 = vmatpush1.msra.mxu0 %v440
  %1271 = vmatprep.subr.mxu0 %v433
  %1272 = vmatpush1.msra.mxu0 %v432
  %1273 = vmatprep.subr.mxu0 %v425
  %1274 = vmatpush1.msra.mxu0 %v424
  %1275 = vmatprep.subr.mxu0 0.0
  %1276 = vmatpush2.msra.mxu0 0.0
  %1277 = vmatprep.subr.mxu0 0.0
  %1278 = vmatpush2.msra.mxu0 0.0
  %1279 = vmatprep.subr.mxu0 0.0
  %1280 = vmatpush2.msra.mxu0 0.0
  %1281 = vmatprep.subr.mxu0 0.0
  %1282 = vmatpush2.msra.mxu0 0.0
  %1283 = vmatprep.subr.mxu0 0.0
  %1284 = vmatpush2.msra.mxu0 0.0
  %1285 = vmatprep.subr.mxu0 0.0
  %1286 = vmatpush2.msra.mxu0 0.0
  %1287 = vmatprep.subr.mxu0 0.0
  %1288 = vmatpush2.msra.mxu0 0.0
  %1289 = vmatprep.subr.mxu0 0.0
  %1290 = vmatpush2.msra.mxu0 0.0
  %1291 = vmatprep.subr.mxu0 0.0
  %1292 = vmatpush2.msra.mxu0 0.0
  %1293 = vmatprep.subr.mxu0 0.0
  %1294 = vmatpush2.msra.mxu0 0.0
  %1295 = vmatprep.subr.mxu0 0.0
  %1296 = vmatpush2.msra.mxu0 0.0
  %1297 = vmatprep.subr.mxu0 0.0
  %1298 = vmatpush2.msra.mxu0 0.0
  %1299 = vmatprep.subr.mxu0 0.0
  %1300 = vmatpush2.msra.mxu0 0.0
  %1301 = vmatprep.subr.mxu0 0.0
  %1302 = vmatpush2.msra.mxu0 0.0
  %1303 = vmatprep.subr.mxu0 0.0
  %1304 = vmatpush2.msra.mxu0 0.0
  %1305 = vmatprep.subr.mxu0 0.0
  %1306 = vmatpush2.msra.mxu0 0.0
  %1307 = vmatprep.mubr.f32.mxu0 0.0
  %1308 = vmatmul.mubr.f32.gmra.mxu0 %v1171
  %v1309 = vpop.f32.mrf.mxu0
  %v1310 = vadd.f32 0.0, %v1309
  %v1311 = vpop.f32.mrf.mxu0
  %v1312 = vadd.f32 0.0, %v1311
  %1313 = vdwg.mxu0
  %1314 = vmatprep.subr.mxu0 %v547
  %1315 = vmatpush1.msra.mxu0 %v546
  %1316 = vmatprep.subr.mxu0 %v539
  %1317 = vmatpush1.msra.mxu0 %v538
  %1318 = vmatprep.subr.mxu0 %v531
  %1319 = vmatpush1.msra.mxu0 %v530
  %1320 = vmatprep.subr.mxu0 %v523
  %1321 = vmatpush1.msra.mxu0 %v522
  %1322 = vmatprep.subr.mxu0 %v515
  %1323 = vmatpush1.msra.mxu0 %v514
  %1324 = vmatprep.subr.mxu0 %v507
  %1325 = vmatpush1.msra.mxu0 %v506
  %1326 = vmatprep.subr.mxu0 %v499
  %1327 = vmatpush1.msra.mxu0 %v498
  %1328 = vmatprep.subr.mxu0 %v491
  %1329 = vmatpush1.msra.mxu0 %v490
  %1330 = vmatprep.subr.mxu0 %v483
  %1331 = vmatpush1.msra.mxu0 %v482
  %1332 = vmatprep.subr.mxu0 %v475
  %1333 = vmatpush1.msra.mxu0 %v474
  %1334 = vmatprep.subr.mxu0 %v467
  %1335 = vmatpush1.msra.mxu0 %v466
  %1336 = vmatprep.subr.mxu0 %v459
  %1337 = vmatpush1.msra.mxu0 %v458
  %1338 = vmatprep.subr.mxu0 %v451
  %1339 = vmatpush1.msra.mxu0 %v450
  %1340 = vmatprep.subr.mxu0 %v443
  %1341 = vmatpush1.msra.mxu0 %v442
  %1342 = vmatprep.subr.mxu0 %v435
  %1343 = vmatpush1.msra.mxu0 %v434
  %1344 = vmatprep.subr.mxu0 %v427
  %1345 = vmatpush1.msra.mxu0 %v426
  %1346 = vmatprep.subr.mxu0 0.0
  %1347 = vmatpush2.msra.mxu0 0.0
  %1348 = vmatprep.subr.mxu0 0.0
  %1349 = vmatpush2.msra.mxu0 0.0
  %1350 = vmatprep.subr.mxu0 0.0
  %1351 = vmatpush2.msra.mxu0 0.0
  %1352 = vmatprep.subr.mxu0 0.0
  %1353 = vmatpush2.msra.mxu0 0.0
  %1354 = vmatprep.subr.mxu0 0.0
  %1355 = vmatpush2.msra.mxu0 0.0
  %1356 = vmatprep.subr.mxu0 0.0
  %1357 = vmatpush2.msra.mxu0 0.0
  %1358 = vmatprep.subr.mxu0 0.0
  %1359 = vmatpush2.msra.mxu0 0.0
  %1360 = vmatprep.subr.mxu0 0.0
  %1361 = vmatpush2.msra.mxu0 0.0
  %1362 = vmatprep.subr.mxu0 0.0
  %1363 = vmatpush2.msra.mxu0 0.0
  %1364 = vmatprep.subr.mxu0 0.0
  %1365 = vmatpush2.msra.mxu0 0.0
  %1366 = vmatprep.subr.mxu0 0.0
  %1367 = vmatpush2.msra.mxu0 0.0
  %1368 = vmatprep.subr.mxu0 0.0
  %1369 = vmatpush2.msra.mxu0 0.0
  %1370 = vmatprep.subr.mxu0 0.0
  %1371 = vmatpush2.msra.mxu0 0.0
  %1372 = vmatprep.subr.mxu0 0.0
  %1373 = vmatpush2.msra.mxu0 0.0
  %1374 = vmatprep.subr.mxu0 0.0
  %1375 = vmatpush2.msra.mxu0 0.0
  %1376 = vmatprep.subr.mxu0 0.0
  %1377 = vmatpush2.msra.mxu0 0.0
  %1378 = vmatprep.mubr.f32.mxu0 0.0
  %1379 = vmatmul.mubr.f32.gmra.mxu0 %v1171
  %v1380 = vpop.f32.mrf.mxu0
  %v1381 = vadd.f32 0.0, %v1380
  %v1382 = vpop.f32.mrf.mxu0
  %v1383 = vadd.f32 0.0, %v1382
  %1384 = vdwg.mxu0
  %1385 = vmatprep.subr.mxu0 %v549
  %1386 = vmatpush1.msra.mxu0 %v548
  %1387 = vmatprep.subr.mxu0 %v541
  %1388 = vmatpush1.msra.mxu0 %v540
  %1389 = vmatprep.subr.mxu0 %v533
  %1390 = vmatpush1.msra.mxu0 %v532
  %1391 = vmatprep.subr.mxu0 %v525
  %1392 = vmatpush1.msra.mxu0 %v524
  %1393 = vmatprep.subr.mxu0 %v517
  %1394 = vmatpush1.msra.mxu0 %v516
  %1395 = vmatprep.subr.mxu0 %v509
  %1396 = vmatpush1.msra.mxu0 %v508
  %1397 = vmatprep.subr.mxu0 %v501
  %1398 = vmatpush1.msra.mxu0 %v500
  %1399 = vmatprep.subr.mxu0 %v493
  %1400 = vmatpush1.msra.mxu0 %v492
  %1401 = vmatprep.subr.mxu0 %v485
  %1402 = vmatpush1.msra.mxu0 %v484
  %1403 = vmatprep.subr.mxu0 %v477
  %1404 = vmatpush1.msra.mxu0 %v476
  %1405 = vmatprep.subr.mxu0 %v469
  %1406 = vmatpush1.msra.mxu0 %v468
  %1407 = vmatprep.subr.mxu0 %v461
  %1408 = vmatpush1.msra.mxu0 %v460
  %1409 = vmatprep.subr.mxu0 %v453
  %1410 = vmatpush1.msra.mxu0 %v452
  %1411 = vmatprep.subr.mxu0 %v445
  %1412 = vmatpush1.msra.mxu0 %v444
  %1413 = vmatprep.subr.mxu0 %v437
  %1414 = vmatpush1.msra.mxu0 %v436
  %1415 = vmatprep.subr.mxu0 %v429
  %1416 = vmatpush1.msra.mxu0 %v428
  %1417 = vmatprep.subr.mxu0 0.0
  %1418 = vmatpush2.msra.mxu0 0.0
  %1419 = vmatprep.subr.mxu0 0.0
  %1420 = vmatpush2.msra.mxu0 0.0
  %1421 = vmatprep.subr.mxu0 0.0
  %1422 = vmatpush2.msra.mxu0 0.0
  %1423 = vmatprep.subr.mxu0 0.0
  %1424 = vmatpush2.msra.mxu0 0.0
  %1425 = vmatprep.subr.mxu0 0.0
  %1426 = vmatpush2.msra.mxu0 0.0
  %1427 = vmatprep.subr.mxu0 0.0
  %1428 = vmatpush2.msra.mxu0 0.0
  %1429 = vmatprep.subr.mxu0 0.0
  %1430 = vmatpush2.msra.mxu0 0.0
  %1431 = vmatprep.subr.mxu0 0.0
  %1432 = vmatpush2.msra.mxu0 0.0
  %1433 = vmatprep.subr.mxu0 0.0
  %1434 = vmatpush2.msra.mxu0 0.0
  %1435 = vmatprep.subr.mxu0 0.0
  %1436 = vmatpush2.msra.mxu0 0.0
  %1437 = vmatprep.subr.mxu0 0.0
  %1438 = vmatpush2.msra.mxu0 0.0
  %1439 = vmatprep.subr.mxu0 0.0
  %1440 = vmatpush2.msra.mxu0 0.0
  %1441 = vmatprep.subr.mxu0 0.0
  %1442 = vmatpush2.msra.mxu0 0.0
  %1443 = vmatprep.subr.mxu0 0.0
  %1444 = vmatpush2.msra.mxu0 0.0
  %1445 = vmatprep.subr.mxu0 0.0
  %1446 = vmatpush2.msra.mxu0 0.0
  %1447 = vmatprep.subr.mxu0 0.0
  %1448 = vmatpush2.msra.mxu0 0.0
  %1449 = vmatprep.mubr.f32.mxu0 0.0
  %1450 = vmatmul.mubr.f32.gmra.mxu0 %v1171
  %v1451 = vpop.f32.mrf.mxu0
  %v1452 = vadd.f32 0.0, %v1451
  %v1453 = vpop.f32.mrf.mxu0
  %v1454 = vadd.f32 0.0, %v1453
  %1455 = vdwg.mxu0
  %v1456 = vadd.f32 %v1239, %v1061
  %v1457 = vadd.f32 %v1241, %v1063
  %v1458 = vadd.f32 %v1310, %v1132
  %v1459 = vadd.f32 %v1312, %v1134
  %v1460 = vxor.u32 %v1456, 2147483648
  %v1461 = vmul.f32 %v1460, 1.442695
  %v1462 = vpow.pop %v1461
  %v1463 = vadd.f32 %v1462, 1.0
  %v1464 = vrcp.pop %v1463
  %v1465 = vmul.f32 1.0, %v1464
  %v1466 = vxor.u32 %v1457, 2147483648
  %v1467 = vmul.f32 %v1466, 1.442695
  %v1468 = vpow.pop %v1467
  %v1469 = vadd.f32 %v1468, 1.0
  %v1470 = vrcp.pop %v1469
  %v1471 = vmul.f32 1.0, %v1470
  %v1472 = vtanh.pop %v1458
  %v1473 = vxor.u32 %v1459, 2147483648
  %v1474 = vmul.f32 %v1473, 1.442695
  %v1475 = vpow.pop %v1474
  %v1476 = vadd.f32 %v1475, 1.0
  %v1477 = vrcp.pop %v1476
  %v1478 = vmul.f32 1.0, %v1477
  %v1479 = vmul.f32 %v1471, %v991
  %v1480 = vmul.f32 %v1465, %v1472
  %v1481 = vadd.f32 %v1479, %v1480
  %v1482 = vtanh.pop %v1481
  %v1483 = vmul.f32 %v1478, %v1482
  %1484 = vmatprep.subr.mxu0 %v611
  %1485 = vmatpush1.msra.mxu0 %v610
  %1486 = vmatprep.subr.mxu0 %v607
  %1487 = vmatpush1.msra.mxu0 %v606
  %1488 = vmatprep.subr.mxu0 %v603
  %1489 = vmatpush1.msra.mxu0 %v602
  %1490 = vmatprep.subr.mxu0 %v599
  %1491 = vmatpush1.msra.mxu0 %v598
  %1492 = vmatprep.subr.mxu0 %v595
  %1493 = vmatpush1.msra.mxu0 %v594
  %1494 = vmatprep.subr.mxu0 %v591
  %1495 = vmatpush1.msra.mxu0 %v590
  %1496 = vmatprep.subr.mxu0 %v587
  %1497 = vmatpush1.msra.mxu0 %v586
  %1498 = vmatprep.subr.mxu0 %v583
  %1499 = vmatpush1.msra.mxu0 %v582
  %1500 = vmatprep.subr.mxu0 %v579
  %1501 = vmatpush1.msra.mxu0 %v578
  %1502 = vmatprep.subr.mxu0 %v575
  %1503 = vmatpush1.msra.mxu0 %v574
  %1504 = vmatprep.subr.mxu0 %v571
  %1505 = vmatpush1.msra.mxu0 %v570
  %1506 = vmatprep.subr.mxu0 %v567
  %1507 = vmatpush1.msra.mxu0 %v566
  %1508 = vmatprep.subr.mxu0 %v563
  %1509 = vmatpush1.msra.mxu0 %v562
  %1510 = vmatprep.subr.mxu0 %v559
  %1511 = vmatpush1.msra.mxu0 %v558
  %1512 = vmatprep.subr.mxu0 %v555
  %1513 = vmatpush1.msra.mxu0 %v554
  %1514 = vmatprep.subr.mxu0 %v551
  %1515 = vmatpush1.msra.mxu0 %v550
  %1516 = vmatprep.subr.mxu0 0.0
  %1517 = vmatpush2.msra.mxu0 0.0
  %1518 = vmatprep.subr.mxu0 0.0
  %1519 = vmatpush2.msra.mxu0 0.0
  %1520 = vmatprep.subr.mxu0 0.0
  %1521 = vmatpush2.msra.mxu0 0.0
  %1522 = vmatprep.subr.mxu0 0.0
  %1523 = vmatpush2.msra.mxu0 0.0
  %1524 = vmatprep.subr.mxu0 0.0
  %1525 = vmatpush2.msra.mxu0 0.0
  %1526 = vmatprep.subr.mxu0 0.0
  %1527 = vmatpush2.msra.mxu0 0.0
  %1528 = vmatprep.subr.mxu0 0.0
  %1529 = vmatpush2.msra.mxu0 0.0
  %1530 = vmatprep.subr.mxu0 0.0
  %1531 = vmatpush2.msra.mxu0 0.0
  %1532 = vmatprep.subr.mxu0 0.0
  %1533 = vmatpush2.msra.mxu0 0.0
  %1534 = vmatprep.subr.mxu0 0.0
  %1535 = vmatpush2.msra.mxu0 0.0
  %1536 = vmatprep.subr.mxu0 0.0
  %1537 = vmatpush2.msra.mxu0 0.0
  %1538 = vmatprep.subr.mxu0 0.0
  %1539 = vmatpush2.msra.mxu0 0.0
  %1540 = vmatprep.subr.mxu0 0.0
  %1541 = vmatpush2.msra.mxu0 0.0
  %1542 = vmatprep.subr.mxu0 0.0
  %1543 = vmatpush2.msra.mxu0 0.0
  %1544 = vmatprep.subr.mxu0 0.0
  %1545 = vmatpush2.msra.mxu0 0.0
  %1546 = vmatprep.subr.mxu0 0.0
  %1547 = vmatpush2.msra.mxu0 0.0
  %1548 = vmatprep.mubr.f32.mxu0 0.0
  %1549 = vmatmul.mubr.f32.gmra.mxu0 %v1483
  %v1550 = vpop.f32.mrf.mxu0
  %v1551 = vadd.f32 %v619, %v1550
  %v1552 = vpop.f32.mrf.mxu0
  %v1553 = vadd.f32 %v623, %v1552
  %1554 = vdwg.mxu0
  %1555 = vmatprep.subr.mxu0 %v613
  %1556 = vmatpush1.msra.mxu0 %v612
  %1557 = vmatprep.subr.mxu0 %v609
  %1558 = vmatpush1.msra.mxu0 %v608
  %1559 = vmatprep.subr.mxu0 %v605
  %1560 = vmatpush1.msra.mxu0 %v604
  %1561 = vmatprep.subr.mxu0 %v601
  %1562 = vmatpush1.msra.mxu0 %v600
  %1563 = vmatprep.subr.mxu0 %v597
  %1564 = vmatpush1.msra.mxu0 %v596
  %1565 = vmatprep.subr.mxu0 %v593
  %1566 = vmatpush1.msra.mxu0 %v592
  %1567 = vmatprep.subr.mxu0 %v589
  %1568 = vmatpush1.msra.mxu0 %v588
  %1569 = vmatprep.subr.mxu0 %v585
  %1570 = vmatpush1.msra.mxu0 %v584
  %1571 = vmatprep.subr.mxu0 %v581
  %1572 = vmatpush1.msra.mxu0 %v580
  %1573 = vmatprep.subr.mxu0 %v577
  %1574 = vmatpush1.msra.mxu0 %v576
  %1575 = vmatprep.subr.mxu0 %v573
  %1576 = vmatpush1.msra.mxu0 %v572
  %1577 = vmatprep.subr.mxu0 %v569
  %1578 = vmatpush1.msra.mxu0 %v568
  %1579 = vmatprep.subr.mxu0 %v565
  %1580 = vmatpush1.msra.mxu0 %v564
  %1581 = vmatprep.subr.mxu0 %v561
  %1582 = vmatpush1.msra.mxu0 %v560
  %1583 = vmatprep.subr.mxu0 %v557
  %1584 = vmatpush1.msra.mxu0 %v556
  %1585 = vmatprep.subr.mxu0 %v553
  %1586 = vmatpush1.msra.mxu0 %v552
  %1587 = vmatprep.subr.mxu0 0.0
  %1588 = vmatpush2.msra.mxu0 0.0
  %1589 = vmatprep.subr.mxu0 0.0
  %1590 = vmatpush2.msra.mxu0 0.0
  %1591 = vmatprep.subr.mxu0 0.0
  %1592 = vmatpush2.msra.mxu0 0.0
  %1593 = vmatprep.subr.mxu0 0.0
  %1594 = vmatpush2.msra.mxu0 0.0
  %1595 = vmatprep.subr.mxu0 0.0
  %1596 = vmatpush2.msra.mxu0 0.0
  %1597 = vmatprep.subr.mxu0 0.0
  %1598 = vmatpush2.msra.mxu0 0.0
  %1599 = vmatprep.subr.mxu0 0.0
  %1600 = vmatpush2.msra.mxu0 0.0
  %1601 = vmatprep.subr.mxu0 0.0
  %1602 = vmatpush2.msra.mxu0 0.0
  %1603 = vmatprep.subr.mxu0 0.0
  %1604 = vmatpush2.msra.mxu0 0.0
  %1605 = vmatprep.subr.mxu0 0.0
  %1606 = vmatpush2.msra.mxu0 0.0
  %1607 = vmatprep.subr.mxu0 0.0
  %1608 = vmatpush2.msra.mxu0 0.0
  %1609 = vmatprep.subr.mxu0 0.0
  %1610 = vmatpush2.msra.mxu0 0.0
  %1611 = vmatprep.subr.mxu0 0.0
  %1612 = vmatpush2.msra.mxu0 0.0
  %1613 = vmatprep.subr.mxu0 0.0
  %1614 = vmatpush2.msra.mxu0 0.0
  %1615 = vmatprep.subr.mxu0 0.0
  %1616 = vmatpush2.msra.mxu0 0.0
  %1617 = vmatprep.subr.mxu0 0.0
  %1618 = vmatpush2.msra.mxu0 0.0
  %1619 = vmatprep.mubr.f32.mxu0 0.0
  %1620 = vmatmul.mubr.f32.gmra.mxu0 %v1483
  %v1621 = vpop.f32.mrf.mxu0
  %v1622 = vadd.f32 %v627, %v1621
  %v1623 = vpop.f32.mrf.mxu0
  %v1624 = vadd.f32 %v631, %v1623
  %1625 = vdwg.mxu0
  %v1626 = vadd.f32 %v1136, %v1483
  %s1627 = smul.u32 2, 4
  %s1628 = smul.addr %s1627, 8
  %s1629 = scalar_lea.vmem [#allocation2], %s1628
  %v1630 = vld [vmem:[%s1629] sm:$0xff]
  %v1631 = vld [vmem:[%s1629 + $0x8] sm:$0xff]
  %v1632 = vld [vmem:[%s1629 + $0x10] sm:$0xff]
  %v1633 = vld [vmem:[%s1629 + $0x18] sm:$0xff]
  %v1634 = vadd.f32 %v1630, %v1381
  %v1635 = vadd.f32 %v1631, %v1383
  %v1636 = vadd.f32 %v1632, %v1452
  %v1637 = vadd.f32 %v1633, %v1454
  %v1638 = vxor.u32 %v1634, 2147483648
  %v1639 = vmul.f32 %v1638, 1.442695
  %v1640 = vpow.pop %v1639
  %v1641 = vadd.f32 %v1640, 1.0
  %v1642 = vrcp.pop %v1641
  %v1643 = vmul.f32 1.0, %v1642
  %v1644 = vxor.u32 %v1635, 2147483648
  %v1645 = vmul.f32 %v1644, 1.442695
  %v1646 = vpow.pop %v1645
  %v1647 = vadd.f32 %v1646, 1.0
  %v1648 = vrcp.pop %v1647
  %v1649 = vmul.f32 1.0, %v1648
  %v1650 = vtanh.pop %v1636
  %v1651 = vxor.u32 %v1637, 2147483648
  %v1652 = vmul.f32 %v1651, 1.442695
  %v1653 = vpow.pop %v1652
  %v1654 = vadd.f32 %v1653, 1.0
  %v1655 = vrcp.pop %v1654
  %v1656 = vmul.f32 1.0, %v1655
  %v1657 = vmul.f32 %v1649, %v1169
  %v1658 = vmul.f32 %v1643, %v1650
  %v1659 = vadd.f32 %v1657, %v1658
  %v1660 = vtanh.pop %v1659
  %v1661 = vmul.f32 %v1656, %v1660
  %1662 = vmatprep.subr.mxu0 %v543
  %1663 = vmatpush1.msra.mxu0 %v542
  %1664 = vmatprep.subr.mxu0 %v535
  %1665 = vmatpush1.msra.mxu0 %v534
  %1666 = vmatprep.subr.mxu0 %v527
  %1667 = vmatpush1.msra.mxu0 %v526
  %1668 = vmatprep.subr.mxu0 %v519
  %1669 = vmatpush1.msra.mxu0 %v518
  %1670 = vmatprep.subr.mxu0 %v511
  %1671 = vmatpush1.msra.mxu0 %v510
  %1672 = vmatprep.subr.mxu0 %v503
  %1673 = vmatpush1.msra.mxu0 %v502
  %1674 = vmatprep.subr.mxu0 %v495
  %1675 = vmatpush1.msra.mxu0 %v494
  %1676 = vmatprep.subr.mxu0 %v487
  %1677 = vmatpush1.msra.mxu0 %v486
  %1678 = vmatprep.subr.mxu0 %v479
  %1679 = vmatpush1.msra.mxu0 %v478
  %1680 = vmatprep.subr.mxu0 %v471
  %1681 = vmatpush1.msra.mxu0 %v470
  %1682 = vmatprep.subr.mxu0 %v463
  %1683 = vmatpush1.msra.mxu0 %v462
  %1684 = vmatprep.subr.mxu0 %v455
  %1685 = vmatpush1.msra.mxu0 %v454
  %1686 = vmatprep.subr.mxu0 %v447
  %1687 = vmatpush1.msra.mxu0 %v446
  %1688 = vmatprep.subr.mxu0 %v439
  %1689 = vmatpush1.msra.mxu0 %v438
  %1690 = vmatprep.subr.mxu0 %v431
  %1691 = vmatpush1.msra.mxu0 %v430
  %1692 = vmatprep.subr.mxu0 %v423
  %1693 = vmatpush1.msra.mxu0 %v422
  %1694 = vmatprep.subr.mxu0 0.0
  %1695 = vmatpush2.msra.mxu0 0.0
  %1696 = vmatprep.subr.mxu0 0.0
  %1697 = vmatpush2.msra.mxu0 0.0
  %1698 = vmatprep.subr.mxu0 0.0
  %1699 = vmatpush2.msra.mxu0 0.0
  %1700 = vmatprep.subr.mxu0 0.0
  %1701 = vmatpush2.msra.mxu0 0.0
  %1702 = vmatprep.subr.mxu0 0.0
  %1703 = vmatpush2.msra.mxu0 0.0
  %1704 = vmatprep.subr.mxu0 0.0
  %1705 = vmatpush2.msra.mxu0 0.0
  %1706 = vmatprep.subr.mxu0 0.0
  %1707 = vmatpush2.msra.mxu0 0.0
  %1708 = vmatprep.subr.mxu0 0.0
  %1709 = vmatpush2.msra.mxu0 0.0
  %1710 = vmatprep.subr.mxu0 0.0
  %1711 = vmatpush2.msra.mxu0 0.0
  %1712 = vmatprep.subr.mxu0 0.0
  %1713 = vmatpush2.msra.mxu0 0.0
  %1714 = vmatprep.subr.mxu0 0.0
  %1715 = vmatpush2.msra.mxu0 0.0
  %1716 = vmatprep.subr.mxu0 0.0
  %1717 = vmatpush2.msra.mxu0 0.0
  %1718 = vmatprep.subr.mxu0 0.0
  %1719 = vmatpush2.msra.mxu0 0.0
  %1720 = vmatprep.subr.mxu0 0.0
  %1721 = vmatpush2.msra.mxu0 0.0
  %1722 = vmatprep.subr.mxu0 0.0
  %1723 = vmatpush2.msra.mxu0 0.0
  %1724 = vmatprep.subr.mxu0 0.0
  %1725 = vmatpush2.msra.mxu0 0.0
  %1726 = vmatprep.mubr.f32.mxu0 0.0
  %1727 = vmatmul.mubr.f32.gmra.mxu0 %v1661
  %v1728 = vpop.f32.mrf.mxu0
  %v1729 = vadd.f32 0.0, %v1728
  %v1730 = vpop.f32.mrf.mxu0
  %v1731 = vadd.f32 0.0, %v1730
  %1732 = vdwg.mxu0
  %1733 = vmatprep.subr.mxu0 %v545
  %1734 = vmatpush1.msra.mxu0 %v544
  %1735 = vmatprep.subr.mxu0 %v537
  %1736 = vmatpush1.msra.mxu0 %v536
  %1737 = vmatprep.subr.mxu0 %v529
  %1738 = vmatpush1.msra.mxu0 %v528
  %1739 = vmatprep.subr.mxu0 %v521
  %1740 = vmatpush1.msra.mxu0 %v520
  %1741 = vmatprep.subr.mxu0 %v513
  %1742 = vmatpush1.msra.mxu0 %v512
  %1743 = vmatprep.subr.mxu0 %v505
  %1744 = vmatpush1.msra.mxu0 %v504
  %1745 = vmatprep.subr.mxu0 %v497
  %1746 = vmatpush1.msra.mxu0 %v496
  %1747 = vmatprep.subr.mxu0 %v489
  %1748 = vmatpush1.msra.mxu0 %v488
  %1749 = vmatprep.subr.mxu0 %v481
  %1750 = vmatpush1.msra.mxu0 %v480
  %1751 = vmatprep.subr.mxu0 %v473
  %1752 = vmatpush1.msra.mxu0 %v472
  %1753 = vmatprep.subr.mxu0 %v465
  %1754 = vmatpush1.msra.mxu0 %v464
  %1755 = vmatprep.subr.mxu0 %v457
  %1756 = vmatpush1.msra.mxu0 %v456
  %1757 = vmatprep.subr.mxu0 %v449
  %1758 = vmatpush1.msra.mxu0 %v448
  %1759 = vmatprep.subr.mxu0 %v441
  %1760 = vmatpush1.msra.mxu0 %v440
  %1761 = vmatprep.subr.mxu0 %v433
  %1762 = vmatpush1.msra.mxu0 %v432
  %1763 = vmatprep.subr.mxu0 %v425
  %1764 = vmatpush1.msra.mxu0 %v424
  %1765 = vmatprep.subr.mxu0 0.0
  %1766 = vmatpush2.msra.mxu0 0.0
  %1767 = vmatprep.subr.mxu0 0.0
  %1768 = vmatpush2.msra.mxu0 0.0
  %1769 = vmatprep.subr.mxu0 0.0
  %1770 = vmatpush2.msra.mxu0 0.0
  %1771 = vmatprep.subr.mxu0 0.0
  %1772 = vmatpush2.msra.mxu0 0.0
  %1773 = vmatprep.subr.mxu0 0.0
  %1774 = vmatpush2.msra.mxu0 0.0
  %1775 = vmatprep.subr.mxu0 0.0
  %1776 = vmatpush2.msra.mxu0 0.0
  %1777 = vmatprep.subr.mxu0 0.0
  %1778 = vmatpush2.msra.mxu0 0.0
  %1779 = vmatprep.subr.mxu0 0.0
  %1780 = vmatpush2.msra.mxu0 0.0
  %1781 = vmatprep.subr.mxu0 0.0
  %1782 = vmatpush2.msra.mxu0 0.0
  %1783 = vmatprep.subr.mxu0 0.0
  %1784 = vmatpush2.msra.mxu0 0.0
  %1785 = vmatprep.subr.mxu0 0.0
  %1786 = vmatpush2.msra.mxu0 0.0
  %1787 = vmatprep.subr.mxu0 0.0
  %1788 = vmatpush2.msra.mxu0 0.0
  %1789 = vmatprep.subr.mxu0 0.0
  %1790 = vmatpush2.msra.mxu0 0.0
  %1791 = vmatprep.subr.mxu0 0.0
  %1792 = vmatpush2.msra.mxu0 0.0
  %1793 = vmatprep.subr.mxu0 0.0
  %1794 = vmatpush2.msra.mxu0 0.0
  %1795 = vmatprep.subr.mxu0 0.0
  %1796 = vmatpush2.msra.mxu0 0.0
  %1797 = vmatprep.mubr.f32.mxu0 0.0
  %1798 = vmatmul.mubr.f32.gmra.mxu0 %v1661
  %v1799 = vpop.f32.mrf.mxu0
  %v1800 = vadd.f32 0.0, %v1799
  %v1801 = vpop.f32.mrf.mxu0
  %v1802 = vadd.f32 0.0, %v1801
  %1803 = vdwg.mxu0
  %1804 = vmatprep.subr.mxu0 %v547
  %1805 = vmatpush1.msra.mxu0 %v546
  %1806 = vmatprep.subr.mxu0 %v539
  %1807 = vmatpush1.msra.mxu0 %v538
  %1808 = vmatprep.subr.mxu0 %v531
  %1809 = vmatpush1.msra.mxu0 %v530
  %1810 = vmatprep.subr.mxu0 %v523
  %1811 = vmatpush1.msra.mxu0 %v522
  %1812 = vmatprep.subr.mxu0 %v515
  %1813 = vmatpush1.msra.mxu0 %v514
  %1814 = vmatprep.subr.mxu0 %v507
  %1815 = vmatpush1.msra.mxu0 %v506
  %1816 = vmatprep.subr.mxu0 %v499
  %1817 = vmatpush1.msra.mxu0 %v498
  %1818 = vmatprep.subr.mxu0 %v491
  %1819 = vmatpush1.msra.mxu0 %v490
  %1820 = vmatprep.subr.mxu0 %v483
  %1821 = vmatpush1.msra.mxu0 %v482
  %1822 = vmatprep.subr.mxu0 %v475
  %1823 = vmatpush1.msra.mxu0 %v474
  %1824 = vmatprep.subr.mxu0 %v467
  %1825 = vmatpush1.msra.mxu0 %v466
  %1826 = vmatprep.subr.mxu0 %v459
  %1827 = vmatpush1.msra.mxu0 %v458
  %1828 = vmatprep.subr.mxu0 %v451
  %1829 = vmatpush1.msra.mxu0 %v450
  %1830 = vmatprep.subr.mxu0 %v443
  %1831 = vmatpush1.msra.mxu0 %v442
  %1832 = vmatprep.subr.mxu0 %v435
  %1833 = vmatpush1.msra.mxu0 %v434
  %1834 = vmatprep.subr.mxu0 %v427
  %1835 = vmatpush1.msra.mxu0 %v426
  %1836 = vmatprep.subr.mxu0 0.0
  %1837 = vmatpush2.msra.mxu0 0.0
  %1838 = vmatprep.subr.mxu0 0.0
  %1839 = vmatpush2.msra.mxu0 0.0
  %1840 = vmatprep.subr.mxu0 0.0
  %1841 = vmatpush2.msra.mxu0 0.0
  %1842 = vmatprep.subr.mxu0 0.0
  %1843 = vmatpush2.msra.mxu0 0.0
  %1844 = vmatprep.subr.mxu0 0.0
  %1845 = vmatpush2.msra.mxu0 0.0
  %1846 = vmatprep.subr.mxu0 0.0
  %1847 = vmatpush2.msra.mxu0 0.0
  %1848 = vmatprep.subr.mxu0 0.0
  %1849 = vmatpush2.msra.mxu0 0.0
  %1850 = vmatprep.subr.mxu0 0.0
  %1851 = vmatpush2.msra.mxu0 0.0
  %1852 = vmatprep.subr.mxu0 0.0
  %1853 = vmatpush2.msra.mxu0 0.0
  %1854 = vmatprep.subr.mxu0 0.0
  %1855 = vmatpush2.msra.mxu0 0.0
  %1856 = vmatprep.subr.mxu0 0.0
  %1857 = vmatpush2.msra.mxu0 0.0
  %1858 = vmatprep.subr.mxu0 0.0
  %1859 = vmatpush2.msra.mxu0 0.0
  %1860 = vmatprep.subr.mxu0 0.0
  %1861 = vmatpush2.msra.mxu0 0.0
  %1862 = vmatprep.subr.mxu0 0.0
  %1863 = vmatpush2.msra.mxu0 0.0
  %1864 = vmatprep.subr.mxu0 0.0
  %1865 = vmatpush2.msra.mxu0 0.0
  %1866 = vmatprep.subr.mxu0 0.0
  %1867 = vmatpush2.msra.mxu0 0.0
  %1868 = vmatprep.mubr.f32.mxu0 0.0
  %1869 = vmatmul.mubr.f32.gmra.mxu0 %v1661
  %v1870 = vpop.f32.mrf.mxu0
  %v1871 = vadd.f32 0.0, %v1870
  %v1872 = vpop.f32.mrf.mxu0
  %v1873 = vadd.f32 0.0, %v1872
  %1874 = vdwg.mxu0
  %1875 = vmatprep.subr.mxu0 %v549
  %1876 = vmatpush1.msra.mxu0 %v548
  %1877 = vmatprep.subr.mxu0 %v541
  %1878 = vmatpush1.msra.mxu0 %v540
  %1879 = vmatprep.subr.mxu0 %v533
  %1880 = vmatpush1.msra.mxu0 %v532
  %1881 = vmatprep.subr.mxu0 %v525
  %1882 = vmatpush1.msra.mxu0 %v524
  %1883 = vmatprep.subr.mxu0 %v517
  %1884 = vmatpush1.msra.mxu0 %v516
  %1885 = vmatprep.subr.mxu0 %v509
  %1886 = vmatpush1.msra.mxu0 %v508
  %1887 = vmatprep.subr.mxu0 %v501
  %1888 = vmatpush1.msra.mxu0 %v500
  %1889 = vmatprep.subr.mxu0 %v493
  %1890 = vmatpush1.msra.mxu0 %v492
  %1891 = vmatprep.subr.mxu0 %v485
  %1892 = vmatpush1.msra.mxu0 %v484
  %1893 = vmatprep.subr.mxu0 %v477
  %1894 = vmatpush1.msra.mxu0 %v476
  %1895 = vmatprep.subr.mxu0 %v469
  %1896 = vmatpush1.msra.mxu0 %v468
  %1897 = vmatprep.subr.mxu0 %v461
  %1898 = vmatpush1.msra.mxu0 %v460
  %1899 = vmatprep.subr.mxu0 %v453
  %1900 = vmatpush1.msra.mxu0 %v452
  %1901 = vmatprep.subr.mxu0 %v445
  %1902 = vmatpush1.msra.mxu0 %v444
  %1903 = vmatprep.subr.mxu0 %v437
  %1904 = vmatpush1.msra.mxu0 %v436
  %1905 = vmatprep.subr.mxu0 %v429
  %1906 = vmatpush1.msra.mxu0 %v428
  %1907 = vmatprep.subr.mxu0 0.0
  %1908 = vmatpush2.msra.mxu0 0.0
  %1909 = vmatprep.subr.mxu0 0.0
  %1910 = vmatpush2.msra.mxu0 0.0
  %1911 = vmatprep.subr.mxu0 0.0
  %1912 = vmatpush2.msra.mxu0 0.0
  %1913 = vmatprep.subr.mxu0 0.0
  %1914 = vmatpush2.msra.mxu0 0.0
  %1915 = vmatprep.subr.mxu0 0.0
  %1916 = vmatpush2.msra.mxu0 0.0
  %1917 = vmatprep.subr.mxu0 0.0
  %1918 = vmatpush2.msra.mxu0 0.0
  %1919 = vmatprep.subr.mxu0 0.0
  %1920 = vmatpush2.msra.mxu0 0.0
  %1921 = vmatprep.subr.mxu0 0.0
  %1922 = vmatpush2.msra.mxu0 0.0
  %1923 = vmatprep.subr.mxu0 0.0
  %1924 = vmatpush2.msra.mxu0 0.0
  %1925 = vmatprep.subr.mxu0 0.0
  %1926 = vmatpush2.msra.mxu0 0.0
  %1927 = vmatprep.subr.mxu0 0.0
  %1928 = vmatpush2.msra.mxu0 0.0
  %1929 = vmatprep.subr.mxu0 0.0
  %1930 = vmatpush2.msra.mxu0 0.0
  %1931 = vmatprep.subr.mxu0 0.0
  %1932 = vmatpush2.msra.mxu0 0.0
  %1933 = vmatprep.subr.mxu0 0.0
  %1934 = vmatpush2.msra.mxu0 0.0
  %1935 = vmatprep.subr.mxu0 0.0
  %1936 = vmatpush2.msra.mxu0 0.0
  %1937 = vmatprep.subr.mxu0 0.0
  %1938 = vmatpush2.msra.mxu0 0.0
  %1939 = vmatprep.mubr.f32.mxu0 0.0
  %1940 = vmatmul.mubr.f32.gmra.mxu0 %v1661
  %v1941 = vpop.f32.mrf.mxu0
  %v1942 = vadd.f32 0.0, %v1941
  %v1943 = vpop.f32.mrf.mxu0
  %v1944 = vadd.f32 0.0, %v1943
  %1945 = vdwg.mxu0
  %v1946 = vadd.f32 %v1729, %v1551
  %v1947 = vadd.f32 %v1731, %v1553
  %v1948 = vadd.f32 %v1800, %v1622
  %v1949 = vadd.f32 %v1802, %v1624
  %v1950 = vxor.u32 %v1946, 2147483648
  %v1951 = vmul.f32 %v1950, 1.442695
  %v1952 = vpow.pop %v1951
  %v1953 = vadd.f32 %v1952, 1.0
  %v1954 = vrcp.pop %v1953
  %v1955 = vmul.f32 1.0, %v1954
  %v1956 = vxor.u32 %v1947, 2147483648
  %v1957 = vmul.f32 %v1956, 1.442695
  %v1958 = vpow.pop %v1957
  %v1959 = vadd.f32 %v1958, 1.0
  %v1960 = vrcp.pop %v1959
  %v1961 = vmul.f32 1.0, %v1960
  %v1962 = vtanh.pop %v1948
  %v1963 = vxor.u32 %v1949, 2147483648
  %v1964 = vmul.f32 %v1963, 1.442695
  %v1965 = vpow.pop %v1964
  %v1966 = vadd.f32 %v1965, 1.0
  %v1967 = vrcp.pop %v1966
  %v1968 = vmul.f32 1.0, %v1967
  %v1969 = vmul.f32 %v1961, %v1481
  %v1970 = vmul.f32 %v1955, %v1962
  %v1971 = vadd.f32 %v1969, %v1970
  %v1972 = vtanh.pop %v1971
  %v1973 = vmul.f32 %v1968, %v1972
  %1974 = vmatprep.subr.mxu0 %v611
  %1975 = vmatpush1.msra.mxu0 %v610
  %1976 = vmatprep.subr.mxu0 %v607
  %1977 = vmatpush1.msra.mxu0 %v606
  %1978 = vmatprep.subr.mxu0 %v603
  %1979 = vmatpush1.msra.mxu0 %v602
  %1980 = vmatprep.subr.mxu0 %v599
  %1981 = vmatpush1.msra.mxu0 %v598
  %1982 = vmatprep.subr.mxu0 %v595
  %1983 = vmatpush1.msra.mxu0 %v594
  %1984 = vmatprep.subr.mxu0 %v591
  %1985 = vmatpush1.msra.mxu0 %v590
  %1986 = vmatprep.subr.mxu0 %v587
  %1987 = vmatpush1.msra.mxu0 %v586
  %1988 = vmatprep.subr.mxu0 %v583
  %1989 = vmatpush1.msra.mxu0 %v582
  %1990 = vmatprep.subr.mxu0 %v579
  %1991 = vmatpush1.msra.mxu0 %v578
  %1992 = vmatprep.subr.mxu0 %v575
  %1993 = vmatpush1.msra.mxu0 %v574
  %1994 = vmatprep.subr.mxu0 %v571
  %1995 = vmatpush1.msra.mxu0 %v570
  %1996 = vmatprep.subr.mxu0 %v567
  %1997 = vmatpush1.msra.mxu0 %v566
  %1998 = vmatprep.subr.mxu0 %v563
  %1999 = vmatpush1.msra.mxu0 %v562
  %2000 = vmatprep.subr.mxu0 %v559
  %2001 = vmatpush1.msra.mxu0 %v558
  %2002 = vmatprep.subr.mxu0 %v555
  %2003 = vmatpush1.msra.mxu0 %v554
  %2004 = vmatprep.subr.mxu0 %v551
  %2005 = vmatpush1.msra.mxu0 %v550
  %2006 = vmatprep.subr.mxu0 0.0
  %2007 = vmatpush2.msra.mxu0 0.0
  %2008 = vmatprep.subr.mxu0 0.0
  %2009 = vmatpush2.msra.mxu0 0.0
  %2010 = vmatprep.subr.mxu0 0.0
  %2011 = vmatpush2.msra.mxu0 0.0
  %2012 = vmatprep.subr.mxu0 0.0
  %2013 = vmatpush2.msra.mxu0 0.0
  %2014 = vmatprep.subr.mxu0 0.0
  %2015 = vmatpush2.msra.mxu0 0.0
  %2016 = vmatprep.subr.mxu0 0.0
  %2017 = vmatpush2.msra.mxu0 0.0
  %2018 = vmatprep.subr.mxu0 0.0
  %2019 = vmatpush2.msra.mxu0 0.0
  %2020 = vmatprep.subr.mxu0 0.0
  %2021 = vmatpush2.msra.mxu0 0.0
  %2022 = vmatprep.subr.mxu0 0.0
  %2023 = vmatpush2.msra.mxu0 0.0
  %2024 = vmatprep.subr.mxu0 0.0
  %2025 = vmatpush2.msra.mxu0 0.0
  %2026 = vmatprep.subr.mxu0 0.0
  %2027 = vmatpush2.msra.mxu0 0.0
  %2028 = vmatprep.subr.mxu0 0.0
  %2029 = vmatpush2.msra.mxu0 0.0
  %2030 = vmatprep.subr.mxu0 0.0
  %2031 = vmatpush2.msra.mxu0 0.0
  %2032 = vmatprep.subr.mxu0 0.0
  %2033 = vmatpush2.msra.mxu0 0.0
  %2034 = vmatprep.subr.mxu0 0.0
  %2035 = vmatpush2.msra.mxu0 0.0
  %2036 = vmatprep.subr.mxu0 0.0
  %2037 = vmatpush2.msra.mxu0 0.0
  %2038 = vmatprep.mubr.f32.mxu0 0.0
  %2039 = vmatmul.mubr.f32.gmra.mxu0 %v1973
  %v2040 = vpop.f32.mrf.mxu0
  %v2041 = vadd.f32 %v619, %v2040
  %v2042 = vpop.f32.mrf.mxu0
  %v2043 = vadd.f32 %v623, %v2042
  %2044 = vdwg.mxu0
  %2045 = vmatprep.subr.mxu0 %v613
  %2046 = vmatpush1.msra.mxu0 %v612
  %2047 = vmatprep.subr.mxu0 %v609
  %2048 = vmatpush1.msra.mxu0 %v608
  %2049 = vmatprep.subr.mxu0 %v605
  %2050 = vmatpush1.msra.mxu0 %v604
  %2051 = vmatprep.subr.mxu0 %v601
  %2052 = vmatpush1.msra.mxu0 %v600
  %2053 = vmatprep.subr.mxu0 %v597
  %2054 = vmatpush1.msra.mxu0 %v596
  %2055 = vmatprep.subr.mxu0 %v593
  %2056 = vmatpush1.msra.mxu0 %v592
  %2057 = vmatprep.subr.mxu0 %v589
  %2058 = vmatpush1.msra.mxu0 %v588
  %2059 = vmatprep.subr.mxu0 %v585
  %2060 = vmatpush1.msra.mxu0 %v584
  %2061 = vmatprep.subr.mxu0 %v581
  %2062 = vmatpush1.msra.mxu0 %v580
  %2063 = vmatprep.subr.mxu0 %v577
  %2064 = vmatpush1.msra.mxu0 %v576
  %2065 = vmatprep.subr.mxu0 %v573
  %2066 = vmatpush1.msra.mxu0 %v572
  %2067 = vmatprep.subr.mxu0 %v569
  %2068 = vmatpush1.msra.mxu0 %v568
  %2069 = vmatprep.subr.mxu0 %v565
  %2070 = vmatpush1.msra.mxu0 %v564
  %2071 = vmatprep.subr.mxu0 %v561
  %2072 = vmatpush1.msra.mxu0 %v560
  %2073 = vmatprep.subr.mxu0 %v557
  %2074 = vmatpush1.msra.mxu0 %v556
  %2075 = vmatprep.subr.mxu0 %v553
  %2076 = vmatpush1.msra.mxu0 %v552
  %2077 = vmatprep.subr.mxu0 0.0
  %2078 = vmatpush2.msra.mxu0 0.0
  %2079 = vmatprep.subr.mxu0 0.0
  %2080 = vmatpush2.msra.mxu0 0.0
  %2081 = vmatprep.subr.mxu0 0.0
  %2082 = vmatpush2.msra.mxu0 0.0
  %2083 = vmatprep.subr.mxu0 0.0
  %2084 = vmatpush2.msra.mxu0 0.0
  %2085 = vmatprep.subr.mxu0 0.0
  %2086 = vmatpush2.msra.mxu0 0.0
  %2087 = vmatprep.subr.mxu0 0.0
  %2088 = vmatpush2.msra.mxu0 0.0
  %2089 = vmatprep.subr.mxu0 0.0
  %2090 = vmatpush2.msra.mxu0 0.0
  %2091 = vmatprep.subr.mxu0 0.0
  %2092 = vmatpush2.msra.mxu0 0.0
  %2093 = vmatprep.subr.mxu0 0.0
  %2094 = vmatpush2.msra.mxu0 0.0
  %2095 = vmatprep.subr.mxu0 0.0
  %2096 = vmatpush2.msra.mxu0 0.0
  %2097 = vmatprep.subr.mxu0 0.0
  %2098 = vmatpush2.msra.mxu0 0.0
  %2099 = vmatprep.subr.mxu0 0.0
  %2100 = vmatpush2.msra.mxu0 0.0
  %2101 = vmatprep.subr.mxu0 0.0
  %2102 = vmatpush2.msra.mxu0 0.0
  %2103 = vmatprep.subr.mxu0 0.0
  %2104 = vmatpush2.msra.mxu0 0.0
  %2105 = vmatprep.subr.mxu0 0.0
  %2106 = vmatpush2.msra.mxu0 0.0
  %2107 = vmatprep.subr.mxu0 0.0
  %2108 = vmatpush2.msra.mxu0 0.0
  %2109 = vmatprep.mubr.f32.mxu0 0.0
  %2110 = vmatmul.mubr.f32.gmra.mxu0 %v1973
  %v2111 = vpop.f32.mrf.mxu0
  %v2112 = vadd.f32 %v627, %v2111
  %v2113 = vpop.f32.mrf.mxu0
  %v2114 = vadd.f32 %v631, %v2113
  %2115 = vdwg.mxu0
  %v2116 = vadd.f32 %v1626, %v1973
  %s2117 = smul.u32 3, 4
  %s2118 = smul.addr %s2117, 8
  %s2119 = scalar_lea.vmem [#allocation2], %s2118
  %v2120 = vld [vmem:[%s2119] sm:$0xff]
  %v2121 = vld [vmem:[%s2119 + $0x8] sm:$0xff]
  %v2122 = vld [vmem:[%s2119 + $0x10] sm:$0xff]
  %v2123 = vld [vmem:[%s2119 + $0x18] sm:$0xff]
  %v2124 = vadd.f32 %v2120, %v1871
  %v2125 = vadd.f32 %v2121, %v1873
  %v2126 = vadd.f32 %v2122, %v1942
  %v2127 = vadd.f32 %v2123, %v1944
  %v2128 = vxor.u32 %v2124, 2147483648
  %v2129 = vmul.f32 %v2128, 1.442695
  %v2130 = vpow.pop %v2129
  %v2131 = vadd.f32 %v2130, 1.0
  %v2132 = vrcp.pop %v2131
  %v2133 = vmul.f32 1.0, %v2132
  %v2134 = vxor.u32 %v2125, 2147483648
  %v2135 = vmul.f32 %v2134, 1.442695
  %v2136 = vpow.pop %v2135
  %v2137 = vadd.f32 %v2136, 1.0
  %v2138 = vrcp.pop %v2137
  %v2139 = vmul.f32 1.0, %v2138
  %v2140 = vtanh.pop %v2126
  %v2141 = vxor.u32 %v2127, 2147483648
  %v2142 = vmul.f32 %v2141, 1.442695
  %v2143 = vpow.pop %v2142
  %v2144 = vadd.f32 %v2143, 1.0
  %v2145 = vrcp.pop %v2144
  %v2146 = vmul.f32 1.0, %v2145
  %v2147 = vmul.f32 %v2139, %v1659
  %v2148 = vmul.f32 %v2133, %v2140
  %v2149 = vadd.f32 %v2147, %v2148
  %v2150 = vtanh.pop %v2149
  %v2151 = vmul.f32 %v2146, %v2150
  %2152 = vmatprep.subr.mxu0 %v543
  %2153 = vmatpush1.msra.mxu0 %v542
  %2154 = vmatprep.subr.mxu0 %v535
  %2155 = vmatpush1.msra.mxu0 %v534
  %2156 = vmatprep.subr.mxu0 %v527
  %2157 = vmatpush1.msra.mxu0 %v526
  %2158 = vmatprep.subr.mxu0 %v519
  %2159 = vmatpush1.msra.mxu0 %v518
  %2160 = vmatprep.subr.mxu0 %v511
  %2161 = vmatpush1.msra.mxu0 %v510
  %2162 = vmatprep.subr.mxu0 %v503
  %2163 = vmatpush1.msra.mxu0 %v502
  %2164 = vmatprep.subr.mxu0 %v495
  %2165 = vmatpush1.msra.mxu0 %v494
  %2166 = vmatprep.subr.mxu0 %v487
  %2167 = vmatpush1.msra.mxu0 %v486
  %2168 = vmatprep.subr.mxu0 %v479
  %2169 = vmatpush1.msra.mxu0 %v478
  %2170 = vmatprep.subr.mxu0 %v471
  %2171 = vmatpush1.msra.mxu0 %v470
  %2172 = vmatprep.subr.mxu0 %v463
  %2173 = vmatpush1.msra.mxu0 %v462
  %2174 = vmatprep.subr.mxu0 %v455
  %2175 = vmatpush1.msra.mxu0 %v454
  %2176 = vmatprep.subr.mxu0 %v447
  %2177 = vmatpush1.msra.mxu0 %v446
  %2178 = vmatprep.subr.mxu0 %v439
  %2179 = vmatpush1.msra.mxu0 %v438
  %2180 = vmatprep.subr.mxu0 %v431
  %2181 = vmatpush1.msra.mxu0 %v430
  %2182 = vmatprep.subr.mxu0 %v423
  %2183 = vmatpush1.msra.mxu0 %v422
  %2184 = vmatprep.subr.mxu0 0.0
  %2185 = vmatpush2.msra.mxu0 0.0
  %2186 = vmatprep.subr.mxu0 0.0
  %2187 = vmatpush2.msra.mxu0 0.0
  %2188 = vmatprep.subr.mxu0 0.0
  %2189 = vmatpush2.msra.mxu0 0.0
  %2190 = vmatprep.subr.mxu0 0.0
  %2191 = vmatpush2.msra.mxu0 0.0
  %2192 = vmatprep.subr.mxu0 0.0
  %2193 = vmatpush2.msra.mxu0 0.0
  %2194 = vmatprep.subr.mxu0 0.0
  %2195 = vmatpush2.msra.mxu0 0.0
  %2196 = vmatprep.subr.mxu0 0.0
  %2197 = vmatpush2.msra.mxu0 0.0
  %2198 = vmatprep.subr.mxu0 0.0
  %2199 = vmatpush2.msra.mxu0 0.0
  %2200 = vmatprep.subr.mxu0 0.0
  %2201 = vmatpush2.msra.mxu0 0.0
  %2202 = vmatprep.subr.mxu0 0.0
  %2203 = vmatpush2.msra.mxu0 0.0
  %2204 = vmatprep.subr.mxu0 0.0
  %2205 = vmatpush2.msra.mxu0 0.0
  %2206 = vmatprep.subr.mxu0 0.0
  %2207 = vmatpush2.msra.mxu0 0.0
  %2208 = vmatprep.subr.mxu0 0.0
  %2209 = vmatpush2.msra.mxu0 0.0
  %2210 = vmatprep.subr.mxu0 0.0
  %2211 = vmatpush2.msra.mxu0 0.0
  %2212 = vmatprep.subr.mxu0 0.0
  %2213 = vmatpush2.msra.mxu0 0.0
  %2214 = vmatprep.subr.mxu0 0.0
  %2215 = vmatpush2.msra.mxu0 0.0
  %2216 = vmatprep.mubr.f32.mxu0 0.0
  %2217 = vmatmul.mubr.f32.gmra.mxu0 %v2151
  %v2218 = vpop.f32.mrf.mxu0
  %v2219 = vadd.f32 0.0, %v2218
  %v2220 = vpop.f32.mrf.mxu0
  %v2221 = vadd.f32 0.0, %v2220
  %2222 = vdwg.mxu0
  %2223 = vmatprep.subr.mxu0 %v545
  %2224 = vmatpush1.msra.mxu0 %v544
  %2225 = vmatprep.subr.mxu0 %v537
  %2226 = vmatpush1.msra.mxu0 %v536
  %2227 = vmatprep.subr.mxu0 %v529
  %2228 = vmatpush1.msra.mxu0 %v528
  %2229 = vmatprep.subr.mxu0 %v521
  %2230 = vmatpush1.msra.mxu0 %v520
  %2231 = vmatprep.subr.mxu0 %v513
  %2232 = vmatpush1.msra.mxu0 %v512
  %2233 = vmatprep.subr.mxu0 %v505
  %2234 = vmatpush1.msra.mxu0 %v504
  %2235 = vmatprep.subr.mxu0 %v497
  %2236 = vmatpush1.msra.mxu0 %v496
  %2237 = vmatprep.subr.mxu0 %v489
  %2238 = vmatpush1.msra.mxu0 %v488
  %2239 = vmatprep.subr.mxu0 %v481
  %2240 = vmatpush1.msra.mxu0 %v480
  %2241 = vmatprep.subr.mxu0 %v473
  %2242 = vmatpush1.msra.mxu0 %v472
  %2243 = vmatprep.subr.mxu0 %v465
  %2244 = vmatpush1.msra.mxu0 %v464
  %2245 = vmatprep.subr.mxu0 %v457
  %2246 = vmatpush1.msra.mxu0 %v456
  %2247 = vmatprep.subr.mxu0 %v449
  %2248 = vmatpush1.msra.mxu0 %v448
  %2249 = vmatprep.subr.mxu0 %v441
  %2250 = vmatpush1.msra.mxu0 %v440
  %2251 = vmatprep.subr.mxu0 %v433
  %2252 = vmatpush1.msra.mxu0 %v432
  %2253 = vmatprep.subr.mxu0 %v425
  %2254 = vmatpush1.msra.mxu0 %v424
  %2255 = vmatprep.subr.mxu0 0.0
  %2256 = vmatpush2.msra.mxu0 0.0
  %2257 = vmatprep.subr.mxu0 0.0
  %2258 = vmatpush2.msra.mxu0 0.0
  %2259 = vmatprep.subr.mxu0 0.0
  %2260 = vmatpush2.msra.mxu0 0.0
  %2261 = vmatprep.subr.mxu0 0.0
  %2262 = vmatpush2.msra.mxu0 0.0
  %2263 = vmatprep.subr.mxu0 0.0
  %2264 = vmatpush2.msra.mxu0 0.0
  %2265 = vmatprep.subr.mxu0 0.0
  %2266 = vmatpush2.msra.mxu0 0.0
  %2267 = vmatprep.subr.mxu0 0.0
  %2268 = vmatpush2.msra.mxu0 0.0
  %2269 = vmatprep.subr.mxu0 0.0
  %2270 = vmatpush2.msra.mxu0 0.0
  %2271 = vmatprep.subr.mxu0 0.0
  %2272 = vmatpush2.msra.mxu0 0.0
  %2273 = vmatprep.subr.mxu0 0.0
  %2274 = vmatpush2.msra.mxu0 0.0
  %2275 = vmatprep.subr.mxu0 0.0
  %2276 = vmatpush2.msra.mxu0 0.0
  %2277 = vmatprep.subr.mxu0 0.0
  %2278 = vmatpush2.msra.mxu0 0.0
  %2279 = vmatprep.subr.mxu0 0.0
  %2280 = vmatpush2.msra.mxu0 0.0
  %2281 = vmatprep.subr.mxu0 0.0
  %2282 = vmatpush2.msra.mxu0 0.0
  %2283 = vmatprep.subr.mxu0 0.0
  %2284 = vmatpush2.msra.mxu0 0.0
  %2285 = vmatprep.subr.mxu0 0.0
  %2286 = vmatpush2.msra.mxu0 0.0
  %2287 = vmatprep.mubr.f32.mxu0 0.0
  %2288 = vmatmul.mubr.f32.gmra.mxu0 %v2151
  %v2289 = vpop.f32.mrf.mxu0
  %v2290 = vadd.f32 0.0, %v2289
  %v2291 = vpop.f32.mrf.mxu0
  %v2292 = vadd.f32 0.0, %v2291
  %2293 = vdwg.mxu0
  %2294 = vmatprep.subr.mxu0 %v547
  %2295 = vmatpush1.msra.mxu0 %v546
  %2296 = vmatprep.subr.mxu0 %v539
  %2297 = vmatpush1.msra.mxu0 %v538
  %2298 = vmatprep.subr.mxu0 %v531
  %2299 = vmatpush1.msra.mxu0 %v530
  %2300 = vmatprep.subr.mxu0 %v523
  %2301 = vmatpush1.msra.mxu0 %v522
  %2302 = vmatprep.subr.mxu0 %v515
  %2303 = vmatpush1.msra.mxu0 %v514
  %2304 = vmatprep.subr.mxu0 %v507
  %2305 = vmatpush1.msra.mxu0 %v506
  %2306 = vmatprep.subr.mxu0 %v499
  %2307 = vmatpush1.msra.mxu0 %v498
  %2308 = vmatprep.subr.mxu0 %v491
  %2309 = vmatpush1.msra.mxu0 %v490
  %2310 = vmatprep.subr.mxu0 %v483
  %2311 = vmatpush1.msra.mxu0 %v482
  %2312 = vmatprep.subr.mxu0 %v475
  %2313 = vmatpush1.msra.mxu0 %v474
  %2314 = vmatprep.subr.mxu0 %v467
  %2315 = vmatpush1.msra.mxu0 %v466
  %2316 = vmatprep.subr.mxu0 %v459
  %2317 = vmatpush1.msra.mxu0 %v458
  %2318 = vmatprep.subr.mxu0 %v451
  %2319 = vmatpush1.msra.mxu0 %v450
  %2320 = vmatprep.subr.mxu0 %v443
  %2321 = vmatpush1.msra.mxu0 %v442
  %2322 = vmatprep.subr.mxu0 %v435
  %2323 = vmatpush1.msra.mxu0 %v434
  %2324 = vmatprep.subr.mxu0 %v427
  %2325 = vmatpush1.msra.mxu0 %v426
  %2326 = vmatprep.subr.mxu0 0.0
  %2327 = vmatpush2.msra.mxu0 0.0
  %2328 = vmatprep.subr.mxu0 0.0
  %2329 = vmatpush2.msra.mxu0 0.0
  %2330 = vmatprep.subr.mxu0 0.0
  %2331 = vmatpush2.msra.mxu0 0.0
  %2332 = vmatprep.subr.mxu0 0.0
  %2333 = vmatpush2.msra.mxu0 0.0
  %2334 = vmatprep.subr.mxu0 0.0
  %2335 = vmatpush2.msra.mxu0 0.0
  %2336 = vmatprep.subr.mxu0 0.0
  %2337 = vmatpush2.msra.mxu0 0.0
  %2338 = vmatprep.subr.mxu0 0.0
  %2339 = vmatpush2.msra.mxu0 0.0
  %2340 = vmatprep.subr.mxu0 0.0
  %2341 = vmatpush2.msra.mxu0 0.0
  %2342 = vmatprep.subr.mxu0 0.0
  %2343 = vmatpush2.msra.mxu0 0.0
  %2344 = vmatprep.subr.mxu0 0.0
  %2345 = vmatpush2.msra.mxu0 0.0
  %2346 = vmatprep.subr.mxu0 0.0
  %2347 = vmatpush2.msra.mxu0 0.0
  %2348 = vmatprep.subr.mxu0 0.0
  %2349 = vmatpush2.msra.mxu0 0.0
  %2350 = vmatprep.subr.mxu0 0.0
  %2351 = vmatpush2.msra.mxu0 0.0
  %2352 = vmatprep.subr.mxu0 0.0
  %2353 = vmatpush2.msra.mxu0 0.0
  %2354 = vmatprep.subr.mxu0 0.0
  %2355 = vmatpush2.msra.mxu0 0.0
  %2356 = vmatprep.subr.mxu0 0.0
  %2357 = vmatpush2.msra.mxu0 0.0
  %2358 = vmatprep.mubr.f32.mxu0 0.0
  %2359 = vmatmul.mubr.f32.gmra.mxu0 %v2151
  %v2360 = vpop.f32.mrf.mxu0
  %v2361 = vadd.f32 0.0, %v2360
  %v2362 = vpop.f32.mrf.mxu0
  %v2363 = vadd.f32 0.0, %v2362
  %2364 = vdwg.mxu0
  %2365 = vmatprep.subr.mxu0 %v549
  %2366 = vmatpush1.msra.mxu0 %v548
  %2367 = vmatprep.subr.mxu0 %v541
  %2368 = vmatpush1.msra.mxu0 %v540
  %2369 = vmatprep.subr.mxu0 %v533
  %2370 = vmatpush1.msra.mxu0 %v532
  %2371 = vmatprep.subr.mxu0 %v525
  %2372 = vmatpush1.msra.mxu0 %v524
  %2373 = vmatprep.subr.mxu0 %v517
  %2374 = vmatpush1.msra.mxu0 %v516
  %2375 = vmatprep.subr.mxu0 %v509
  %2376 = vmatpush1.msra.mxu0 %v508
  %2377 = vmatprep.subr.mxu0 %v501
  %2378 = vmatpush1.msra.mxu0 %v500
  %2379 = vmatprep.subr.mxu0 %v493
  %2380 = vmatpush1.msra.mxu0 %v492
  %2381 = vmatprep.subr.mxu0 %v485
  %2382 = vmatpush1.msra.mxu0 %v484
  %2383 = vmatprep.subr.mxu0 %v477
  %2384 = vmatpush1.msra.mxu0 %v476
  %2385 = vmatprep.subr.mxu0 %v469
  %2386 = vmatpush1.msra.mxu0 %v468
  %2387 = vmatprep.subr.mxu0 %v461
  %2388 = vmatpush1.msra.mxu0 %v460
  %2389 = vmatprep.subr.mxu0 %v453
  %2390 = vmatpush1.msra.mxu0 %v452
  %2391 = vmatprep.subr.mxu0 %v445
  %2392 = vmatpush1.msra.mxu0 %v444
  %2393 = vmatprep.subr.mxu0 %v437
  %2394 = vmatpush1.msra.mxu0 %v436
  %2395 = vmatprep.subr.mxu0 %v429
  %2396 = vmatpush1.msra.mxu0 %v428
  %2397 = vmatprep.subr.mxu0 0.0
  %2398 = vmatpush2.msra.mxu0 0.0
  %2399 = vmatprep.subr.mxu0 0.0
  %2400 = vmatpush2.msra.mxu0 0.0
  %2401 = vmatprep.subr.mxu0 0.0
  %2402 = vmatpush2.msra.mxu0 0.0
  %2403 = vmatprep.subr.mxu0 0.0
  %2404 = vmatpush2.msra.mxu0 0.0
  %2405 = vmatprep.subr.mxu0 0.0
  %2406 = vmatpush2.msra.mxu0 0.0
  %2407 = vmatprep.subr.mxu0 0.0
  %2408 = vmatpush2.msra.mxu0 0.0
  %2409 = vmatprep.subr.mxu0 0.0
  %2410 = vmatpush2.msra.mxu0 0.0
  %2411 = vmatprep.subr.mxu0 0.0
  %2412 = vmatpush2.msra.mxu0 0.0
  %2413 = vmatprep.subr.mxu0 0.0
  %2414 = vmatpush2.msra.mxu0 0.0
  %2415 = vmatprep.subr.mxu0 0.0
  %2416 = vmatpush2.msra.mxu0 0.0
  %2417 = vmatprep.subr.mxu0 0.0
  %2418 = vmatpush2.msra.mxu0 0.0
  %2419 = vmatprep.subr.mxu0 0.0
  %2420 = vmatpush2.msra.mxu0 0.0
  %2421 = vmatprep.subr.mxu0 0.0
  %2422 = vmatpush2.msra.mxu0 0.0
  %2423 = vmatprep.subr.mxu0 0.0
  %2424 = vmatpush2.msra.mxu0 0.0
  %2425 = vmatprep.subr.mxu0 0.0
  %2426 = vmatpush2.msra.mxu0 0.0
  %2427 = vmatprep.subr.mxu0 0.0
  %2428 = vmatpush2.msra.mxu0 0.0
  %2429 = vmatprep.mubr.f32.mxu0 0.0
  %2430 = vmatmul.mubr.f32.gmra.mxu0 %v2151
  %v2431 = vpop.f32.mrf.mxu0
  %v2432 = vadd.f32 0.0, %v2431
  %v2433 = vpop.f32.mrf.mxu0
  %v2434 = vadd.f32 0.0, %v2433
  %2435 = vdwg.mxu0
  %v2436 = vadd.f32 %v2219, %v2041
  %v2437 = vadd.f32 %v2221, %v2043
  %v2438 = vadd.f32 %v2290, %v2112
  %v2439 = vadd.f32 %v2292, %v2114
  %v2440 = vxor.u32 %v2436, 2147483648
  %v2441 = vmul.f32 %v2440, 1.442695
  %v2442 = vpow.pop %v2441
  %v2443 = vadd.f32 %v2442, 1.0
  %v2444 = vrcp.pop %v2443
  %v2445 = vmul.f32 1.0, %v2444
  %v2446 = vxor.u32 %v2437, 2147483648
  %v2447 = vmul.f32 %v2446, 1.442695
  %v2448 = vpow.pop %v2447
  %v2449 = vadd.f32 %v2448, 1.0
  %v2450 = vrcp.pop %v2449
  %v2451 = vmul.f32 1.0, %v2450
  %v2452 = vtanh.pop %v2438
  %v2453 = vxor.u32 %v2439, 2147483648
  %v2454 = vmul.f32 %v2453, 1.442695
  %v2455 = vpow.pop %v2454
  %v2456 = vadd.f32 %v2455, 1.0
  %v2457 = vrcp.pop %v2456
  %v2458 = vmul.f32 1.0, %v2457
  %v2459 = vmul.f32 %v2451, %v1971
  %v2460 = vmul.f32 %v2445, %v2452
  %v2461 = vadd.f32 %v2459, %v2460
  %v2462 = vtanh.pop %v2461
  %v2463 = vmul.f32 %v2458, %v2462
  %2464 = vmatprep.subr.mxu0 %v611
  %2465 = vmatpush1.msra.mxu0 %v610
  %2466 = vmatprep.subr.mxu0 %v607
  %2467 = vmatpush1.msra.mxu0 %v606
  %2468 = vmatprep.subr.mxu0 %v603
  %2469 = vmatpush1.msra.mxu0 %v602
  %2470 = vmatprep.subr.mxu0 %v599
  %2471 = vmatpush1.msra.mxu0 %v598
  %2472 = vmatprep.subr.mxu0 %v595
  %2473 = vmatpush1.msra.mxu0 %v594
  %2474 = vmatprep.subr.mxu0 %v591
  %2475 = vmatpush1.msra.mxu0 %v590
  %2476 = vmatprep.subr.mxu0 %v587
  %2477 = vmatpush1.msra.mxu0 %v586
  %2478 = vmatprep.subr.mxu0 %v583
  %2479 = vmatpush1.msra.mxu0 %v582
  %2480 = vmatprep.subr.mxu0 %v579
  %2481 = vmatpush1.msra.mxu0 %v578
  %2482 = vmatprep.subr.mxu0 %v575
  %2483 = vmatpush1.msra.mxu0 %v574
  %2484 = vmatprep.subr.mxu0 %v571
  %2485 = vmatpush1.msra.mxu0 %v570
  %2486 = vmatprep.subr.mxu0 %v567
  %2487 = vmatpush1.msra.mxu0 %v566
  %2488 = vmatprep.subr.mxu0 %v563
  %2489 = vmatpush1.msra.mxu0 %v562
  %2490 = vmatprep.subr.mxu0 %v559
  %2491 = vmatpush1.msra.mxu0 %v558
  %2492 = vmatprep.subr.mxu0 %v555
  %2493 = vmatpush1.msra.mxu0 %v554
  %2494 = vmatprep.subr.mxu0 %v551
  %2495 = vmatpush1.msra.mxu0 %v550
  %2496 = vmatprep.subr.mxu0 0.0
  %2497 = vmatpush2.msra.mxu0 0.0
  %2498 = vmatprep.subr.mxu0 0.0
  %2499 = vmatpush2.msra.mxu0 0.0
  %2500 = vmatprep.subr.mxu0 0.0
  %2501 = vmatpush2.msra.mxu0 0.0
  %2502 = vmatprep.subr.mxu0 0.0
  %2503 = vmatpush2.msra.mxu0 0.0
  %2504 = vmatprep.subr.mxu0 0.0
  %2505 = vmatpush2.msra.mxu0 0.0
  %2506 = vmatprep.subr.mxu0 0.0
  %2507 = vmatpush2.msra.mxu0 0.0
  %2508 = vmatprep.subr.mxu0 0.0
  %2509 = vmatpush2.msra.mxu0 0.0
  %2510 = vmatprep.subr.mxu0 0.0
  %2511 = vmatpush2.msra.mxu0 0.0
  %2512 = vmatprep.subr.mxu0 0.0
  %2513 = vmatpush2.msra.mxu0 0.0
  %2514 = vmatprep.subr.mxu0 0.0
  %2515 = vmatpush2.msra.mxu0 0.0
  %2516 = vmatprep.subr.mxu0 0.0
  %2517 = vmatpush2.msra.mxu0 0.0
  %2518 = vmatprep.subr.mxu0 0.0
  %2519 = vmatpush2.msra.mxu0 0.0
  %2520 = vmatprep.subr.mxu0 0.0
  %2521 = vmatpush2.msra.mxu0 0.0
  %2522 = vmatprep.subr.mxu0 0.0
  %2523 = vmatpush2.msra.mxu0 0.0
  %2524 = vmatprep.subr.mxu0 0.0
  %2525 = vmatpush2.msra.mxu0 0.0
  %2526 = vmatprep.subr.mxu0 0.0
  %2527 = vmatpush2.msra.mxu0 0.0
  %2528 = vmatprep.mubr.f32.mxu0 0.0
  %2529 = vmatmul.mubr.f32.gmra.mxu0 %v2463
  %v2530 = vpop.f32.mrf.mxu0
  %v2531 = vadd.f32 %v619, %v2530
  %v2532 = vpop.f32.mrf.mxu0
  %v2533 = vadd.f32 %v623, %v2532
  %2534 = vdwg.mxu0
  %2535 = vmatprep.subr.mxu0 %v613
  %2536 = vmatpush1.msra.mxu0 %v612
  %2537 = vmatprep.subr.mxu0 %v609
  %2538 = vmatpush1.msra.mxu0 %v608
  %2539 = vmatprep.subr.mxu0 %v605
  %2540 = vmatpush1.msra.mxu0 %v604
  %2541 = vmatprep.subr.mxu0 %v601
  %2542 = vmatpush1.msra.mxu0 %v600
  %2543 = vmatprep.subr.mxu0 %v597
  %2544 = vmatpush1.msra.mxu0 %v596
  %2545 = vmatprep.subr.mxu0 %v593
  %2546 = vmatpush1.msra.mxu0 %v592
  %2547 = vmatprep.subr.mxu0 %v589
  %2548 = vmatpush1.msra.mxu0 %v588
  %2549 = vmatprep.subr.mxu0 %v585
  %2550 = vmatpush1.msra.mxu0 %v584
  %2551 = vmatprep.subr.mxu0 %v581
  %2552 = vmatpush1.msra.mxu0 %v580
  %2553 = vmatprep.subr.mxu0 %v577
  %2554 = vmatpush1.msra.mxu0 %v576
  %2555 = vmatprep.subr.mxu0 %v573
  %2556 = vmatpush1.msra.mxu0 %v572
  %2557 = vmatprep.subr.mxu0 %v569
  %2558 = vmatpush1.msra.mxu0 %v568
  %2559 = vmatprep.subr.mxu0 %v565
  %2560 = vmatpush1.msra.mxu0 %v564
  %2561 = vmatprep.subr.mxu0 %v561
  %2562 = vmatpush1.msra.mxu0 %v560
  %2563 = vmatprep.subr.mxu0 %v557
  %2564 = vmatpush1.msra.mxu0 %v556
  %2565 = vmatprep.subr.mxu0 %v553
  %2566 = vmatpush1.msra.mxu0 %v552
  %2567 = vmatprep.subr.mxu0 0.0
  %2568 = vmatpush2.msra.mxu0 0.0
  %2569 = vmatprep.subr.mxu0 0.0
  %2570 = vmatpush2.msra.mxu0 0.0
  %2571 = vmatprep.subr.mxu0 0.0
  %2572 = vmatpush2.msra.mxu0 0.0
  %2573 = vmatprep.subr.mxu0 0.0
  %2574 = vmatpush2.msra.mxu0 0.0
  %2575 = vmatprep.subr.mxu0 0.0
  %2576 = vmatpush2.msra.mxu0 0.0
  %2577 = vmatprep.subr.mxu0 0.0
  %2578 = vmatpush2.msra.mxu0 0.0
  %2579 = vmatprep.subr.mxu0 0.0
  %2580 = vmatpush2.msra.mxu0 0.0
  %2581 = vmatprep.subr.mxu0 0.0
  %2582 = vmatpush2.msra.mxu0 0.0
  %2583 = vmatprep.subr.mxu0 0.0
  %2584 = vmatpush2.msra.mxu0 0.0
  %2585 = vmatprep.subr.mxu0 0.0
  %2586 = vmatpush2.msra.mxu0 0.0
  %2587 = vmatprep.subr.mxu0 0.0
  %2588 = vmatpush2.msra.mxu0 0.0
  %2589 = vmatprep.subr.mxu0 0.0
  %2590 = vmatpush2.msra.mxu0 0.0
  %2591 = vmatprep.subr.mxu0 0.0
  %2592 = vmatpush2.msra.mxu0 0.0
  %2593 = vmatprep.subr.mxu0 0.0
  %2594 = vmatpush2.msra.mxu0 0.0
  %2595 = vmatprep.subr.mxu0 0.0
  %2596 = vmatpush2.msra.mxu0 0.0
  %2597 = vmatprep.subr.mxu0 0.0
  %2598 = vmatpush2.msra.mxu0 0.0
  %2599 = vmatprep.mubr.f32.mxu0 0.0
  %2600 = vmatmul.mubr.f32.gmra.mxu0 %v2463
  %v2601 = vpop.f32.mrf.mxu0
  %v2602 = vadd.f32 %v627, %v2601
  %v2603 = vpop.f32.mrf.mxu0
  %v2604 = vadd.f32 %v631, %v2603
  %2605 = vdwg.mxu0
  %v2606 = vadd.f32 %v2116, %v2463
  %s2607 = smul.u32 4, 4
  %s2608 = smul.addr %s2607, 8
  %s2609 = scalar_lea.vmem [#allocation2], %s2608
  %v2610 = vld [vmem:[%s2609] sm:$0xff]
  %v2611 = vld [vmem:[%s2609 + $0x8] sm:$0xff]
  %v2612 = vld [vmem:[%s2609 + $0x10] sm:$0xff]
  %v2613 = vld [vmem:[%s2609 + $0x18] sm:$0xff]
  %v2614 = vadd.f32 %v2610, %v2361
  %v2615 = vadd.f32 %v2611, %v2363
  %v2616 = vadd.f32 %v2612, %v2432
  %v2617 = vadd.f32 %v2613, %v2434
  %v2618 = vxor.u32 %v2614, 2147483648
  %v2619 = vmul.f32 %v2618, 1.442695
  %v2620 = vpow.pop %v2619
  %v2621 = vadd.f32 %v2620, 1.0
  %v2622 = vrcp.pop %v2621
  %v2623 = vmul.f32 1.0, %v2622
  %v2624 = vxor.u32 %v2615, 2147483648
  %v2625 = vmul.f32 %v2624, 1.442695
  %v2626 = vpow.pop %v2625
  %v2627 = vadd.f32 %v2626, 1.0
  %v2628 = vrcp.pop %v2627
  %v2629 = vmul.f32 1.0, %v2628
  %v2630 = vtanh.pop %v2616
  %v2631 = vxor.u32 %v2617, 2147483648
  %v2632 = vmul.f32 %v2631, 1.442695
  %v2633 = vpow.pop %v2632
  %v2634 = vadd.f32 %v2633, 1.0
  %v2635 = vrcp.pop %v2634
  %v2636 = vmul.f32 1.0, %v2635
  %v2637 = vmul.f32 %v2629, %v2149
  %v2638 = vmul.f32 %v2623, %v2630
  %v2639 = vadd.f32 %v2637, %v2638
  %v2640 = vtanh.pop %v2639
  %v2641 = vmul.f32 %v2636, %v2640
  %2642 = vmatprep.subr.mxu0 %v543
  %2643 = vmatpush1.msra.mxu0 %v542
  %2644 = vmatprep.subr.mxu0 %v535
  %2645 = vmatpush1.msra.mxu0 %v534
  %2646 = vmatprep.subr.mxu0 %v527
  %2647 = vmatpush1.msra.mxu0 %v526
  %2648 = vmatprep.subr.mxu0 %v519
  %2649 = vmatpush1.msra.mxu0 %v518
  %2650 = vmatprep.subr.mxu0 %v511
  %2651 = vmatpush1.msra.mxu0 %v510
  %2652 = vmatprep.subr.mxu0 %v503
  %2653 = vmatpush1.msra.mxu0 %v502
  %2654 = vmatprep.subr.mxu0 %v495
  %2655 = vmatpush1.msra.mxu0 %v494
  %2656 = vmatprep.subr.mxu0 %v487
  %2657 = vmatpush1.msra.mxu0 %v486
  %2658 = vmatprep.subr.mxu0 %v479
  %2659 = vmatpush1.msra.mxu0 %v478
  %2660 = vmatprep.subr.mxu0 %v471
  %2661 = vmatpush1.msra.mxu0 %v470
  %2662 = vmatprep.subr.mxu0 %v463
  %2663 = vmatpush1.msra.mxu0 %v462
  %2664 = vmatprep.subr.mxu0 %v455
  %2665 = vmatpush1.msra.mxu0 %v454
  %2666 = vmatprep.subr.mxu0 %v447
  %2667 = vmatpush1.msra.mxu0 %v446
  %2668 = vmatprep.subr.mxu0 %v439
  %2669 = vmatpush1.msra.mxu0 %v438
  %2670 = vmatprep.subr.mxu0 %v431
  %2671 = vmatpush1.msra.mxu0 %v430
  %2672 = vmatprep.subr.mxu0 %v423
  %2673 = vmatpush1.msra.mxu0 %v422
  %2674 = vmatprep.subr.mxu0 0.0
  %2675 = vmatpush2.msra.mxu0 0.0
  %2676 = vmatprep.subr.mxu0 0.0
  %2677 = vmatpush2.msra.mxu0 0.0
  %2678 = vmatprep.subr.mxu0 0.0
  %2679 = vmatpush2.msra.mxu0 0.0
  %2680 = vmatprep.subr.mxu0 0.0
  %2681 = vmatpush2.msra.mxu0 0.0
  %2682 = vmatprep.subr.mxu0 0.0
  %2683 = vmatpush2.msra.mxu0 0.0
  %2684 = vmatprep.subr.mxu0 0.0
  %2685 = vmatpush2.msra.mxu0 0.0
  %2686 = vmatprep.subr.mxu0 0.0
  %2687 = vmatpush2.msra.mxu0 0.0
  %2688 = vmatprep.subr.mxu0 0.0
  %2689 = vmatpush2.msra.mxu0 0.0
  %2690 = vmatprep.subr.mxu0 0.0
  %2691 = vmatpush2.msra.mxu0 0.0
  %2692 = vmatprep.subr.mxu0 0.0
  %2693 = vmatpush2.msra.mxu0 0.0
  %2694 = vmatprep.subr.mxu0 0.0
  %2695 = vmatpush2.msra.mxu0 0.0
  %2696 = vmatprep.subr.mxu0 0.0
  %2697 = vmatpush2.msra.mxu0 0.0
  %2698 = vmatprep.subr.mxu0 0.0
  %2699 = vmatpush2.msra.mxu0 0.0
  %2700 = vmatprep.subr.mxu0 0.0
  %2701 = vmatpush2.msra.mxu0 0.0
  %2702 = vmatprep.subr.mxu0 0.0
  %2703 = vmatpush2.msra.mxu0 0.0
  %2704 = vmatprep.subr.mxu0 0.0
  %2705 = vmatpush2.msra.mxu0 0.0
  %2706 = vmatprep.mubr.f32.mxu0 0.0
  %2707 = vmatmul.mubr.f32.gmra.mxu0 %v2641
  %v2708 = vpop.f32.mrf.mxu0
  %v2709 = vadd.f32 0.0, %v2708
  %v2710 = vpop.f32.mrf.mxu0
  %v2711 = vadd.f32 0.0, %v2710
  %2712 = vdwg.mxu0
  %2713 = vmatprep.subr.mxu0 %v545
  %2714 = vmatpush1.msra.mxu0 %v544
  %2715 = vmatprep.subr.mxu0 %v537
  %2716 = vmatpush1.msra.mxu0 %v536
  %2717 = vmatprep.subr.mxu0 %v529
  %2718 = vmatpush1.msra.mxu0 %v528
  %2719 = vmatprep.subr.mxu0 %v521
  %2720 = vmatpush1.msra.mxu0 %v520
  %2721 = vmatprep.subr.mxu0 %v513
  %2722 = vmatpush1.msra.mxu0 %v512
  %2723 = vmatprep.subr.mxu0 %v505
  %2724 = vmatpush1.msra.mxu0 %v504
  %2725 = vmatprep.subr.mxu0 %v497
  %2726 = vmatpush1.msra.mxu0 %v496
  %2727 = vmatprep.subr.mxu0 %v489
  %2728 = vmatpush1.msra.mxu0 %v488
  %2729 = vmatprep.subr.mxu0 %v481
  %2730 = vmatpush1.msra.mxu0 %v480
  %2731 = vmatprep.subr.mxu0 %v473
  %2732 = vmatpush1.msra.mxu0 %v472
  %2733 = vmatprep.subr.mxu0 %v465
  %2734 = vmatpush1.msra.mxu0 %v464
  %2735 = vmatprep.subr.mxu0 %v457
  %2736 = vmatpush1.msra.mxu0 %v456
  %2737 = vmatprep.subr.mxu0 %v449
  %2738 = vmatpush1.msra.mxu0 %v448
  %2739 = vmatprep.subr.mxu0 %v441
  %2740 = vmatpush1.msra.mxu0 %v440
  %2741 = vmatprep.subr.mxu0 %v433
  %2742 = vmatpush1.msra.mxu0 %v432
  %2743 = vmatprep.subr.mxu0 %v425
  %2744 = vmatpush1.msra.mxu0 %v424
  %2745 = vmatprep.subr.mxu0 0.0
  %2746 = vmatpush2.msra.mxu0 0.0
  %2747 = vmatprep.subr.mxu0 0.0
  %2748 = vmatpush2.msra.mxu0 0.0
  %2749 = vmatprep.subr.mxu0 0.0
  %2750 = vmatpush2.msra.mxu0 0.0
  %2751 = vmatprep.subr.mxu0 0.0
  %2752 = vmatpush2.msra.mxu0 0.0
  %2753 = vmatprep.subr.mxu0 0.0
  %2754 = vmatpush2.msra.mxu0 0.0
  %2755 = vmatprep.subr.mxu0 0.0
  %2756 = vmatpush2.msra.mxu0 0.0
  %2757 = vmatprep.subr.mxu0 0.0
  %2758 = vmatpush2.msra.mxu0 0.0
  %2759 = vmatprep.subr.mxu0 0.0
  %2760 = vmatpush2.msra.mxu0 0.0
  %2761 = vmatprep.subr.mxu0 0.0
  %2762 = vmatpush2.msra.mxu0 0.0
  %2763 = vmatprep.subr.mxu0 0.0
  %2764 = vmatpush2.msra.mxu0 0.0
  %2765 = vmatprep.subr.mxu0 0.0
  %2766 = vmatpush2.msra.mxu0 0.0
  %2767 = vmatprep.subr.mxu0 0.0
  %2768 = vmatpush2.msra.mxu0 0.0
  %2769 = vmatprep.subr.mxu0 0.0
  %2770 = vmatpush2.msra.mxu0 0.0
  %2771 = vmatprep.subr.mxu0 0.0
  %2772 = vmatpush2.msra.mxu0 0.0
  %2773 = vmatprep.subr.mxu0 0.0
  %2774 = vmatpush2.msra.mxu0 0.0
  %2775 = vmatprep.subr.mxu0 0.0
  %2776 = vmatpush2.msra.mxu0 0.0
  %2777 = vmatprep.mubr.f32.mxu0 0.0
  %2778 = vmatmul.mubr.f32.gmra.mxu0 %v2641
  %v2779 = vpop.f32.mrf.mxu0
  %v2780 = vadd.f32 0.0, %v2779
  %v2781 = vpop.f32.mrf.mxu0
  %v2782 = vadd.f32 0.0, %v2781
  %2783 = vdwg.mxu0
  %2784 = vmatprep.subr.mxu0 %v547
  %2785 = vmatpush1.msra.mxu0 %v546
  %2786 = vmatprep.subr.mxu0 %v539
  %2787 = vmatpush1.msra.mxu0 %v538
  %2788 = vmatprep.subr.mxu0 %v531
  %2789 = vmatpush1.msra.mxu0 %v530
  %2790 = vmatprep.subr.mxu0 %v523
  %2791 = vmatpush1.msra.mxu0 %v522
  %2792 = vmatprep.subr.mxu0 %v515
  %2793 = vmatpush1.msra.mxu0 %v514
  %2794 = vmatprep.subr.mxu0 %v507
  %2795 = vmatpush1.msra.mxu0 %v506
  %2796 = vmatprep.subr.mxu0 %v499
  %2797 = vmatpush1.msra.mxu0 %v498
  %2798 = vmatprep.subr.mxu0 %v491
  %2799 = vmatpush1.msra.mxu0 %v490
  %2800 = vmatprep.subr.mxu0 %v483
  %2801 = vmatpush1.msra.mxu0 %v482
  %2802 = vmatprep.subr.mxu0 %v475
  %2803 = vmatpush1.msra.mxu0 %v474
  %2804 = vmatprep.subr.mxu0 %v467
  %2805 = vmatpush1.msra.mxu0 %v466
  %2806 = vmatprep.subr.mxu0 %v459
  %2807 = vmatpush1.msra.mxu0 %v458
  %2808 = vmatprep.subr.mxu0 %v451
  %2809 = vmatpush1.msra.mxu0 %v450
  %2810 = vmatprep.subr.mxu0 %v443
  %2811 = vmatpush1.msra.mxu0 %v442
  %2812 = vmatprep.subr.mxu0 %v435
  %2813 = vmatpush1.msra.mxu0 %v434
  %2814 = vmatprep.subr.mxu0 %v427
  %2815 = vmatpush1.msra.mxu0 %v426
  %2816 = vmatprep.subr.mxu0 0.0
  %2817 = vmatpush2.msra.mxu0 0.0
  %2818 = vmatprep.subr.mxu0 0.0
  %2819 = vmatpush2.msra.mxu0 0.0
  %2820 = vmatprep.subr.mxu0 0.0
  %2821 = vmatpush2.msra.mxu0 0.0
  %2822 = vmatprep.subr.mxu0 0.0
  %2823 = vmatpush2.msra.mxu0 0.0
  %2824 = vmatprep.subr.mxu0 0.0
  %2825 = vmatpush2.msra.mxu0 0.0
  %2826 = vmatprep.subr.mxu0 0.0
  %2827 = vmatpush2.msra.mxu0 0.0
  %2828 = vmatprep.subr.mxu0 0.0
  %2829 = vmatpush2.msra.mxu0 0.0
  %2830 = vmatprep.subr.mxu0 0.0
  %2831 = vmatpush2.msra.mxu0 0.0
  %2832 = vmatprep.subr.mxu0 0.0
  %2833 = vmatpush2.msra.mxu0 0.0
  %2834 = vmatprep.subr.mxu0 0.0
  %2835 = vmatpush2.msra.mxu0 0.0
  %2836 = vmatprep.subr.mxu0 0.0
  %2837 = vmatpush2.msra.mxu0 0.0
  %2838 = vmatprep.subr.mxu0 0.0
  %2839 = vmatpush2.msra.mxu0 0.0
  %2840 = vmatprep.subr.mxu0 0.0
  %2841 = vmatpush2.msra.mxu0 0.0
  %2842 = vmatprep.subr.mxu0 0.0
  %2843 = vmatpush2.msra.mxu0 0.0
  %2844 = vmatprep.subr.mxu0 0.0
  %2845 = vmatpush2.msra.mxu0 0.0
  %2846 = vmatprep.subr.mxu0 0.0
  %2847 = vmatpush2.msra.mxu0 0.0
  %2848 = vmatprep.mubr.f32.mxu0 0.0
  %2849 = vmatmul.mubr.f32.gmra.mxu0 %v2641
  %v2850 = vpop.f32.mrf.mxu0
  %v2851 = vadd.f32 0.0, %v2850
  %v2852 = vpop.f32.mrf.mxu0
  %v2853 = vadd.f32 0.0, %v2852
  %2854 = vdwg.mxu0
  %2855 = vmatprep.subr.mxu0 %v549
  %2856 = vmatpush1.msra.mxu0 %v548
  %2857 = vmatprep.subr.mxu0 %v541
  %2858 = vmatpush1.msra.mxu0 %v540
  %2859 = vmatprep.subr.mxu0 %v533
  %2860 = vmatpush1.msra.mxu0 %v532
  %2861 = vmatprep.subr.mxu0 %v525
  %2862 = vmatpush1.msra.mxu0 %v524
  %2863 = vmatprep.subr.mxu0 %v517
  %2864 = vmatpush1.msra.mxu0 %v516
  %2865 = vmatprep.subr.mxu0 %v509
  %2866 = vmatpush1.msra.mxu0 %v508
  %2867 = vmatprep.subr.mxu0 %v501
  %2868 = vmatpush1.msra.mxu0 %v500
  %2869 = vmatprep.subr.mxu0 %v493
  %2870 = vmatpush1.msra.mxu0 %v492
  %2871 = vmatprep.subr.mxu0 %v485
  %2872 = vmatpush1.msra.mxu0 %v484
  %2873 = vmatprep.subr.mxu0 %v477
  %2874 = vmatpush1.msra.mxu0 %v476
  %2875 = vmatprep.subr.mxu0 %v469
  %2876 = vmatpush1.msra.mxu0 %v468
  %2877 = vmatprep.subr.mxu0 %v461
  %2878 = vmatpush1.msra.mxu0 %v460
  %2879 = vmatprep.subr.mxu0 %v453
  %2880 = vmatpush1.msra.mxu0 %v452
  %2881 = vmatprep.subr.mxu0 %v445
  %2882 = vmatpush1.msra.mxu0 %v444
  %2883 = vmatprep.subr.mxu0 %v437
  %2884 = vmatpush1.msra.mxu0 %v436
  %2885 = vmatprep.subr.mxu0 %v429
  %2886 = vmatpush1.msra.mxu0 %v428
  %2887 = vmatprep.subr.mxu0 0.0
  %2888 = vmatpush2.msra.mxu0 0.0
  %2889 = vmatprep.subr.mxu0 0.0
  %2890 = vmatpush2.msra.mxu0 0.0
  %2891 = vmatprep.subr.mxu0 0.0
  %2892 = vmatpush2.msra.mxu0 0.0
  %2893 = vmatprep.subr.mxu0 0.0
  %2894 = vmatpush2.msra.mxu0 0.0
  %2895 = vmatprep.subr.mxu0 0.0
  %2896 = vmatpush2.msra.mxu0 0.0
  %2897 = vmatprep.subr.mxu0 0.0
  %2898 = vmatpush2.msra.mxu0 0.0
  %2899 = vmatprep.subr.mxu0 0.0
  %2900 = vmatpush2.msra.mxu0 0.0
  %2901 = vmatprep.subr.mxu0 0.0
  %2902 = vmatpush2.msra.mxu0 0.0
  %2903 = vmatprep.subr.mxu0 0.0
  %2904 = vmatpush2.msra.mxu0 0.0
  %2905 = vmatprep.subr.mxu0 0.0
  %2906 = vmatpush2.msra.mxu0 0.0
  %2907 = vmatprep.subr.mxu0 0.0
  %2908 = vmatpush2.msra.mxu0 0.0
  %2909 = vmatprep.subr.mxu0 0.0
  %2910 = vmatpush2.msra.mxu0 0.0
  %2911 = vmatprep.subr.mxu0 0.0
  %2912 = vmatpush2.msra.mxu0 0.0
  %2913 = vmatprep.subr.mxu0 0.0
  %2914 = vmatpush2.msra.mxu0 0.0
  %2915 = vmatprep.subr.mxu0 0.0
  %2916 = vmatpush2.msra.mxu0 0.0
  %2917 = vmatprep.subr.mxu0 0.0
  %2918 = vmatpush2.msra.mxu0 0.0
  %2919 = vmatprep.mubr.f32.mxu0 0.0
  %2920 = vmatmul.mubr.f32.gmra.mxu0 %v2641
  %v2921 = vpop.f32.mrf.mxu0
  %v2922 = vadd.f32 0.0, %v2921
  %v2923 = vpop.f32.mrf.mxu0
  %v2924 = vadd.f32 0.0, %v2923
  %2925 = vdwg.mxu0
  %v2926 = vadd.f32 %v2709, %v2531
  %v2927 = vadd.f32 %v2711, %v2533
  %v2928 = vadd.f32 %v2780, %v2602
  %v2929 = vadd.f32 %v2782, %v2604
  %v2930 = vxor.u32 %v2926, 2147483648
  %v2931 = vmul.f32 %v2930, 1.442695
  %v2932 = vpow.pop %v2931
  %v2933 = vadd.f32 %v2932, 1.0
  %v2934 = vrcp.pop %v2933
  %v2935 = vmul.f32 1.0, %v2934
  %v2936 = vxor.u32 %v2927, 2147483648
  %v2937 = vmul.f32 %v2936, 1.442695
  %v2938 = vpow.pop %v2937
  %v2939 = vadd.f32 %v2938, 1.0
  %v2940 = vrcp.pop %v2939
  %v2941 = vmul.f32 1.0, %v2940
  %v2942 = vtanh.pop %v2928
  %v2943 = vxor.u32 %v2929, 2147483648
  %v2944 = vmul.f32 %v2943, 1.442695
  %v2945 = vpow.pop %v2944
  %v2946 = vadd.f32 %v2945, 1.0
  %v2947 = vrcp.pop %v2946
  %v2948 = vmul.f32 1.0, %v2947
  %v2949 = vmul.f32 %v2941, %v2461
  %v2950 = vmul.f32 %v2935, %v2942
  %v2951 = vadd.f32 %v2949, %v2950
  %v2952 = vtanh.pop %v2951
  %v2953 = vmul.f32 %v2948, %v2952
  %2954 = vmatprep.subr.mxu0 %v611
  %2955 = vmatpush1.msra.mxu0 %v610
  %2956 = vmatprep.subr.mxu0 %v607
  %2957 = vmatpush1.msra.mxu0 %v606
  %2958 = vmatprep.subr.mxu0 %v603
  %2959 = vmatpush1.msra.mxu0 %v602
  %2960 = vmatprep.subr.mxu0 %v599
  %2961 = vmatpush1.msra.mxu0 %v598
  %2962 = vmatprep.subr.mxu0 %v595
  %2963 = vmatpush1.msra.mxu0 %v594
  %2964 = vmatprep.subr.mxu0 %v591
  %2965 = vmatpush1.msra.mxu0 %v590
  %2966 = vmatprep.subr.mxu0 %v587
  %2967 = vmatpush1.msra.mxu0 %v586
  %2968 = vmatprep.subr.mxu0 %v583
  %2969 = vmatpush1.msra.mxu0 %v582
  %2970 = vmatprep.subr.mxu0 %v579
  %2971 = vmatpush1.msra.mxu0 %v578
  %2972 = vmatprep.subr.mxu0 %v575
  %2973 = vmatpush1.msra.mxu0 %v574
  %2974 = vmatprep.subr.mxu0 %v571
  %2975 = vmatpush1.msra.mxu0 %v570
  %2976 = vmatprep.subr.mxu0 %v567
  %2977 = vmatpush1.msra.mxu0 %v566
  %2978 = vmatprep.subr.mxu0 %v563
  %2979 = vmatpush1.msra.mxu0 %v562
  %2980 = vmatprep.subr.mxu0 %v559
  %2981 = vmatpush1.msra.mxu0 %v558
  %2982 = vmatprep.subr.mxu0 %v555
  %2983 = vmatpush1.msra.mxu0 %v554
  %2984 = vmatprep.subr.mxu0 %v551
  %2985 = vmatpush1.msra.mxu0 %v550
  %2986 = vmatprep.subr.mxu0 0.0
  %2987 = vmatpush2.msra.mxu0 0.0
  %2988 = vmatprep.subr.mxu0 0.0
  %2989 = vmatpush2.msra.mxu0 0.0
  %2990 = vmatprep.subr.mxu0 0.0
  %2991 = vmatpush2.msra.mxu0 0.0
  %2992 = vmatprep.subr.mxu0 0.0
  %2993 = vmatpush2.msra.mxu0 0.0
  %2994 = vmatprep.subr.mxu0 0.0
  %2995 = vmatpush2.msra.mxu0 0.0
  %2996 = vmatprep.subr.mxu0 0.0
  %2997 = vmatpush2.msra.mxu0 0.0
  %2998 = vmatprep.subr.mxu0 0.0
  %2999 = vmatpush2.msra.mxu0 0.0
  %3000 = vmatprep.subr.mxu0 0.0
  %3001 = vmatpush2.msra.mxu0 0.0
  %3002 = vmatprep.subr.mxu0 0.0
  %3003 = vmatpush2.msra.mxu0 0.0
  %3004 = vmatprep.subr.mxu0 0.0
  %3005 = vmatpush2.msra.mxu0 0.0
  %3006 = vmatprep.subr.mxu0 0.0
  %3007 = vmatpush2.msra.mxu0 0.0
  %3008 = vmatprep.subr.mxu0 0.0
  %3009 = vmatpush2.msra.mxu0 0.0
  %3010 = vmatprep.subr.mxu0 0.0
  %3011 = vmatpush2.msra.mxu0 0.0
  %3012 = vmatprep.subr.mxu0 0.0
  %3013 = vmatpush2.msra.mxu0 0.0
  %3014 = vmatprep.subr.mxu0 0.0
  %3015 = vmatpush2.msra.mxu0 0.0
  %3016 = vmatprep.subr.mxu0 0.0
  %3017 = vmatpush2.msra.mxu0 0.0
  %3018 = vmatprep.mubr.f32.mxu0 0.0
  %3019 = vmatmul.mubr.f32.gmra.mxu0 %v2953
  %v3020 = vpop.f32.mrf.mxu0
  %v3021 = vadd.f32 %v619, %v3020
  %v3022 = vpop.f32.mrf.mxu0
  %v3023 = vadd.f32 %v623, %v3022
  %3024 = vdwg.mxu0
  %3025 = vmatprep.subr.mxu0 %v613
  %3026 = vmatpush1.msra.mxu0 %v612
  %3027 = vmatprep.subr.mxu0 %v609
  %3028 = vmatpush1.msra.mxu0 %v608
  %3029 = vmatprep.subr.mxu0 %v605
  %3030 = vmatpush1.msra.mxu0 %v604
  %3031 = vmatprep.subr.mxu0 %v601
  %3032 = vmatpush1.msra.mxu0 %v600
  %3033 = vmatprep.subr.mxu0 %v597
  %3034 = vmatpush1.msra.mxu0 %v596
  %3035 = vmatprep.subr.mxu0 %v593
  %3036 = vmatpush1.msra.mxu0 %v592
  %3037 = vmatprep.subr.mxu0 %v589
  %3038 = vmatpush1.msra.mxu0 %v588
  %3039 = vmatprep.subr.mxu0 %v585
  %3040 = vmatpush1.msra.mxu0 %v584
  %3041 = vmatprep.subr.mxu0 %v581
  %3042 = vmatpush1.msra.mxu0 %v580
  %3043 = vmatprep.subr.mxu0 %v577
  %3044 = vmatpush1.msra.mxu0 %v576
  %3045 = vmatprep.subr.mxu0 %v573
  %3046 = vmatpush1.msra.mxu0 %v572
  %3047 = vmatprep.subr.mxu0 %v569
  %3048 = vmatpush1.msra.mxu0 %v568
  %3049 = vmatprep.subr.mxu0 %v565
  %3050 = vmatpush1.msra.mxu0 %v564
  %3051 = vmatprep.subr.mxu0 %v561
  %3052 = vmatpush1.msra.mxu0 %v560
  %3053 = vmatprep.subr.mxu0 %v557
  %3054 = vmatpush1.msra.mxu0 %v556
  %3055 = vmatprep.subr.mxu0 %v553
  %3056 = vmatpush1.msra.mxu0 %v552
  %3057 = vmatprep.subr.mxu0 0.0
  %3058 = vmatpush2.msra.mxu0 0.0
  %3059 = vmatprep.subr.mxu0 0.0
  %3060 = vmatpush2.msra.mxu0 0.0
  %3061 = vmatprep.subr.mxu0 0.0
  %3062 = vmatpush2.msra.mxu0 0.0
  %3063 = vmatprep.subr.mxu0 0.0
  %3064 = vmatpush2.msra.mxu0 0.0
  %3065 = vmatprep.subr.mxu0 0.0
  %3066 = vmatpush2.msra.mxu0 0.0
  %3067 = vmatprep.subr.mxu0 0.0
  %3068 = vmatpush2.msra.mxu0 0.0
  %3069 = vmatprep.subr.mxu0 0.0
  %3070 = vmatpush2.msra.mxu0 0.0
  %3071 = vmatprep.subr.mxu0 0.0
  %3072 = vmatpush2.msra.mxu0 0.0
  %3073 = vmatprep.subr.mxu0 0.0
  %3074 = vmatpush2.msra.mxu0 0.0
  %3075 = vmatprep.subr.mxu0 0.0
  %3076 = vmatpush2.msra.mxu0 0.0
  %3077 = vmatprep.subr.mxu0 0.0
  %3078 = vmatpush2.msra.mxu0 0.0
  %3079 = vmatprep.subr.mxu0 0.0
  %3080 = vmatpush2.msra.mxu0 0.0
  %3081 = vmatprep.subr.mxu0 0.0
  %3082 = vmatpush2.msra.mxu0 0.0
  %3083 = vmatprep.subr.mxu0 0.0
  %3084 = vmatpush2.msra.mxu0 0.0
  %3085 = vmatprep.subr.mxu0 0.0
  %3086 = vmatpush2.msra.mxu0 0.0
  %3087 = vmatprep.subr.mxu0 0.0
  %3088 = vmatpush2.msra.mxu0 0.0
  %3089 = vmatprep.mubr.f32.mxu0 0.0
  %3090 = vmatmul.mubr.f32.gmra.mxu0 %v2953
  %v3091 = vpop.f32.mrf.mxu0
  %v3092 = vadd.f32 %v627, %v3091
  %v3093 = vpop.f32.mrf.mxu0
  %v3094 = vadd.f32 %v631, %v3093
  %3095 = vdwg.mxu0
  %v3096 = vadd.f32 %v2606, %v2953
  %s3097 = smul.u32 5, 4
  %s3098 = smul.addr %s3097, 8
  %s3099 = scalar_lea.vmem [#allocation2], %s3098
  %v3100 = vld [vmem:[%s3099] sm:$0xff]
  %v3101 = vld [vmem:[%s3099 + $0x8] sm:$0xff]
  %v3102 = vld [vmem:[%s3099 + $0x10] sm:$0xff]
  %v3103 = vld [vmem:[%s3099 + $0x18] sm:$0xff]
  %v3104 = vadd.f32 %v3100, %v2851
  %v3105 = vadd.f32 %v3101, %v2853
  %v3106 = vadd.f32 %v3102, %v2922
  %v3107 = vadd.f32 %v3103, %v2924
  %v3108 = vxor.u32 %v3104, 2147483648
  %v3109 = vmul.f32 %v3108, 1.442695
  %v3110 = vpow.pop %v3109
  %v3111 = vadd.f32 %v3110, 1.0
  %v3112 = vrcp.pop %v3111
  %v3113 = vmul.f32 1.0, %v3112
  %v3114 = vxor.u32 %v3105, 2147483648
  %v3115 = vmul.f32 %v3114, 1.442695
  %v3116 = vpow.pop %v3115
  %v3117 = vadd.f32 %v3116, 1.0
  %v3118 = vrcp.pop %v3117
  %v3119 = vmul.f32 1.0, %v3118
  %v3120 = vtanh.pop %v3106
  %v3121 = vxor.u32 %v3107, 2147483648
  %v3122 = vmul.f32 %v3121, 1.442695
  %v3123 = vpow.pop %v3122
  %v3124 = vadd.f32 %v3123, 1.0
  %v3125 = vrcp.pop %v3124
  %v3126 = vmul.f32 1.0, %v3125
  %v3127 = vmul.f32 %v3119, %v2639
  %v3128 = vmul.f32 %v3113, %v3120
  %v3129 = vadd.f32 %v3127, %v3128
  %v3130 = vtanh.pop %v3129
  %v3131 = vmul.f32 %v3126, %v3130
  %3132 = vmatprep.subr.mxu0 %v543
  %3133 = vmatpush1.msra.mxu0 %v542
  %3134 = vmatprep.subr.mxu0 %v535
  %3135 = vmatpush1.msra.mxu0 %v534
  %3136 = vmatprep.subr.mxu0 %v527
  %3137 = vmatpush1.msra.mxu0 %v526
  %3138 = vmatprep.subr.mxu0 %v519
  %3139 = vmatpush1.msra.mxu0 %v518
  %3140 = vmatprep.subr.mxu0 %v511
  %3141 = vmatpush1.msra.mxu0 %v510
  %3142 = vmatprep.subr.mxu0 %v503
  %3143 = vmatpush1.msra.mxu0 %v502
  %3144 = vmatprep.subr.mxu0 %v495
  %3145 = vmatpush1.msra.mxu0 %v494
  %3146 = vmatprep.subr.mxu0 %v487
  %3147 = vmatpush1.msra.mxu0 %v486
  %3148 = vmatprep.subr.mxu0 %v479
  %3149 = vmatpush1.msra.mxu0 %v478
  %3150 = vmatprep.subr.mxu0 %v471
  %3151 = vmatpush1.msra.mxu0 %v470
  %3152 = vmatprep.subr.mxu0 %v463
  %3153 = vmatpush1.msra.mxu0 %v462
  %3154 = vmatprep.subr.mxu0 %v455
  %3155 = vmatpush1.msra.mxu0 %v454
  %3156 = vmatprep.subr.mxu0 %v447
  %3157 = vmatpush1.msra.mxu0 %v446
  %3158 = vmatprep.subr.mxu0 %v439
  %3159 = vmatpush1.msra.mxu0 %v438
  %3160 = vmatprep.subr.mxu0 %v431
  %3161 = vmatpush1.msra.mxu0 %v430
  %3162 = vmatprep.subr.mxu0 %v423
  %3163 = vmatpush1.msra.mxu0 %v422
  %3164 = vmatprep.subr.mxu0 0.0
  %3165 = vmatpush2.msra.mxu0 0.0
  %3166 = vmatprep.subr.mxu0 0.0
  %3167 = vmatpush2.msra.mxu0 0.0
  %3168 = vmatprep.subr.mxu0 0.0
  %3169 = vmatpush2.msra.mxu0 0.0
  %3170 = vmatprep.subr.mxu0 0.0
  %3171 = vmatpush2.msra.mxu0 0.0
  %3172 = vmatprep.subr.mxu0 0.0
  %3173 = vmatpush2.msra.mxu0 0.0
  %3174 = vmatprep.subr.mxu0 0.0
  %3175 = vmatpush2.msra.mxu0 0.0
  %3176 = vmatprep.subr.mxu0 0.0
  %3177 = vmatpush2.msra.mxu0 0.0
  %3178 = vmatprep.subr.mxu0 0.0
  %3179 = vmatpush2.msra.mxu0 0.0
  %3180 = vmatprep.subr.mxu0 0.0
  %3181 = vmatpush2.msra.mxu0 0.0
  %3182 = vmatprep.subr.mxu0 0.0
  %3183 = vmatpush2.msra.mxu0 0.0
  %3184 = vmatprep.subr.mxu0 0.0
  %3185 = vmatpush2.msra.mxu0 0.0
  %3186 = vmatprep.subr.mxu0 0.0
  %3187 = vmatpush2.msra.mxu0 0.0
  %3188 = vmatprep.subr.mxu0 0.0
  %3189 = vmatpush2.msra.mxu0 0.0
  %3190 = vmatprep.subr.mxu0 0.0
  %3191 = vmatpush2.msra.mxu0 0.0
  %3192 = vmatprep.subr.mxu0 0.0
  %3193 = vmatpush2.msra.mxu0 0.0
  %3194 = vmatprep.subr.mxu0 0.0
  %3195 = vmatpush2.msra.mxu0 0.0
  %3196 = vmatprep.mubr.f32.mxu0 0.0
  %3197 = vmatmul.mubr.f32.gmra.mxu0 %v3131
  %v3198 = vpop.f32.mrf.mxu0
  %v3199 = vadd.f32 0.0, %v3198
  %v3200 = vpop.f32.mrf.mxu0
  %v3201 = vadd.f32 0.0, %v3200
  %3202 = vdwg.mxu0
  %3203 = vmatprep.subr.mxu0 %v545
  %3204 = vmatpush1.msra.mxu0 %v544
  %3205 = vmatprep.subr.mxu0 %v537
  %3206 = vmatpush1.msra.mxu0 %v536
  %3207 = vmatprep.subr.mxu0 %v529
  %3208 = vmatpush1.msra.mxu0 %v528
  %3209 = vmatprep.subr.mxu0 %v521
  %3210 = vmatpush1.msra.mxu0 %v520
  %3211 = vmatprep.subr.mxu0 %v513
  %3212 = vmatpush1.msra.mxu0 %v512
  %3213 = vmatprep.subr.mxu0 %v505
  %3214 = vmatpush1.msra.mxu0 %v504
  %3215 = vmatprep.subr.mxu0 %v497
  %3216 = vmatpush1.msra.mxu0 %v496
  %3217 = vmatprep.subr.mxu0 %v489
  %3218 = vmatpush1.msra.mxu0 %v488
  %3219 = vmatprep.subr.mxu0 %v481
  %3220 = vmatpush1.msra.mxu0 %v480
  %3221 = vmatprep.subr.mxu0 %v473
  %3222 = vmatpush1.msra.mxu0 %v472
  %3223 = vmatprep.subr.mxu0 %v465
  %3224 = vmatpush1.msra.mxu0 %v464
  %3225 = vmatprep.subr.mxu0 %v457
  %3226 = vmatpush1.msra.mxu0 %v456
  %3227 = vmatprep.subr.mxu0 %v449
  %3228 = vmatpush1.msra.mxu0 %v448
  %3229 = vmatprep.subr.mxu0 %v441
  %3230 = vmatpush1.msra.mxu0 %v440
  %3231 = vmatprep.subr.mxu0 %v433
  %3232 = vmatpush1.msra.mxu0 %v432
  %3233 = vmatprep.subr.mxu0 %v425
  %3234 = vmatpush1.msra.mxu0 %v424
  %3235 = vmatprep.subr.mxu0 0.0
  %3236 = vmatpush2.msra.mxu0 0.0
  %3237 = vmatprep.subr.mxu0 0.0
  %3238 = vmatpush2.msra.mxu0 0.0
  %3239 = vmatprep.subr.mxu0 0.0
  %3240 = vmatpush2.msra.mxu0 0.0
  %3241 = vmatprep.subr.mxu0 0.0
  %3242 = vmatpush2.msra.mxu0 0.0
  %3243 = vmatprep.subr.mxu0 0.0
  %3244 = vmatpush2.msra.mxu0 0.0
  %3245 = vmatprep.subr.mxu0 0.0
  %3246 = vmatpush2.msra.mxu0 0.0
  %3247 = vmatprep.subr.mxu0 0.0
  %3248 = vmatpush2.msra.mxu0 0.0
  %3249 = vmatprep.subr.mxu0 0.0
  %3250 = vmatpush2.msra.mxu0 0.0
  %3251 = vmatprep.subr.mxu0 0.0
  %3252 = vmatpush2.msra.mxu0 0.0
  %3253 = vmatprep.subr.mxu0 0.0
  %3254 = vmatpush2.msra.mxu0 0.0
  %3255 = vmatprep.subr.mxu0 0.0
  %3256 = vmatpush2.msra.mxu0 0.0
  %3257 = vmatprep.subr.mxu0 0.0
  %3258 = vmatpush2.msra.mxu0 0.0
  %3259 = vmatprep.subr.mxu0 0.0
  %3260 = vmatpush2.msra.mxu0 0.0
  %3261 = vmatprep.subr.mxu0 0.0
  %3262 = vmatpush2.msra.mxu0 0.0
  %3263 = vmatprep.subr.mxu0 0.0
  %3264 = vmatpush2.msra.mxu0 0.0
  %3265 = vmatprep.subr.mxu0 0.0
  %3266 = vmatpush2.msra.mxu0 0.0
  %3267 = vmatprep.mubr.f32.mxu0 0.0
  %3268 = vmatmul.mubr.f32.gmra.mxu0 %v3131
  %v3269 = vpop.f32.mrf.mxu0
  %v3270 = vadd.f32 0.0, %v3269
  %v3271 = vpop.f32.mrf.mxu0
  %v3272 = vadd.f32 0.0, %v3271
  %3273 = vdwg.mxu0
  %3274 = vmatprep.subr.mxu0 %v547
  %3275 = vmatpush1.msra.mxu0 %v546
  %3276 = vmatprep.subr.mxu0 %v539
  %3277 = vmatpush1.msra.mxu0 %v538
  %3278 = vmatprep.subr.mxu0 %v531
  %3279 = vmatpush1.msra.mxu0 %v530
  %3280 = vmatprep.subr.mxu0 %v523
  %3281 = vmatpush1.msra.mxu0 %v522
  %3282 = vmatprep.subr.mxu0 %v515
  %3283 = vmatpush1.msra.mxu0 %v514
  %3284 = vmatprep.subr.mxu0 %v507
  %3285 = vmatpush1.msra.mxu0 %v506
  %3286 = vmatprep.subr.mxu0 %v499
  %3287 = vmatpush1.msra.mxu0 %v498
  %3288 = vmatprep.subr.mxu0 %v491
  %3289 = vmatpush1.msra.mxu0 %v490
  %3290 = vmatprep.subr.mxu0 %v483
  %3291 = vmatpush1.msra.mxu0 %v482
  %3292 = vmatprep.subr.mxu0 %v475
  %3293 = vmatpush1.msra.mxu0 %v474
  %3294 = vmatprep.subr.mxu0 %v467
  %3295 = vmatpush1.msra.mxu0 %v466
  %3296 = vmatprep.subr.mxu0 %v459
  %3297 = vmatpush1.msra.mxu0 %v458
  %3298 = vmatprep.subr.mxu0 %v451
  %3299 = vmatpush1.msra.mxu0 %v450
  %3300 = vmatprep.subr.mxu0 %v443
  %3301 = vmatpush1.msra.mxu0 %v442
  %3302 = vmatprep.subr.mxu0 %v435
  %3303 = vmatpush1.msra.mxu0 %v434
  %3304 = vmatprep.subr.mxu0 %v427
  %3305 = vmatpush1.msra.mxu0 %v426
  %3306 = vmatprep.subr.mxu0 0.0
  %3307 = vmatpush2.msra.mxu0 0.0
  %3308 = vmatprep.subr.mxu0 0.0
  %3309 = vmatpush2.msra.mxu0 0.0
  %3310 = vmatprep.subr.mxu0 0.0
  %3311 = vmatpush2.msra.mxu0 0.0
  %3312 = vmatprep.subr.mxu0 0.0
  %3313 = vmatpush2.msra.mxu0 0.0
  %3314 = vmatprep.subr.mxu0 0.0
  %3315 = vmatpush2.msra.mxu0 0.0
  %3316 = vmatprep.subr.mxu0 0.0
  %3317 = vmatpush2.msra.mxu0 0.0
  %3318 = vmatprep.subr.mxu0 0.0
  %3319 = vmatpush2.msra.mxu0 0.0
  %3320 = vmatprep.subr.mxu0 0.0
  %3321 = vmatpush2.msra.mxu0 0.0
  %3322 = vmatprep.subr.mxu0 0.0
  %3323 = vmatpush2.msra.mxu0 0.0
  %3324 = vmatprep.subr.mxu0 0.0
  %3325 = vmatpush2.msra.mxu0 0.0
  %3326 = vmatprep.subr.mxu0 0.0
  %3327 = vmatpush2.msra.mxu0 0.0
  %3328 = vmatprep.subr.mxu0 0.0
  %3329 = vmatpush2.msra.mxu0 0.0
  %3330 = vmatprep.subr.mxu0 0.0
  %3331 = vmatpush2.msra.mxu0 0.0
  %3332 = vmatprep.subr.mxu0 0.0
  %3333 = vmatpush2.msra.mxu0 0.0
  %3334 = vmatprep.subr.mxu0 0.0
  %3335 = vmatpush2.msra.mxu0 0.0
  %3336 = vmatprep.subr.mxu0 0.0
  %3337 = vmatpush2.msra.mxu0 0.0
  %3338 = vmatprep.mubr.f32.mxu0 0.0
  %3339 = vmatmul.mubr.f32.gmra.mxu0 %v3131
  %v3340 = vpop.f32.mrf.mxu0
  %v3341 = vadd.f32 0.0, %v3340
  %v3342 = vpop.f32.mrf.mxu0
  %v3343 = vadd.f32 0.0, %v3342
  %3344 = vdwg.mxu0
  %3345 = vmatprep.subr.mxu0 %v549
  %3346 = vmatpush1.msra.mxu0 %v548
  %3347 = vmatprep.subr.mxu0 %v541
  %3348 = vmatpush1.msra.mxu0 %v540
  %3349 = vmatprep.subr.mxu0 %v533
  %3350 = vmatpush1.msra.mxu0 %v532
  %3351 = vmatprep.subr.mxu0 %v525
  %3352 = vmatpush1.msra.mxu0 %v524
  %3353 = vmatprep.subr.mxu0 %v517
  %3354 = vmatpush1.msra.mxu0 %v516
  %3355 = vmatprep.subr.mxu0 %v509
  %3356 = vmatpush1.msra.mxu0 %v508
  %3357 = vmatprep.subr.mxu0 %v501
  %3358 = vmatpush1.msra.mxu0 %v500
  %3359 = vmatprep.subr.mxu0 %v493
  %3360 = vmatpush1.msra.mxu0 %v492
  %3361 = vmatprep.subr.mxu0 %v485
  %3362 = vmatpush1.msra.mxu0 %v484
  %3363 = vmatprep.subr.mxu0 %v477
  %3364 = vmatpush1.msra.mxu0 %v476
  %3365 = vmatprep.subr.mxu0 %v469
  %3366 = vmatpush1.msra.mxu0 %v468
  %3367 = vmatprep.subr.mxu0 %v461
  %3368 = vmatpush1.msra.mxu0 %v460
  %3369 = vmatprep.subr.mxu0 %v453
  %3370 = vmatpush1.msra.mxu0 %v452
  %3371 = vmatprep.subr.mxu0 %v445
  %3372 = vmatpush1.msra.mxu0 %v444
  %3373 = vmatprep.subr.mxu0 %v437
  %3374 = vmatpush1.msra.mxu0 %v436
  %3375 = vmatprep.subr.mxu0 %v429
  %3376 = vmatpush1.msra.mxu0 %v428
  %3377 = vmatprep.subr.mxu0 0.0
  %3378 = vmatpush2.msra.mxu0 0.0
  %3379 = vmatprep.subr.mxu0 0.0
  %3380 = vmatpush2.msra.mxu0 0.0
  %3381 = vmatprep.subr.mxu0 0.0
  %3382 = vmatpush2.msra.mxu0 0.0
  %3383 = vmatprep.subr.mxu0 0.0
  %3384 = vmatpush2.msra.mxu0 0.0
  %3385 = vmatprep.subr.mxu0 0.0
  %3386 = vmatpush2.msra.mxu0 0.0
  %3387 = vmatprep.subr.mxu0 0.0
  %3388 = vmatpush2.msra.mxu0 0.0
  %3389 = vmatprep.subr.mxu0 0.0
  %3390 = vmatpush2.msra.mxu0 0.0
  %3391 = vmatprep.subr.mxu0 0.0
  %3392 = vmatpush2.msra.mxu0 0.0
  %3393 = vmatprep.subr.mxu0 0.0
  %3394 = vmatpush2.msra.mxu0 0.0
  %3395 = vmatprep.subr.mxu0 0.0
  %3396 = vmatpush2.msra.mxu0 0.0
  %3397 = vmatprep.subr.mxu0 0.0
  %3398 = vmatpush2.msra.mxu0 0.0
  %3399 = vmatprep.subr.mxu0 0.0
  %3400 = vmatpush2.msra.mxu0 0.0
  %3401 = vmatprep.subr.mxu0 0.0
  %3402 = vmatpush2.msra.mxu0 0.0
  %3403 = vmatprep.subr.mxu0 0.0
  %3404 = vmatpush2.msra.mxu0 0.0
  %3405 = vmatprep.subr.mxu0 0.0
  %3406 = vmatpush2.msra.mxu0 0.0
  %3407 = vmatprep.subr.mxu0 0.0
  %3408 = vmatpush2.msra.mxu0 0.0
  %3409 = vmatprep.mubr.f32.mxu0 0.0
  %3410 = vmatmul.mubr.f32.gmra.mxu0 %v3131
  %v3411 = vpop.f32.mrf.mxu0
  %v3412 = vadd.f32 0.0, %v3411
  %v3413 = vpop.f32.mrf.mxu0
  %v3414 = vadd.f32 0.0, %v3413
  %3415 = vdwg.mxu0
  %v3416 = vadd.f32 %v3199, %v3021
  %v3417 = vadd.f32 %v3201, %v3023
  %v3418 = vadd.f32 %v3270, %v3092
  %v3419 = vadd.f32 %v3272, %v3094
  %v3420 = vxor.u32 %v3416, 2147483648
  %v3421 = vmul.f32 %v3420, 1.442695
  %v3422 = vpow.pop %v3421
  %v3423 = vadd.f32 %v3422, 1.0
  %v3424 = vrcp.pop %v3423
  %v3425 = vmul.f32 1.0, %v3424
  %v3426 = vxor.u32 %v3417, 2147483648
  %v3427 = vmul.f32 %v3426, 1.442695
  %v3428 = vpow.pop %v3427
  %v3429 = vadd.f32 %v3428, 1.0
  %v3430 = vrcp.pop %v3429
  %v3431 = vmul.f32 1.0, %v3430
  %v3432 = vtanh.pop %v3418
  %v3433 = vxor.u32 %v3419, 2147483648
  %v3434 = vmul.f32 %v3433, 1.442695
  %v3435 = vpow.pop %v3434
  %v3436 = vadd.f32 %v3435, 1.0
  %v3437 = vrcp.pop %v3436
  %v3438 = vmul.f32 1.0, %v3437
  %v3439 = vmul.f32 %v3431, %v2951
  %v3440 = vmul.f32 %v3425, %v3432
  %v3441 = vadd.f32 %v3439, %v3440
  %v3442 = vtanh.pop %v3441
  %v3443 = vmul.f32 %v3438, %v3442
  %3444 = vmatprep.subr.mxu0 %v611
  %3445 = vmatpush1.msra.mxu0 %v610
  %3446 = vmatprep.subr.mxu0 %v607
  %3447 = vmatpush1.msra.mxu0 %v606
  %3448 = vmatprep.subr.mxu0 %v603
  %3449 = vmatpush1.msra.mxu0 %v602
  %3450 = vmatprep.subr.mxu0 %v599
  %3451 = vmatpush1.msra.mxu0 %v598
  %3452 = vmatprep.subr.mxu0 %v595
  %3453 = vmatpush1.msra.mxu0 %v594
  %3454 = vmatprep.subr.mxu0 %v591
  %3455 = vmatpush1.msra.mxu0 %v590
  %3456 = vmatprep.subr.mxu0 %v587
  %3457 = vmatpush1.msra.mxu0 %v586
  %3458 = vmatprep.subr.mxu0 %v583
  %3459 = vmatpush1.msra.mxu0 %v582
  %3460 = vmatprep.subr.mxu0 %v579
  %3461 = vmatpush1.msra.mxu0 %v578
  %3462 = vmatprep.subr.mxu0 %v575
  %3463 = vmatpush1.msra.mxu0 %v574
  %3464 = vmatprep.subr.mxu0 %v571
  %3465 = vmatpush1.msra.mxu0 %v570
  %3466 = vmatprep.subr.mxu0 %v567
  %3467 = vmatpush1.msra.mxu0 %v566
  %3468 = vmatprep.subr.mxu0 %v563
  %3469 = vmatpush1.msra.mxu0 %v562
  %3470 = vmatprep.subr.mxu0 %v559
  %3471 = vmatpush1.msra.mxu0 %v558
  %3472 = vmatprep.subr.mxu0 %v555
  %3473 = vmatpush1.msra.mxu0 %v554
  %3474 = vmatprep.subr.mxu0 %v551
  %3475 = vmatpush1.msra.mxu0 %v550
  %3476 = vmatprep.subr.mxu0 0.0
  %3477 = vmatpush2.msra.mxu0 0.0
  %3478 = vmatprep.subr.mxu0 0.0
  %3479 = vmatpush2.msra.mxu0 0.0
  %3480 = vmatprep.subr.mxu0 0.0
  %3481 = vmatpush2.msra.mxu0 0.0
  %3482 = vmatprep.subr.mxu0 0.0
  %3483 = vmatpush2.msra.mxu0 0.0
  %3484 = vmatprep.subr.mxu0 0.0
  %3485 = vmatpush2.msra.mxu0 0.0
  %3486 = vmatprep.subr.mxu0 0.0
  %3487 = vmatpush2.msra.mxu0 0.0
  %3488 = vmatprep.subr.mxu0 0.0
  %3489 = vmatpush2.msra.mxu0 0.0
  %3490 = vmatprep.subr.mxu0 0.0
  %3491 = vmatpush2.msra.mxu0 0.0
  %3492 = vmatprep.subr.mxu0 0.0
  %3493 = vmatpush2.msra.mxu0 0.0
  %3494 = vmatprep.subr.mxu0 0.0
  %3495 = vmatpush2.msra.mxu0 0.0
  %3496 = vmatprep.subr.mxu0 0.0
  %3497 = vmatpush2.msra.mxu0 0.0
  %3498 = vmatprep.subr.mxu0 0.0
  %3499 = vmatpush2.msra.mxu0 0.0
  %3500 = vmatprep.subr.mxu0 0.0
  %3501 = vmatpush2.msra.mxu0 0.0
  %3502 = vmatprep.subr.mxu0 0.0
  %3503 = vmatpush2.msra.mxu0 0.0
  %3504 = vmatprep.subr.mxu0 0.0
  %3505 = vmatpush2.msra.mxu0 0.0
  %3506 = vmatprep.subr.mxu0 0.0
  %3507 = vmatpush2.msra.mxu0 0.0
  %3508 = vmatprep.mubr.f32.mxu0 0.0
  %3509 = vmatmul.mubr.f32.gmra.mxu0 %v3443
  %v3510 = vpop.f32.mrf.mxu0
  %v3511 = vadd.f32 %v619, %v3510
  %v3512 = vpop.f32.mrf.mxu0
  %v3513 = vadd.f32 %v623, %v3512
  %3514 = vdwg.mxu0
  %3515 = vmatprep.subr.mxu0 %v613
  %3516 = vmatpush1.msra.mxu0 %v612
  %3517 = vmatprep.subr.mxu0 %v609
  %3518 = vmatpush1.msra.mxu0 %v608
  %3519 = vmatprep.subr.mxu0 %v605
  %3520 = vmatpush1.msra.mxu0 %v604
  %3521 = vmatprep.subr.mxu0 %v601
  %3522 = vmatpush1.msra.mxu0 %v600
  %3523 = vmatprep.subr.mxu0 %v597
  %3524 = vmatpush1.msra.mxu0 %v596
  %3525 = vmatprep.subr.mxu0 %v593
  %3526 = vmatpush1.msra.mxu0 %v592
  %3527 = vmatprep.subr.mxu0 %v589
  %3528 = vmatpush1.msra.mxu0 %v588
  %3529 = vmatprep.subr.mxu0 %v585
  %3530 = vmatpush1.msra.mxu0 %v584
  %3531 = vmatprep.subr.mxu0 %v581
  %3532 = vmatpush1.msra.mxu0 %v580
  %3533 = vmatprep.subr.mxu0 %v577
  %3534 = vmatpush1.msra.mxu0 %v576
  %3535 = vmatprep.subr.mxu0 %v573
  %3536 = vmatpush1.msra.mxu0 %v572
  %3537 = vmatprep.subr.mxu0 %v569
  %3538 = vmatpush1.msra.mxu0 %v568
  %3539 = vmatprep.subr.mxu0 %v565
  %3540 = vmatpush1.msra.mxu0 %v564
  %3541 = vmatprep.subr.mxu0 %v561
  %3542 = vmatpush1.msra.mxu0 %v560
  %3543 = vmatprep.subr.mxu0 %v557
  %3544 = vmatpush1.msra.mxu0 %v556
  %3545 = vmatprep.subr.mxu0 %v553
  %3546 = vmatpush1.msra.mxu0 %v552
  %3547 = vmatprep.subr.mxu0 0.0
  %3548 = vmatpush2.msra.mxu0 0.0
  %3549 = vmatprep.subr.mxu0 0.0
  %3550 = vmatpush2.msra.mxu0 0.0
  %3551 = vmatprep.subr.mxu0 0.0
  %3552 = vmatpush2.msra.mxu0 0.0
  %3553 = vmatprep.subr.mxu0 0.0
  %3554 = vmatpush2.msra.mxu0 0.0
  %3555 = vmatprep.subr.mxu0 0.0
  %3556 = vmatpush2.msra.mxu0 0.0
  %3557 = vmatprep.subr.mxu0 0.0
  %3558 = vmatpush2.msra.mxu0 0.0
  %3559 = vmatprep.subr.mxu0 0.0
  %3560 = vmatpush2.msra.mxu0 0.0
  %3561 = vmatprep.subr.mxu0 0.0
  %3562 = vmatpush2.msra.mxu0 0.0
  %3563 = vmatprep.subr.mxu0 0.0
  %3564 = vmatpush2.msra.mxu0 0.0
  %3565 = vmatprep.subr.mxu0 0.0
  %3566 = vmatpush2.msra.mxu0 0.0
  %3567 = vmatprep.subr.mxu0 0.0
  %3568 = vmatpush2.msra.mxu0 0.0
  %3569 = vmatprep.subr.mxu0 0.0
  %3570 = vmatpush2.msra.mxu0 0.0
  %3571 = vmatprep.subr.mxu0 0.0
  %3572 = vmatpush2.msra.mxu0 0.0
  %3573 = vmatprep.subr.mxu0 0.0
  %3574 = vmatpush2.msra.mxu0 0.0
  %3575 = vmatprep.subr.mxu0 0.0
  %3576 = vmatpush2.msra.mxu0 0.0
  %3577 = vmatprep.subr.mxu0 0.0
  %3578 = vmatpush2.msra.mxu0 0.0
  %3579 = vmatprep.mubr.f32.mxu0 0.0
  %3580 = vmatmul.mubr.f32.gmra.mxu0 %v3443
  %v3581 = vpop.f32.mrf.mxu0
  %v3582 = vadd.f32 %v627, %v3581
  %v3583 = vpop.f32.mrf.mxu0
  %v3584 = vadd.f32 %v631, %v3583
  %3585 = vdwg.mxu0
  %v3586 = vadd.f32 %v3096, %v3443
  %s3587 = smul.u32 6, 4
  %s3588 = smul.addr %s3587, 8
  %s3589 = scalar_lea.vmem [#allocation2], %s3588
  %v3590 = vld [vmem:[%s3589] sm:$0xff]
  %v3591 = vld [vmem:[%s3589 + $0x8] sm:$0xff]
  %v3592 = vld [vmem:[%s3589 + $0x10] sm:$0xff]
  %v3593 = vld [vmem:[%s3589 + $0x18] sm:$0xff]
  %v3594 = vadd.f32 %v3590, %v3341
  %v3595 = vadd.f32 %v3591, %v3343
  %v3596 = vadd.f32 %v3592, %v3412
  %v3597 = vadd.f32 %v3593, %v3414
  %v3598 = vxor.u32 %v3594, 2147483648
  %v3599 = vmul.f32 %v3598, 1.442695
  %v3600 = vpow.pop %v3599
  %v3601 = vadd.f32 %v3600, 1.0
  %v3602 = vrcp.pop %v3601
  %v3603 = vmul.f32 1.0, %v3602
  %v3604 = vxor.u32 %v3595, 2147483648
  %v3605 = vmul.f32 %v3604, 1.442695
  %v3606 = vpow.pop %v3605
  %v3607 = vadd.f32 %v3606, 1.0
  %v3608 = vrcp.pop %v3607
  %v3609 = vmul.f32 1.0, %v3608
  %v3610 = vtanh.pop %v3596
  %v3611 = vxor.u32 %v3597, 2147483648
  %v3612 = vmul.f32 %v3611, 1.442695
  %v3613 = vpow.pop %v3612
  %v3614 = vadd.f32 %v3613, 1.0
  %v3615 = vrcp.pop %v3614
  %v3616 = vmul.f32 1.0, %v3615
  %v3617 = vmul.f32 %v3609, %v3129
  %v3618 = vmul.f32 %v3603, %v3610
  %v3619 = vadd.f32 %v3617, %v3618
  %v3620 = vtanh.pop %v3619
  %v3621 = vmul.f32 %v3616, %v3620
  %3622 = vmatprep.subr.mxu0 %v543
  %3623 = vmatpush1.msra.mxu0 %v542
  %3624 = vmatprep.subr.mxu0 %v535
  %3625 = vmatpush1.msra.mxu0 %v534
  %3626 = vmatprep.subr.mxu0 %v527
  %3627 = vmatpush1.msra.mxu0 %v526
  %3628 = vmatprep.subr.mxu0 %v519
  %3629 = vmatpush1.msra.mxu0 %v518
  %3630 = vmatprep.subr.mxu0 %v511
  %3631 = vmatpush1.msra.mxu0 %v510
  %3632 = vmatprep.subr.mxu0 %v503
  %3633 = vmatpush1.msra.mxu0 %v502
  %3634 = vmatprep.subr.mxu0 %v495
  %3635 = vmatpush1.msra.mxu0 %v494
  %3636 = vmatprep.subr.mxu0 %v487
  %3637 = vmatpush1.msra.mxu0 %v486
  %3638 = vmatprep.subr.mxu0 %v479
  %3639 = vmatpush1.msra.mxu0 %v478
  %3640 = vmatprep.subr.mxu0 %v471
  %3641 = vmatpush1.msra.mxu0 %v470
  %3642 = vmatprep.subr.mxu0 %v463
  %3643 = vmatpush1.msra.mxu0 %v462
  %3644 = vmatprep.subr.mxu0 %v455
  %3645 = vmatpush1.msra.mxu0 %v454
  %3646 = vmatprep.subr.mxu0 %v447
  %3647 = vmatpush1.msra.mxu0 %v446
  %3648 = vmatprep.subr.mxu0 %v439
  %3649 = vmatpush1.msra.mxu0 %v438
  %3650 = vmatprep.subr.mxu0 %v431
  %3651 = vmatpush1.msra.mxu0 %v430
  %3652 = vmatprep.subr.mxu0 %v423
  %3653 = vmatpush1.msra.mxu0 %v422
  %3654 = vmatprep.subr.mxu0 0.0
  %3655 = vmatpush2.msra.mxu0 0.0
  %3656 = vmatprep.subr.mxu0 0.0
  %3657 = vmatpush2.msra.mxu0 0.0
  %3658 = vmatprep.subr.mxu0 0.0
  %3659 = vmatpush2.msra.mxu0 0.0
  %3660 = vmatprep.subr.mxu0 0.0
  %3661 = vmatpush2.msra.mxu0 0.0
  %3662 = vmatprep.subr.mxu0 0.0
  %3663 = vmatpush2.msra.mxu0 0.0
  %3664 = vmatprep.subr.mxu0 0.0
  %3665 = vmatpush2.msra.mxu0 0.0
  %3666 = vmatprep.subr.mxu0 0.0
  %3667 = vmatpush2.msra.mxu0 0.0
  %3668 = vmatprep.subr.mxu0 0.0
  %3669 = vmatpush2.msra.mxu0 0.0
  %3670 = vmatprep.subr.mxu0 0.0
  %3671 = vmatpush2.msra.mxu0 0.0
  %3672 = vmatprep.subr.mxu0 0.0
  %3673 = vmatpush2.msra.mxu0 0.0
  %3674 = vmatprep.subr.mxu0 0.0
  %3675 = vmatpush2.msra.mxu0 0.0
  %3676 = vmatprep.subr.mxu0 0.0
  %3677 = vmatpush2.msra.mxu0 0.0
  %3678 = vmatprep.subr.mxu0 0.0
  %3679 = vmatpush2.msra.mxu0 0.0
  %3680 = vmatprep.subr.mxu0 0.0
  %3681 = vmatpush2.msra.mxu0 0.0
  %3682 = vmatprep.subr.mxu0 0.0
  %3683 = vmatpush2.msra.mxu0 0.0
  %3684 = vmatprep.subr.mxu0 0.0
  %3685 = vmatpush2.msra.mxu0 0.0
  %3686 = vmatprep.mubr.f32.mxu0 0.0
  %3687 = vmatmul.mubr.f32.gmra.mxu0 %v3621
  %v3688 = vpop.f32.mrf.mxu0
  %v3689 = vadd.f32 0.0, %v3688
  %v3690 = vpop.f32.mrf.mxu0
  %v3691 = vadd.f32 0.0, %v3690
  %3692 = vdwg.mxu0
  %3693 = vmatprep.subr.mxu0 %v545
  %3694 = vmatpush1.msra.mxu0 %v544
  %3695 = vmatprep.subr.mxu0 %v537
  %3696 = vmatpush1.msra.mxu0 %v536
  %3697 = vmatprep.subr.mxu0 %v529
  %3698 = vmatpush1.msra.mxu0 %v528
  %3699 = vmatprep.subr.mxu0 %v521
  %3700 = vmatpush1.msra.mxu0 %v520
  %3701 = vmatprep.subr.mxu0 %v513
  %3702 = vmatpush1.msra.mxu0 %v512
  %3703 = vmatprep.subr.mxu0 %v505
  %3704 = vmatpush1.msra.mxu0 %v504
  %3705 = vmatprep.subr.mxu0 %v497
  %3706 = vmatpush1.msra.mxu0 %v496
  %3707 = vmatprep.subr.mxu0 %v489
  %3708 = vmatpush1.msra.mxu0 %v488
  %3709 = vmatprep.subr.mxu0 %v481
  %3710 = vmatpush1.msra.mxu0 %v480
  %3711 = vmatprep.subr.mxu0 %v473
  %3712 = vmatpush1.msra.mxu0 %v472
  %3713 = vmatprep.subr.mxu0 %v465
  %3714 = vmatpush1.msra.mxu0 %v464
  %3715 = vmatprep.subr.mxu0 %v457
  %3716 = vmatpush1.msra.mxu0 %v456
  %3717 = vmatprep.subr.mxu0 %v449
  %3718 = vmatpush1.msra.mxu0 %v448
  %3719 = vmatprep.subr.mxu0 %v441
  %3720 = vmatpush1.msra.mxu0 %v440
  %3721 = vmatprep.subr.mxu0 %v433
  %3722 = vmatpush1.msra.mxu0 %v432
  %3723 = vmatprep.subr.mxu0 %v425
  %3724 = vmatpush1.msra.mxu0 %v424
  %3725 = vmatprep.subr.mxu0 0.0
  %3726 = vmatpush2.msra.mxu0 0.0
  %3727 = vmatprep.subr.mxu0 0.0
  %3728 = vmatpush2.msra.mxu0 0.0
  %3729 = vmatprep.subr.mxu0 0.0
  %3730 = vmatpush2.msra.mxu0 0.0
  %3731 = vmatprep.subr.mxu0 0.0
  %3732 = vmatpush2.msra.mxu0 0.0
  %3733 = vmatprep.subr.mxu0 0.0
  %3734 = vmatpush2.msra.mxu0 0.0
  %3735 = vmatprep.subr.mxu0 0.0
  %3736 = vmatpush2.msra.mxu0 0.0
  %3737 = vmatprep.subr.mxu0 0.0
  %3738 = vmatpush2.msra.mxu0 0.0
  %3739 = vmatprep.subr.mxu0 0.0
  %3740 = vmatpush2.msra.mxu0 0.0
  %3741 = vmatprep.subr.mxu0 0.0
  %3742 = vmatpush2.msra.mxu0 0.0
  %3743 = vmatprep.subr.mxu0 0.0
  %3744 = vmatpush2.msra.mxu0 0.0
  %3745 = vmatprep.subr.mxu0 0.0
  %3746 = vmatpush2.msra.mxu0 0.0
  %3747 = vmatprep.subr.mxu0 0.0
  %3748 = vmatpush2.msra.mxu0 0.0
  %3749 = vmatprep.subr.mxu0 0.0
  %3750 = vmatpush2.msra.mxu0 0.0
  %3751 = vmatprep.subr.mxu0 0.0
  %3752 = vmatpush2.msra.mxu0 0.0
  %3753 = vmatprep.subr.mxu0 0.0
  %3754 = vmatpush2.msra.mxu0 0.0
  %3755 = vmatprep.subr.mxu0 0.0
  %3756 = vmatpush2.msra.mxu0 0.0
  %3757 = vmatprep.mubr.f32.mxu0 0.0
  %3758 = vmatmul.mubr.f32.gmra.mxu0 %v3621
  %v3759 = vpop.f32.mrf.mxu0
  %v3760 = vadd.f32 0.0, %v3759
  %v3761 = vpop.f32.mrf.mxu0
  %v3762 = vadd.f32 0.0, %v3761
  %3763 = vdwg.mxu0
  %3764 = vmatprep.subr.mxu0 %v547
  %3765 = vmatpush1.msra.mxu0 %v546
  %3766 = vmatprep.subr.mxu0 %v539
  %3767 = vmatpush1.msra.mxu0 %v538
  %3768 = vmatprep.subr.mxu0 %v531
  %3769 = vmatpush1.msra.mxu0 %v530
  %3770 = vmatprep.subr.mxu0 %v523
  %3771 = vmatpush1.msra.mxu0 %v522
  %3772 = vmatprep.subr.mxu0 %v515
  %3773 = vmatpush1.msra.mxu0 %v514
  %3774 = vmatprep.subr.mxu0 %v507
  %3775 = vmatpush1.msra.mxu0 %v506
  %3776 = vmatprep.subr.mxu0 %v499
  %3777 = vmatpush1.msra.mxu0 %v498
  %3778 = vmatprep.subr.mxu0 %v491
  %3779 = vmatpush1.msra.mxu0 %v490
  %3780 = vmatprep.subr.mxu0 %v483
  %3781 = vmatpush1.msra.mxu0 %v482
  %3782 = vmatprep.subr.mxu0 %v475
  %3783 = vmatpush1.msra.mxu0 %v474
  %3784 = vmatprep.subr.mxu0 %v467
  %3785 = vmatpush1.msra.mxu0 %v466
  %3786 = vmatprep.subr.mxu0 %v459
  %3787 = vmatpush1.msra.mxu0 %v458
  %3788 = vmatprep.subr.mxu0 %v451
  %3789 = vmatpush1.msra.mxu0 %v450
  %3790 = vmatprep.subr.mxu0 %v443
  %3791 = vmatpush1.msra.mxu0 %v442
  %3792 = vmatprep.subr.mxu0 %v435
  %3793 = vmatpush1.msra.mxu0 %v434
  %3794 = vmatprep.subr.mxu0 %v427
  %3795 = vmatpush1.msra.mxu0 %v426
  %3796 = vmatprep.subr.mxu0 0.0
  %3797 = vmatpush2.msra.mxu0 0.0
  %3798 = vmatprep.subr.mxu0 0.0
  %3799 = vmatpush2.msra.mxu0 0.0
  %3800 = vmatprep.subr.mxu0 0.0
  %3801 = vmatpush2.msra.mxu0 0.0
  %3802 = vmatprep.subr.mxu0 0.0
  %3803 = vmatpush2.msra.mxu0 0.0
  %3804 = vmatprep.subr.mxu0 0.0
  %3805 = vmatpush2.msra.mxu0 0.0
  %3806 = vmatprep.subr.mxu0 0.0
  %3807 = vmatpush2.msra.mxu0 0.0
  %3808 = vmatprep.subr.mxu0 0.0
  %3809 = vmatpush2.msra.mxu0 0.0
  %3810 = vmatprep.subr.mxu0 0.0
  %3811 = vmatpush2.msra.mxu0 0.0
  %3812 = vmatprep.subr.mxu0 0.0
  %3813 = vmatpush2.msra.mxu0 0.0
  %3814 = vmatprep.subr.mxu0 0.0
  %3815 = vmatpush2.msra.mxu0 0.0
  %3816 = vmatprep.subr.mxu0 0.0
  %3817 = vmatpush2.msra.mxu0 0.0
  %3818 = vmatprep.subr.mxu0 0.0
  %3819 = vmatpush2.msra.mxu0 0.0
  %3820 = vmatprep.subr.mxu0 0.0
  %3821 = vmatpush2.msra.mxu0 0.0
  %3822 = vmatprep.subr.mxu0 0.0
  %3823 = vmatpush2.msra.mxu0 0.0
  %3824 = vmatprep.subr.mxu0 0.0
  %3825 = vmatpush2.msra.mxu0 0.0
  %3826 = vmatprep.subr.mxu0 0.0
  %3827 = vmatpush2.msra.mxu0 0.0
  %3828 = vmatprep.mubr.f32.mxu0 0.0
  %3829 = vmatmul.mubr.f32.gmra.mxu0 %v3621
  %v3830 = vpop.f32.mrf.mxu0
  %v3831 = vadd.f32 0.0, %v3830
  %v3832 = vpop.f32.mrf.mxu0
  %v3833 = vadd.f32 0.0, %v3832
  %3834 = vdwg.mxu0
  %3835 = vmatprep.subr.mxu0 %v549
  %3836 = vmatpush1.msra.mxu0 %v548
  %3837 = vmatprep.subr.mxu0 %v541
  %3838 = vmatpush1.msra.mxu0 %v540
  %3839 = vmatprep.subr.mxu0 %v533
  %3840 = vmatpush1.msra.mxu0 %v532
  %3841 = vmatprep.subr.mxu0 %v525
  %3842 = vmatpush1.msra.mxu0 %v524
  %3843 = vmatprep.subr.mxu0 %v517
  %3844 = vmatpush1.msra.mxu0 %v516
  %3845 = vmatprep.subr.mxu0 %v509
  %3846 = vmatpush1.msra.mxu0 %v508
  %3847 = vmatprep.subr.mxu0 %v501
  %3848 = vmatpush1.msra.mxu0 %v500
  %3849 = vmatprep.subr.mxu0 %v493
  %3850 = vmatpush1.msra.mxu0 %v492
  %3851 = vmatprep.subr.mxu0 %v485
  %3852 = vmatpush1.msra.mxu0 %v484
  %3853 = vmatprep.subr.mxu0 %v477
  %3854 = vmatpush1.msra.mxu0 %v476
  %3855 = vmatprep.subr.mxu0 %v469
  %3856 = vmatpush1.msra.mxu0 %v468
  %3857 = vmatprep.subr.mxu0 %v461
  %3858 = vmatpush1.msra.mxu0 %v460
  %3859 = vmatprep.subr.mxu0 %v453
  %3860 = vmatpush1.msra.mxu0 %v452
  %3861 = vmatprep.subr.mxu0 %v445
  %3862 = vmatpush1.msra.mxu0 %v444
  %3863 = vmatprep.subr.mxu0 %v437
  %3864 = vmatpush1.msra.mxu0 %v436
  %3865 = vmatprep.subr.mxu0 %v429
  %3866 = vmatpush1.msra.mxu0 %v428
  %3867 = vmatprep.subr.mxu0 0.0
  %3868 = vmatpush2.msra.mxu0 0.0
  %3869 = vmatprep.subr.mxu0 0.0
  %3870 = vmatpush2.msra.mxu0 0.0
  %3871 = vmatprep.subr.mxu0 0.0
  %3872 = vmatpush2.msra.mxu0 0.0
  %3873 = vmatprep.subr.mxu0 0.0
  %3874 = vmatpush2.msra.mxu0 0.0
  %3875 = vmatprep.subr.mxu0 0.0
  %3876 = vmatpush2.msra.mxu0 0.0
  %3877 = vmatprep.subr.mxu0 0.0
  %3878 = vmatpush2.msra.mxu0 0.0
  %3879 = vmatprep.subr.mxu0 0.0
  %3880 = vmatpush2.msra.mxu0 0.0
  %3881 = vmatprep.subr.mxu0 0.0
  %3882 = vmatpush2.msra.mxu0 0.0
  %3883 = vmatprep.subr.mxu0 0.0
  %3884 = vmatpush2.msra.mxu0 0.0
  %3885 = vmatprep.subr.mxu0 0.0
  %3886 = vmatpush2.msra.mxu0 0.0
  %3887 = vmatprep.subr.mxu0 0.0
  %3888 = vmatpush2.msra.mxu0 0.0
  %3889 = vmatprep.subr.mxu0 0.0
  %3890 = vmatpush2.msra.mxu0 0.0
  %3891 = vmatprep.subr.mxu0 0.0
  %3892 = vmatpush2.msra.mxu0 0.0
  %3893 = vmatprep.subr.mxu0 0.0
  %3894 = vmatpush2.msra.mxu0 0.0
  %3895 = vmatprep.subr.mxu0 0.0
  %3896 = vmatpush2.msra.mxu0 0.0
  %3897 = vmatprep.subr.mxu0 0.0
  %3898 = vmatpush2.msra.mxu0 0.0
  %3899 = vmatprep.mubr.f32.mxu0 0.0
  %3900 = vmatmul.mubr.f32.gmra.mxu0 %v3621
  %v3901 = vpop.f32.mrf.mxu0
  %v3902 = vadd.f32 0.0, %v3901
  %v3903 = vpop.f32.mrf.mxu0
  %v3904 = vadd.f32 0.0, %v3903
  %3905 = vdwg.mxu0
  %v3906 = vadd.f32 %v3689, %v3511
  %v3907 = vadd.f32 %v3691, %v3513
  %v3908 = vadd.f32 %v3760, %v3582
  %v3909 = vadd.f32 %v3762, %v3584
  %v3910 = vxor.u32 %v3906, 2147483648
  %v3911 = vmul.f32 %v3910, 1.442695
  %v3912 = vpow.pop %v3911
  %v3913 = vadd.f32 %v3912, 1.0
  %v3914 = vrcp.pop %v3913
  %v3915 = vmul.f32 1.0, %v3914
  %v3916 = vxor.u32 %v3907, 2147483648
  %v3917 = vmul.f32 %v3916, 1.442695
  %v3918 = vpow.pop %v3917
  %v3919 = vadd.f32 %v3918, 1.0
  %v3920 = vrcp.pop %v3919
  %v3921 = vmul.f32 1.0, %v3920
  %v3922 = vtanh.pop %v3908
  %v3923 = vxor.u32 %v3909, 2147483648
  %v3924 = vmul.f32 %v3923, 1.442695
  %v3925 = vpow.pop %v3924
  %v3926 = vadd.f32 %v3925, 1.0
  %v3927 = vrcp.pop %v3926
  %v3928 = vmul.f32 1.0, %v3927
  %v3929 = vmul.f32 %v3921, %v3441
  %v3930 = vmul.f32 %v3915, %v3922
  %v3931 = vadd.f32 %v3929, %v3930
  %v3932 = vtanh.pop %v3931
  %v3933 = vmul.f32 %v3928, %v3932
  %3934 = vmatprep.subr.mxu0 %v611
  %3935 = vmatpush1.msra.mxu0 %v610
  %3936 = vmatprep.subr.mxu0 %v607
  %3937 = vmatpush1.msra.mxu0 %v606
  %3938 = vmatprep.subr.mxu0 %v603
  %3939 = vmatpush1.msra.mxu0 %v602
  %3940 = vmatprep.subr.mxu0 %v599
  %3941 = vmatpush1.msra.mxu0 %v598
  %3942 = vmatprep.subr.mxu0 %v595
  %3943 = vmatpush1.msra.mxu0 %v594
  %3944 = vmatprep.subr.mxu0 %v591
  %3945 = vmatpush1.msra.mxu0 %v590
  %3946 = vmatprep.subr.mxu0 %v587
  %3947 = vmatpush1.msra.mxu0 %v586
  %3948 = vmatprep.subr.mxu0 %v583
  %3949 = vmatpush1.msra.mxu0 %v582
  %3950 = vmatprep.subr.mxu0 %v579
  %3951 = vmatpush1.msra.mxu0 %v578
  %3952 = vmatprep.subr.mxu0 %v575
  %3953 = vmatpush1.msra.mxu0 %v574
  %3954 = vmatprep.subr.mxu0 %v571
  %3955 = vmatpush1.msra.mxu0 %v570
  %3956 = vmatprep.subr.mxu0 %v567
  %3957 = vmatpush1.msra.mxu0 %v566
  %3958 = vmatprep.subr.mxu0 %v563
  %3959 = vmatpush1.msra.mxu0 %v562
  %3960 = vmatprep.subr.mxu0 %v559
  %3961 = vmatpush1.msra.mxu0 %v558
  %3962 = vmatprep.subr.mxu0 %v555
  %3963 = vmatpush1.msra.mxu0 %v554
  %3964 = vmatprep.subr.mxu0 %v551
  %3965 = vmatpush1.msra.mxu0 %v550
  %3966 = vmatprep.subr.mxu0 0.0
  %3967 = vmatpush2.msra.mxu0 0.0
  %3968 = vmatprep.subr.mxu0 0.0
  %3969 = vmatpush2.msra.mxu0 0.0
  %3970 = vmatprep.subr.mxu0 0.0
  %3971 = vmatpush2.msra.mxu0 0.0
  %3972 = vmatprep.subr.mxu0 0.0
  %3973 = vmatpush2.msra.mxu0 0.0
  %3974 = vmatprep.subr.mxu0 0.0
  %3975 = vmatpush2.msra.mxu0 0.0
  %3976 = vmatprep.subr.mxu0 0.0
  %3977 = vmatpush2.msra.mxu0 0.0
  %3978 = vmatprep.subr.mxu0 0.0
  %3979 = vmatpush2.msra.mxu0 0.0
  %3980 = vmatprep.subr.mxu0 0.0
  %3981 = vmatpush2.msra.mxu0 0.0
  %3982 = vmatprep.subr.mxu0 0.0
  %3983 = vmatpush2.msra.mxu0 0.0
  %3984 = vmatprep.subr.mxu0 0.0
  %3985 = vmatpush2.msra.mxu0 0.0
  %3986 = vmatprep.subr.mxu0 0.0
  %3987 = vmatpush2.msra.mxu0 0.0
  %3988 = vmatprep.subr.mxu0 0.0
  %3989 = vmatpush2.msra.mxu0 0.0
  %3990 = vmatprep.subr.mxu0 0.0
  %3991 = vmatpush2.msra.mxu0 0.0
  %3992 = vmatprep.subr.mxu0 0.0
  %3993 = vmatpush2.msra.mxu0 0.0
  %3994 = vmatprep.subr.mxu0 0.0
  %3995 = vmatpush2.msra.mxu0 0.0
  %3996 = vmatprep.subr.mxu0 0.0
  %3997 = vmatpush2.msra.mxu0 0.0
  %3998 = vmatprep.mubr.f32.mxu0 0.0
  %3999 = vmatmul.mubr.f32.gmra.mxu0 %v3933
  %v4000 = vpop.f32.mrf.mxu0
  %v4001 = vadd.f32 %v619, %v4000
  %v4002 = vpop.f32.mrf.mxu0
  %v4003 = vadd.f32 %v623, %v4002
  %4004 = vdwg.mxu0
  %4005 = vmatprep.subr.mxu0 %v613
  %4006 = vmatpush1.msra.mxu0 %v612
  %4007 = vmatprep.subr.mxu0 %v609
  %4008 = vmatpush1.msra.mxu0 %v608
  %4009 = vmatprep.subr.mxu0 %v605
  %4010 = vmatpush1.msra.mxu0 %v604
  %4011 = vmatprep.subr.mxu0 %v601
  %4012 = vmatpush1.msra.mxu0 %v600
  %4013 = vmatprep.subr.mxu0 %v597
  %4014 = vmatpush1.msra.mxu0 %v596
  %4015 = vmatprep.subr.mxu0 %v593
  %4016 = vmatpush1.msra.mxu0 %v592
  %4017 = vmatprep.subr.mxu0 %v589
  %4018 = vmatpush1.msra.mxu0 %v588
  %4019 = vmatprep.subr.mxu0 %v585
  %4020 = vmatpush1.msra.mxu0 %v584
  %4021 = vmatprep.subr.mxu0 %v581
  %4022 = vmatpush1.msra.mxu0 %v580
  %4023 = vmatprep.subr.mxu0 %v577
  %4024 = vmatpush1.msra.mxu0 %v576
  %4025 = vmatprep.subr.mxu0 %v573
  %4026 = vmatpush1.msra.mxu0 %v572
  %4027 = vmatprep.subr.mxu0 %v569
  %4028 = vmatpush1.msra.mxu0 %v568
  %4029 = vmatprep.subr.mxu0 %v565
  %4030 = vmatpush1.msra.mxu0 %v564
  %4031 = vmatprep.subr.mxu0 %v561
  %4032 = vmatpush1.msra.mxu0 %v560
  %4033 = vmatprep.subr.mxu0 %v557
  %4034 = vmatpush1.msra.mxu0 %v556
  %4035 = vmatprep.subr.mxu0 %v553
  %4036 = vmatpush1.msra.mxu0 %v552
  %4037 = vmatprep.subr.mxu0 0.0
  %4038 = vmatpush2.msra.mxu0 0.0
  %4039 = vmatprep.subr.mxu0 0.0
  %4040 = vmatpush2.msra.mxu0 0.0
  %4041 = vmatprep.subr.mxu0 0.0
  %4042 = vmatpush2.msra.mxu0 0.0
  %4043 = vmatprep.subr.mxu0 0.0
  %4044 = vmatpush2.msra.mxu0 0.0
  %4045 = vmatprep.subr.mxu0 0.0
  %4046 = vmatpush2.msra.mxu0 0.0
  %4047 = vmatprep.subr.mxu0 0.0
  %4048 = vmatpush2.msra.mxu0 0.0
  %4049 = vmatprep.subr.mxu0 0.0
  %4050 = vmatpush2.msra.mxu0 0.0
  %4051 = vmatprep.subr.mxu0 0.0
  %4052 = vmatpush2.msra.mxu0 0.0
  %4053 = vmatprep.subr.mxu0 0.0
  %4054 = vmatpush2.msra.mxu0 0.0
  %4055 = vmatprep.subr.mxu0 0.0
  %4056 = vmatpush2.msra.mxu0 0.0
  %4057 = vmatprep.subr.mxu0 0.0
  %4058 = vmatpush2.msra.mxu0 0.0
  %4059 = vmatprep.subr.mxu0 0.0
  %4060 = vmatpush2.msra.mxu0 0.0
  %4061 = vmatprep.subr.mxu0 0.0
  %4062 = vmatpush2.msra.mxu0 0.0
  %4063 = vmatprep.subr.mxu0 0.0
  %4064 = vmatpush2.msra.mxu0 0.0
  %4065 = vmatprep.subr.mxu0 0.0
  %4066 = vmatpush2.msra.mxu0 0.0
  %4067 = vmatprep.subr.mxu0 0.0
  %4068 = vmatpush2.msra.mxu0 0.0
  %4069 = vmatprep.mubr.f32.mxu0 0.0
  %4070 = vmatmul.mubr.f32.gmra.mxu0 %v3933
  %v4071 = vpop.f32.mrf.mxu0
  %v4072 = vadd.f32 %v627, %v4071
  %v4073 = vpop.f32.mrf.mxu0
  %v4074 = vadd.f32 %v631, %v4073
  %4075 = vdwg.mxu0
  %v4076 = vadd.f32 %v3586, %v3933
  %s4077 = smul.u32 7, 4
  %s4078 = smul.addr %s4077, 8
  %s4079 = scalar_lea.vmem [#allocation2], %s4078
  %v4080 = vld [vmem:[%s4079] sm:$0xff]
  %v4081 = vld [vmem:[%s4079 + $0x8] sm:$0xff]
  %v4082 = vld [vmem:[%s4079 + $0x10] sm:$0xff]
  %v4083 = vld [vmem:[%s4079 + $0x18] sm:$0xff]
  %v4084 = vadd.f32 %v4080, %v3831
  %v4085 = vadd.f32 %v4081, %v3833
  %v4086 = vadd.f32 %v4082, %v3902
  %v4087 = vadd.f32 %v4083, %v3904
  %v4088 = vxor.u32 %v4084, 2147483648
  %v4089 = vmul.f32 %v4088, 1.442695
  %v4090 = vpow.pop %v4089
  %v4091 = vadd.f32 %v4090, 1.0
  %v4092 = vrcp.pop %v4091
  %v4093 = vmul.f32 1.0, %v4092
  %v4094 = vxor.u32 %v4085, 2147483648
  %v4095 = vmul.f32 %v4094, 1.442695
  %v4096 = vpow.pop %v4095
  %v4097 = vadd.f32 %v4096, 1.0
  %v4098 = vrcp.pop %v4097
  %v4099 = vmul.f32 1.0, %v4098
  %v4100 = vtanh.pop %v4086
  %v4101 = vxor.u32 %v4087, 2147483648
  %v4102 = vmul.f32 %v4101, 1.442695
  %v4103 = vpow.pop %v4102
  %v4104 = vadd.f32 %v4103, 1.0
  %v4105 = vrcp.pop %v4104
  %v4106 = vmul.f32 1.0, %v4105
  %v4107 = vmul.f32 %v4099, %v3619
  %v4108 = vmul.f32 %v4093, %v4100
  %v4109 = vadd.f32 %v4107, %v4108
  %v4110 = vtanh.pop %v4109
  %v4111 = vmul.f32 %v4106, %v4110
  %4112 = vmatprep.subr.mxu0 %v543
  %4113 = vmatpush1.msra.mxu0 %v542
  %4114 = vmatprep.subr.mxu0 %v535
  %4115 = vmatpush1.msra.mxu0 %v534
  %4116 = vmatprep.subr.mxu0 %v527
  %4117 = vmatpush1.msra.mxu0 %v526
  %4118 = vmatprep.subr.mxu0 %v519
  %4119 = vmatpush1.msra.mxu0 %v518
  %4120 = vmatprep.subr.mxu0 %v511
  %4121 = vmatpush1.msra.mxu0 %v510
  %4122 = vmatprep.subr.mxu0 %v503
  %4123 = vmatpush1.msra.mxu0 %v502
  %4124 = vmatprep.subr.mxu0 %v495
  %4125 = vmatpush1.msra.mxu0 %v494
  %4126 = vmatprep.subr.mxu0 %v487
  %4127 = vmatpush1.msra.mxu0 %v486
  %4128 = vmatprep.subr.mxu0 %v479
  %4129 = vmatpush1.msra.mxu0 %v478
  %4130 = vmatprep.subr.mxu0 %v471
  %4131 = vmatpush1.msra.mxu0 %v470
  %4132 = vmatprep.subr.mxu0 %v463
  %4133 = vmatpush1.msra.mxu0 %v462
  %4134 = vmatprep.subr.mxu0 %v455
  %4135 = vmatpush1.msra.mxu0 %v454
  %4136 = vmatprep.subr.mxu0 %v447
  %4137 = vmatpush1.msra.mxu0 %v446
  %4138 = vmatprep.subr.mxu0 %v439
  %4139 = vmatpush1.msra.mxu0 %v438
  %4140 = vmatprep.subr.mxu0 %v431
  %4141 = vmatpush1.msra.mxu0 %v430
  %4142 = vmatprep.subr.mxu0 %v423
  %4143 = vmatpush1.msra.mxu0 %v422
  %4144 = vmatprep.subr.mxu0 0.0
  %4145 = vmatpush2.msra.mxu0 0.0
  %4146 = vmatprep.subr.mxu0 0.0
  %4147 = vmatpush2.msra.mxu0 0.0
  %4148 = vmatprep.subr.mxu0 0.0
  %4149 = vmatpush2.msra.mxu0 0.0
  %4150 = vmatprep.subr.mxu0 0.0
  %4151 = vmatpush2.msra.mxu0 0.0
  %4152 = vmatprep.subr.mxu0 0.0
  %4153 = vmatpush2.msra.mxu0 0.0
  %4154 = vmatprep.subr.mxu0 0.0
  %4155 = vmatpush2.msra.mxu0 0.0
  %4156 = vmatprep.subr.mxu0 0.0
  %4157 = vmatpush2.msra.mxu0 0.0
  %4158 = vmatprep.subr.mxu0 0.0
  %4159 = vmatpush2.msra.mxu0 0.0
  %4160 = vmatprep.subr.mxu0 0.0
  %4161 = vmatpush2.msra.mxu0 0.0
  %4162 = vmatprep.subr.mxu0 0.0
  %4163 = vmatpush2.msra.mxu0 0.0
  %4164 = vmatprep.subr.mxu0 0.0
  %4165 = vmatpush2.msra.mxu0 0.0
  %4166 = vmatprep.subr.mxu0 0.0
  %4167 = vmatpush2.msra.mxu0 0.0
  %4168 = vmatprep.subr.mxu0 0.0
  %4169 = vmatpush2.msra.mxu0 0.0
  %4170 = vmatprep.subr.mxu0 0.0
  %4171 = vmatpush2.msra.mxu0 0.0
  %4172 = vmatprep.subr.mxu0 0.0
  %4173 = vmatpush2.msra.mxu0 0.0
  %4174 = vmatprep.subr.mxu0 0.0
  %4175 = vmatpush2.msra.mxu0 0.0
  %4176 = vmatprep.mubr.f32.mxu0 0.0
  %4177 = vmatmul.mubr.f32.gmra.mxu0 %v4111
  %v4178 = vpop.f32.mrf.mxu0
  %v4179 = vadd.f32 0.0, %v4178
  %v4180 = vpop.f32.mrf.mxu0
  %v4181 = vadd.f32 0.0, %v4180
  %4182 = vdwg.mxu0
  %4183 = vmatprep.subr.mxu0 %v545
  %4184 = vmatpush1.msra.mxu0 %v544
  %4185 = vmatprep.subr.mxu0 %v537
  %4186 = vmatpush1.msra.mxu0 %v536
  %4187 = vmatprep.subr.mxu0 %v529
  %4188 = vmatpush1.msra.mxu0 %v528
  %4189 = vmatprep.subr.mxu0 %v521
  %4190 = vmatpush1.msra.mxu0 %v520
  %4191 = vmatprep.subr.mxu0 %v513
  %4192 = vmatpush1.msra.mxu0 %v512
  %4193 = vmatprep.subr.mxu0 %v505
  %4194 = vmatpush1.msra.mxu0 %v504
  %4195 = vmatprep.subr.mxu0 %v497
  %4196 = vmatpush1.msra.mxu0 %v496
  %4197 = vmatprep.subr.mxu0 %v489
  %4198 = vmatpush1.msra.mxu0 %v488
  %4199 = vmatprep.subr.mxu0 %v481
  %4200 = vmatpush1.msra.mxu0 %v480
  %4201 = vmatprep.subr.mxu0 %v473
  %4202 = vmatpush1.msra.mxu0 %v472
  %4203 = vmatprep.subr.mxu0 %v465
  %4204 = vmatpush1.msra.mxu0 %v464
  %4205 = vmatprep.subr.mxu0 %v457
  %4206 = vmatpush1.msra.mxu0 %v456
  %4207 = vmatprep.subr.mxu0 %v449
  %4208 = vmatpush1.msra.mxu0 %v448
  %4209 = vmatprep.subr.mxu0 %v441
  %4210 = vmatpush1.msra.mxu0 %v440
  %4211 = vmatprep.subr.mxu0 %v433
  %4212 = vmatpush1.msra.mxu0 %v432
  %4213 = vmatprep.subr.mxu0 %v425
  %4214 = vmatpush1.msra.mxu0 %v424
  %4215 = vmatprep.subr.mxu0 0.0
  %4216 = vmatpush2.msra.mxu0 0.0
  %4217 = vmatprep.subr.mxu0 0.0
  %4218 = vmatpush2.msra.mxu0 0.0
  %4219 = vmatprep.subr.mxu0 0.0
  %4220 = vmatpush2.msra.mxu0 0.0
  %4221 = vmatprep.subr.mxu0 0.0
  %4222 = vmatpush2.msra.mxu0 0.0
  %4223 = vmatprep.subr.mxu0 0.0
  %4224 = vmatpush2.msra.mxu0 0.0
  %4225 = vmatprep.subr.mxu0 0.0
  %4226 = vmatpush2.msra.mxu0 0.0
  %4227 = vmatprep.subr.mxu0 0.0
  %4228 = vmatpush2.msra.mxu0 0.0
  %4229 = vmatprep.subr.mxu0 0.0
  %4230 = vmatpush2.msra.mxu0 0.0
  %4231 = vmatprep.subr.mxu0 0.0
  %4232 = vmatpush2.msra.mxu0 0.0
  %4233 = vmatprep.subr.mxu0 0.0
  %4234 = vmatpush2.msra.mxu0 0.0
  %4235 = vmatprep.subr.mxu0 0.0
  %4236 = vmatpush2.msra.mxu0 0.0
  %4237 = vmatprep.subr.mxu0 0.0
  %4238 = vmatpush2.msra.mxu0 0.0
  %4239 = vmatprep.subr.mxu0 0.0
  %4240 = vmatpush2.msra.mxu0 0.0
  %4241 = vmatprep.subr.mxu0 0.0
  %4242 = vmatpush2.msra.mxu0 0.0
  %4243 = vmatprep.subr.mxu0 0.0
  %4244 = vmatpush2.msra.mxu0 0.0
  %4245 = vmatprep.subr.mxu0 0.0
  %4246 = vmatpush2.msra.mxu0 0.0
  %4247 = vmatprep.mubr.f32.mxu0 0.0
  %4248 = vmatmul.mubr.f32.gmra.mxu0 %v4111
  %v4249 = vpop.f32.mrf.mxu0
  %v4250 = vadd.f32 0.0, %v4249
  %v4251 = vpop.f32.mrf.mxu0
  %v4252 = vadd.f32 0.0, %v4251
  %4253 = vdwg.mxu0
  %4254 = vmatprep.subr.mxu0 %v547
  %4255 = vmatpush1.msra.mxu0 %v546
  %4256 = vmatprep.subr.mxu0 %v539
  %4257 = vmatpush1.msra.mxu0 %v538
  %4258 = vmatprep.subr.mxu0 %v531
  %4259 = vmatpush1.msra.mxu0 %v530
  %4260 = vmatprep.subr.mxu0 %v523
  %4261 = vmatpush1.msra.mxu0 %v522
  %4262 = vmatprep.subr.mxu0 %v515
  %4263 = vmatpush1.msra.mxu0 %v514
  %4264 = vmatprep.subr.mxu0 %v507
  %4265 = vmatpush1.msra.mxu0 %v506
  %4266 = vmatprep.subr.mxu0 %v499
  %4267 = vmatpush1.msra.mxu0 %v498
  %4268 = vmatprep.subr.mxu0 %v491
  %4269 = vmatpush1.msra.mxu0 %v490
  %4270 = vmatprep.subr.mxu0 %v483
  %4271 = vmatpush1.msra.mxu0 %v482
  %4272 = vmatprep.subr.mxu0 %v475
  %4273 = vmatpush1.msra.mxu0 %v474
  %4274 = vmatprep.subr.mxu0 %v467
  %4275 = vmatpush1.msra.mxu0 %v466
  %4276 = vmatprep.subr.mxu0 %v459
  %4277 = vmatpush1.msra.mxu0 %v458
  %4278 = vmatprep.subr.mxu0 %v451
  %4279 = vmatpush1.msra.mxu0 %v450
  %4280 = vmatprep.subr.mxu0 %v443
  %4281 = vmatpush1.msra.mxu0 %v442
  %4282 = vmatprep.subr.mxu0 %v435
  %4283 = vmatpush1.msra.mxu0 %v434
  %4284 = vmatprep.subr.mxu0 %v427
  %4285 = vmatpush1.msra.mxu0 %v426
  %4286 = vmatprep.subr.mxu0 0.0
  %4287 = vmatpush2.msra.mxu0 0.0
  %4288 = vmatprep.subr.mxu0 0.0
  %4289 = vmatpush2.msra.mxu0 0.0
  %4290 = vmatprep.subr.mxu0 0.0
  %4291 = vmatpush2.msra.mxu0 0.0
  %4292 = vmatprep.subr.mxu0 0.0
  %4293 = vmatpush2.msra.mxu0 0.0
  %4294 = vmatprep.subr.mxu0 0.0
  %4295 = vmatpush2.msra.mxu0 0.0
  %4296 = vmatprep.subr.mxu0 0.0
  %4297 = vmatpush2.msra.mxu0 0.0
  %4298 = vmatprep.subr.mxu0 0.0
  %4299 = vmatpush2.msra.mxu0 0.0
  %4300 = vmatprep.subr.mxu0 0.0
  %4301 = vmatpush2.msra.mxu0 0.0
  %4302 = vmatprep.subr.mxu0 0.0
  %4303 = vmatpush2.msra.mxu0 0.0
  %4304 = vmatprep.subr.mxu0 0.0
  %4305 = vmatpush2.msra.mxu0 0.0
  %4306 = vmatprep.subr.mxu0 0.0
  %4307 = vmatpush2.msra.mxu0 0.0
  %4308 = vmatprep.subr.mxu0 0.0
  %4309 = vmatpush2.msra.mxu0 0.0
  %4310 = vmatprep.subr.mxu0 0.0
  %4311 = vmatpush2.msra.mxu0 0.0
  %4312 = vmatprep.subr.mxu0 0.0
  %4313 = vmatpush2.msra.mxu0 0.0
  %4314 = vmatprep.subr.mxu0 0.0
  %4315 = vmatpush2.msra.mxu0 0.0
  %4316 = vmatprep.subr.mxu0 0.0
  %4317 = vmatpush2.msra.mxu0 0.0
  %4318 = vmatprep.mubr.f32.mxu0 0.0
  %4319 = vmatmul.mubr.f32.gmra.mxu0 %v4111
  %v4320 = vpop.f32.mrf.mxu0
  %v4321 = vadd.f32 0.0, %v4320
  %v4322 = vpop.f32.mrf.mxu0
  %v4323 = vadd.f32 0.0, %v4322
  %4324 = vdwg.mxu0
  %4325 = vmatprep.subr.mxu0 %v549
  %4326 = vmatpush1.msra.mxu0 %v548
  %4327 = vmatprep.subr.mxu0 %v541
  %4328 = vmatpush1.msra.mxu0 %v540
  %4329 = vmatprep.subr.mxu0 %v533
  %4330 = vmatpush1.msra.mxu0 %v532
  %4331 = vmatprep.subr.mxu0 %v525
  %4332 = vmatpush1.msra.mxu0 %v524
  %4333 = vmatprep.subr.mxu0 %v517
  %4334 = vmatpush1.msra.mxu0 %v516
  %4335 = vmatprep.subr.mxu0 %v509
  %4336 = vmatpush1.msra.mxu0 %v508
  %4337 = vmatprep.subr.mxu0 %v501
  %4338 = vmatpush1.msra.mxu0 %v500
  %4339 = vmatprep.subr.mxu0 %v493
  %4340 = vmatpush1.msra.mxu0 %v492
  %4341 = vmatprep.subr.mxu0 %v485
  %4342 = vmatpush1.msra.mxu0 %v484
  %4343 = vmatprep.subr.mxu0 %v477
  %4344 = vmatpush1.msra.mxu0 %v476
  %4345 = vmatprep.subr.mxu0 %v469
  %4346 = vmatpush1.msra.mxu0 %v468
  %4347 = vmatprep.subr.mxu0 %v461
  %4348 = vmatpush1.msra.mxu0 %v460
  %4349 = vmatprep.subr.mxu0 %v453
  %4350 = vmatpush1.msra.mxu0 %v452
  %4351 = vmatprep.subr.mxu0 %v445
  %4352 = vmatpush1.msra.mxu0 %v444
  %4353 = vmatprep.subr.mxu0 %v437
  %4354 = vmatpush1.msra.mxu0 %v436
  %4355 = vmatprep.subr.mxu0 %v429
  %4356 = vmatpush1.msra.mxu0 %v428
  %4357 = vmatprep.subr.mxu0 0.0
  %4358 = vmatpush2.msra.mxu0 0.0
  %4359 = vmatprep.subr.mxu0 0.0
  %4360 = vmatpush2.msra.mxu0 0.0
  %4361 = vmatprep.subr.mxu0 0.0
  %4362 = vmatpush2.msra.mxu0 0.0
  %4363 = vmatprep.subr.mxu0 0.0
  %4364 = vmatpush2.msra.mxu0 0.0
  %4365 = vmatprep.subr.mxu0 0.0
  %4366 = vmatpush2.msra.mxu0 0.0
  %4367 = vmatprep.subr.mxu0 0.0
  %4368 = vmatpush2.msra.mxu0 0.0
  %4369 = vmatprep.subr.mxu0 0.0
  %4370 = vmatpush2.msra.mxu0 0.0
  %4371 = vmatprep.subr.mxu0 0.0
  %4372 = vmatpush2.msra.mxu0 0.0
  %4373 = vmatprep.subr.mxu0 0.0
  %4374 = vmatpush2.msra.mxu0 0.0
  %4375 = vmatprep.subr.mxu0 0.0
  %4376 = vmatpush2.msra.mxu0 0.0
  %4377 = vmatprep.subr.mxu0 0.0
  %4378 = vmatpush2.msra.mxu0 0.0
  %4379 = vmatprep.subr.mxu0 0.0
  %4380 = vmatpush2.msra.mxu0 0.0
  %4381 = vmatprep.subr.mxu0 0.0
  %4382 = vmatpush2.msra.mxu0 0.0
  %4383 = vmatprep.subr.mxu0 0.0
  %4384 = vmatpush2.msra.mxu0 0.0
  %4385 = vmatprep.subr.mxu0 0.0
  %4386 = vmatpush2.msra.mxu0 0.0
  %4387 = vmatprep.subr.mxu0 0.0
  %4388 = vmatpush2.msra.mxu0 0.0
  %4389 = vmatprep.mubr.f32.mxu0 0.0
  %4390 = vmatmul.mubr.f32.gmra.mxu0 %v4111
  %v4391 = vpop.f32.mrf.mxu0
  %v4392 = vadd.f32 0.0, %v4391
  %v4393 = vpop.f32.mrf.mxu0
  %v4394 = vadd.f32 0.0, %v4393
  %4395 = vdwg.mxu0
  %v4396 = vadd.f32 %v4179, %v4001
  %v4397 = vadd.f32 %v4181, %v4003
  %v4398 = vadd.f32 %v4250, %v4072
  %v4399 = vadd.f32 %v4252, %v4074
  %v4400 = vxor.u32 %v4396, 2147483648
  %v4401 = vmul.f32 %v4400, 1.442695
  %v4402 = vpow.pop %v4401
  %v4403 = vadd.f32 %v4402, 1.0
  %v4404 = vrcp.pop %v4403
  %v4405 = vmul.f32 1.0, %v4404
  %v4406 = vxor.u32 %v4397, 2147483648
  %v4407 = vmul.f32 %v4406, 1.442695
  %v4408 = vpow.pop %v4407
  %v4409 = vadd.f32 %v4408, 1.0
  %v4410 = vrcp.pop %v4409
  %v4411 = vmul.f32 1.0, %v4410
  %v4412 = vtanh.pop %v4398
  %v4413 = vxor.u32 %v4399, 2147483648
  %v4414 = vmul.f32 %v4413, 1.442695
  %v4415 = vpow.pop %v4414
  %v4416 = vadd.f32 %v4415, 1.0
  %v4417 = vrcp.pop %v4416
  %v4418 = vmul.f32 1.0, %v4417
  %v4419 = vmul.f32 %v4411, %v3931
  %v4420 = vmul.f32 %v4405, %v4412
  %v4421 = vadd.f32 %v4419, %v4420
  %v4422 = vtanh.pop %v4421
  %v4423 = vmul.f32 %v4418, %v4422
  %4424 = vmatprep.subr.mxu0 %v611
  %4425 = vmatpush1.msra.mxu0 %v610
  %4426 = vmatprep.subr.mxu0 %v607
  %4427 = vmatpush1.msra.mxu0 %v606
  %4428 = vmatprep.subr.mxu0 %v603
  %4429 = vmatpush1.msra.mxu0 %v602
  %4430 = vmatprep.subr.mxu0 %v599
  %4431 = vmatpush1.msra.mxu0 %v598
  %4432 = vmatprep.subr.mxu0 %v595
  %4433 = vmatpush1.msra.mxu0 %v594
  %4434 = vmatprep.subr.mxu0 %v591
  %4435 = vmatpush1.msra.mxu0 %v590
  %4436 = vmatprep.subr.mxu0 %v587
  %4437 = vmatpush1.msra.mxu0 %v586
  %4438 = vmatprep.subr.mxu0 %v583
  %4439 = vmatpush1.msra.mxu0 %v582
  %4440 = vmatprep.subr.mxu0 %v579
  %4441 = vmatpush1.msra.mxu0 %v578
  %4442 = vmatprep.subr.mxu0 %v575
  %4443 = vmatpush1.msra.mxu0 %v574
  %4444 = vmatprep.subr.mxu0 %v571
  %4445 = vmatpush1.msra.mxu0 %v570
  %4446 = vmatprep.subr.mxu0 %v567
  %4447 = vmatpush1.msra.mxu0 %v566
  %4448 = vmatprep.subr.mxu0 %v563
  %4449 = vmatpush1.msra.mxu0 %v562
  %4450 = vmatprep.subr.mxu0 %v559
  %4451 = vmatpush1.msra.mxu0 %v558
  %4452 = vmatprep.subr.mxu0 %v555
  %4453 = vmatpush1.msra.mxu0 %v554
  %4454 = vmatprep.subr.mxu0 %v551
  %4455 = vmatpush1.msra.mxu0 %v550
  %4456 = vmatprep.subr.mxu0 0.0
  %4457 = vmatpush2.msra.mxu0 0.0
  %4458 = vmatprep.subr.mxu0 0.0
  %4459 = vmatpush2.msra.mxu0 0.0
  %4460 = vmatprep.subr.mxu0 0.0
  %4461 = vmatpush2.msra.mxu0 0.0
  %4462 = vmatprep.subr.mxu0 0.0
  %4463 = vmatpush2.msra.mxu0 0.0
  %4464 = vmatprep.subr.mxu0 0.0
  %4465 = vmatpush2.msra.mxu0 0.0
  %4466 = vmatprep.subr.mxu0 0.0
  %4467 = vmatpush2.msra.mxu0 0.0
  %4468 = vmatprep.subr.mxu0 0.0
  %4469 = vmatpush2.msra.mxu0 0.0
  %4470 = vmatprep.subr.mxu0 0.0
  %4471 = vmatpush2.msra.mxu0 0.0
  %4472 = vmatprep.subr.mxu0 0.0
  %4473 = vmatpush2.msra.mxu0 0.0
  %4474 = vmatprep.subr.mxu0 0.0
  %4475 = vmatpush2.msra.mxu0 0.0
  %4476 = vmatprep.subr.mxu0 0.0
  %4477 = vmatpush2.msra.mxu0 0.0
  %4478 = vmatprep.subr.mxu0 0.0
  %4479 = vmatpush2.msra.mxu0 0.0
  %4480 = vmatprep.subr.mxu0 0.0
  %4481 = vmatpush2.msra.mxu0 0.0
  %4482 = vmatprep.subr.mxu0 0.0
  %4483 = vmatpush2.msra.mxu0 0.0
  %4484 = vmatprep.subr.mxu0 0.0
  %4485 = vmatpush2.msra.mxu0 0.0
  %4486 = vmatprep.subr.mxu0 0.0
  %4487 = vmatpush2.msra.mxu0 0.0
  %4488 = vmatprep.mubr.f32.mxu0 0.0
  %4489 = vmatmul.mubr.f32.gmra.mxu0 %v4423
  %v4490 = vpop.f32.mrf.mxu0
  %v4491 = vadd.f32 %v619, %v4490
  %v4492 = vpop.f32.mrf.mxu0
  %v4493 = vadd.f32 %v623, %v4492
  %4494 = vdwg.mxu0
  %4495 = vmatprep.subr.mxu0 %v613
  %4496 = vmatpush1.msra.mxu0 %v612
  %4497 = vmatprep.subr.mxu0 %v609
  %4498 = vmatpush1.msra.mxu0 %v608
  %4499 = vmatprep.subr.mxu0 %v605
  %4500 = vmatpush1.msra.mxu0 %v604
  %4501 = vmatprep.subr.mxu0 %v601
  %4502 = vmatpush1.msra.mxu0 %v600
  %4503 = vmatprep.subr.mxu0 %v597
  %4504 = vmatpush1.msra.mxu0 %v596
  %4505 = vmatprep.subr.mxu0 %v593
  %4506 = vmatpush1.msra.mxu0 %v592
  %4507 = vmatprep.subr.mxu0 %v589
  %4508 = vmatpush1.msra.mxu0 %v588
  %4509 = vmatprep.subr.mxu0 %v585
  %4510 = vmatpush1.msra.mxu0 %v584
  %4511 = vmatprep.subr.mxu0 %v581
  %4512 = vmatpush1.msra.mxu0 %v580
  %4513 = vmatprep.subr.mxu0 %v577
  %4514 = vmatpush1.msra.mxu0 %v576
  %4515 = vmatprep.subr.mxu0 %v573
  %4516 = vmatpush1.msra.mxu0 %v572
  %4517 = vmatprep.subr.mxu0 %v569
  %4518 = vmatpush1.msra.mxu0 %v568
  %4519 = vmatprep.subr.mxu0 %v565
  %4520 = vmatpush1.msra.mxu0 %v564
  %4521 = vmatprep.subr.mxu0 %v561
  %4522 = vmatpush1.msra.mxu0 %v560
  %4523 = vmatprep.subr.mxu0 %v557
  %4524 = vmatpush1.msra.mxu0 %v556
  %4525 = vmatprep.subr.mxu0 %v553
  %4526 = vmatpush1.msra.mxu0 %v552
  %4527 = vmatprep.subr.mxu0 0.0
  %4528 = vmatpush2.msra.mxu0 0.0
  %4529 = vmatprep.subr.mxu0 0.0
  %4530 = vmatpush2.msra.mxu0 0.0
  %4531 = vmatprep.subr.mxu0 0.0
  %4532 = vmatpush2.msra.mxu0 0.0
  %4533 = vmatprep.subr.mxu0 0.0
  %4534 = vmatpush2.msra.mxu0 0.0
  %4535 = vmatprep.subr.mxu0 0.0
  %4536 = vmatpush2.msra.mxu0 0.0
  %4537 = vmatprep.subr.mxu0 0.0
  %4538 = vmatpush2.msra.mxu0 0.0
  %4539 = vmatprep.subr.mxu0 0.0
  %4540 = vmatpush2.msra.mxu0 0.0
  %4541 = vmatprep.subr.mxu0 0.0
  %4542 = vmatpush2.msra.mxu0 0.0
  %4543 = vmatprep.subr.mxu0 0.0
  %4544 = vmatpush2.msra.mxu0 0.0
  %4545 = vmatprep.subr.mxu0 0.0
  %4546 = vmatpush2.msra.mxu0 0.0
  %4547 = vmatprep.subr.mxu0 0.0
  %4548 = vmatpush2.msra.mxu0 0.0
  %4549 = vmatprep.subr.mxu0 0.0
  %4550 = vmatpush2.msra.mxu0 0.0
  %4551 = vmatprep.subr.mxu0 0.0
  %4552 = vmatpush2.msra.mxu0 0.0
  %4553 = vmatprep.subr.mxu0 0.0
  %4554 = vmatpush2.msra.mxu0 0.0
  %4555 = vmatprep.subr.mxu0 0.0
  %4556 = vmatpush2.msra.mxu0 0.0
  %4557 = vmatprep.subr.mxu0 0.0
  %4558 = vmatpush2.msra.mxu0 0.0
  %4559 = vmatprep.mubr.f32.mxu0 0.0
  %4560 = vmatmul.mubr.f32.gmra.mxu0 %v4423
  %v4561 = vpop.f32.mrf.mxu0
  %v4562 = vadd.f32 %v627, %v4561
  %v4563 = vpop.f32.mrf.mxu0
  %v4564 = vadd.f32 %v631, %v4563
  %4565 = vdwg.mxu0
  %v4566 = vadd.f32 %v4076, %v4423
  %4567 = vst [vmem:[#allocation3] sm:$0xff] %v4111
  %4568 = vst [vmem:[#allocation4] sm:$0xff] %v4109
  %4569 = vst [vmem:[#allocation5] sm:$0xff] %v4423
  %4570 = vst [vmem:[#allocation6] sm:$0xff] %v4421
  %4571 = vst [vmem:[#allocation7] sm:$0xff] %v4566
  %4572 = vst [vmem:[#allocation8] sm:$0xff] %v4321
  %4573 = vst [vmem:[#allocation8 + $0x8] sm:$0xff] %v4323
  %4574 = vst [vmem:[#allocation8 + $0x10] sm:$0xff] %v4392
  %4575 = vst [vmem:[#allocation8 + $0x18] sm:$0xff] %v4394
  %4576 = vst [vmem:[#allocation9] sm:$0xff] %v4491
  %4577 = vst [vmem:[#allocation9 + $0x8] sm:$0xff] %v4493
  %4578 = vst [vmem:[#allocation9 + $0x10] sm:$0xff] %v4562
  %4579 = vst [vmem:[#allocation9 + $0x18] sm:$0xff] %v4564
  // Predicated region
  $region38: #{rnn_forward.1} parent=0 // pred_check
    %p4580 = pneg %p383
  $region39: #{rnn_forward.1} parent=0 // pred_check_branch
    %4582 = sbr.rel (%p4580) target = $region41
  $region40: #{rnn_forward.1} parent=0 // pred_region
    %v4583 = vmul.f32 %v4566, 0.125
    %4584 = vst [vmem:[%s8] sm:$0xff] %v4583
    %v4585 = vld [vmem:[%s6] sm:$0xff]
    %v4586 = vld [vmem:[%s6 + $0x8] sm:$0xff]
    %v4587 = vld [vmem:[%s6 + $0x10] sm:$0xff]
    %v4588 = vld [vmem:[%s6 + $0x18] sm:$0xff]
    %v4589 = vld [vmem:[%s6 + $0x20] sm:$0xff]
    %v4590 = vld [vmem:[%s6 + $0x28] sm:$0xff]
    %v4591 = vld [vmem:[%s6 + $0x30] sm:$0xff]
    %v4592 = vld [vmem:[%s6 + $0x38] sm:$0xff]
    %v4593 = vld [vmem:[%s6 + $0x40] sm:$0xff]
    %v4594 = vld [vmem:[%s6 + $0x48] sm:$0xff]
    %v4595 = vld [vmem:[%s6 + $0x50] sm:$0xff]
    %v4596 = vld [vmem:[%s6 + $0x58] sm:$0xff]
    %v4597 = vld [vmem:[%s6 + $0x60] sm:$0xff]
    %v4598 = vld [vmem:[%s6 + $0x68] sm:$0xff]
    %v4599 = vld [vmem:[%s6 + $0x70] sm:$0xff]
    %v4600 = vld [vmem:[%s6 + $0x78] sm:$0xff]
    %v4601 = vld [vmem:[%s7] sm:$0x1]
    %v4603 = vlaneseq
    %v4604 = vshrl.u32 %v4603, 7
    %v4605 = vsub.s32 0, %v4604
    %v4606 = vrot.slane %v4601, %v4605
    %4608 = vmatprep.subr.mxu0 0.0
    %4609 = vmatpush1.msra.mxu0 %v4600
    %4610 = vmatprep.subr.mxu0 0.0
    %4611 = vmatpush1.msra.mxu0 %v4599
    %4612 = vmatprep.subr.mxu0 0.0
    %4613 = vmatpush1.msra.mxu0 %v4598
    %4614 = vmatprep.subr.mxu0 0.0
    %4615 = vmatpush1.msra.mxu0 %v4597
    %4616 = vmatprep.subr.mxu0 0.0
    %4617 = vmatpush1.msra.mxu0 %v4596
    %4618 = vmatprep.subr.mxu0 0.0
    %4619 = vmatpush1.msra.mxu0 %v4595
    %4620 = vmatprep.subr.mxu0 0.0
    %4621 = vmatpush1.msra.mxu0 %v4594
    %4622 = vmatprep.subr.mxu0 0.0
    %4623 = vmatpush1.msra.mxu0 %v4593
    %4624 = vmatprep.subr.mxu0 0.0
    %4625 = vmatpush1.msra.mxu0 %v4592
    %4626 = vmatprep.subr.mxu0 0.0
    %4627 = vmatpush1.msra.mxu0 %v4591
    %4628 = vmatprep.subr.mxu0 0.0
    %4629 = vmatpush1.msra.mxu0 %v4590
    %4630 = vmatprep.subr.mxu0 0.0
    %4631 = vmatpush1.msra.mxu0 %v4589
    %4632 = vmatprep.subr.mxu0 0.0
    %4633 = vmatpush1.msra.mxu0 %v4588
    %4634 = vmatprep.subr.mxu0 0.0
    %4635 = vmatpush1.msra.mxu0 %v4587
    %4636 = vmatprep.subr.mxu0 0.0
    %4637 = vmatpush1.msra.mxu0 %v4586
    %4638 = vmatprep.subr.mxu0 0.0
    %4639 = vmatpush1.msra.mxu0 %v4585
    %4640 = vmatprep.subr.mxu0 0.0
    %4641 = vmatpush2.msra.mxu0 0.0
    %4642 = vmatprep.subr.mxu0 0.0
    %4643 = vmatpush2.msra.mxu0 0.0
    %4644 = vmatprep.subr.mxu0 0.0
    %4645 = vmatpush2.msra.mxu0 0.0
    %4646 = vmatprep.subr.mxu0 0.0
    %4647 = vmatpush2.msra.mxu0 0.0
    %4648 = vmatprep.subr.mxu0 0.0
    %4649 = vmatpush2.msra.mxu0 0.0
    %4650 = vmatprep.subr.mxu0 0.0
    %4651 = vmatpush2.msra.mxu0 0.0
    %4652 = vmatprep.subr.mxu0 0.0
    %4653 = vmatpush2.msra.mxu0 0.0
    %4654 = vmatprep.subr.mxu0 0.0
    %4655 = vmatpush2.msra.mxu0 0.0
    %4656 = vmatprep.subr.mxu0 0.0
    %4657 = vmatpush2.msra.mxu0 0.0
    %4658 = vmatprep.subr.mxu0 0.0
    %4659 = vmatpush2.msra.mxu0 0.0
    %4660 = vmatprep.subr.mxu0 0.0
    %4661 = vmatpush2.msra.mxu0 0.0
    %4662 = vmatprep.subr.mxu0 0.0
    %4663 = vmatpush2.msra.mxu0 0.0
    %4664 = vmatprep.subr.mxu0 0.0
    %4665 = vmatpush2.msra.mxu0 0.0
    %4666 = vmatprep.subr.mxu0 0.0
    %4667 = vmatpush2.msra.mxu0 0.0
    %4668 = vmatprep.subr.mxu0 0.0
    %4669 = vmatpush2.msra.mxu0 0.0
    %4670 = vmatprep.subr.mxu0 0.0
    %4671 = vmatpush2.msra.mxu0 0.0
    %4672 = vmatprep.mubr.f32.mxu0 0.0
    %4673 = vmatmul.mubr.f32.gmra.mxu0 %v4583
    %v4674 = vpop.f32.mrf.mxu0
    %v4675 = vadd.f32 %v4606, %v4674
    %v4676 = vpop.f32.mrf.mxu0
    %4677 = vdwg.mxu0
    %4678 = vst [vmem:[%s9] sm:$0xff] %v4675
  $region41: #{rnn_forward.1} parent=0 // pred_fallthru
    _
  // Predicated region
  $region42: #{rnn_forward.1} parent=0 // pred_check
    _
  $region43: #{rnn_forward.1} parent=0 // pred_check_branch
    %4680 = sbr.rel (0) target = $region45
  $region44: #{rnn_forward.1} parent=0 // pred_region
    _
  $region45: #{rnn_forward.1} parent=0 // pred_fallthru
    _
  // Predicated region
  $region46: #{rnn_forward.1} parent=0 // pred_check
    _
  $region47: #{rnn_forward.1} parent=0 // pred_check_branch
    %4682 = sbr.rel (0) target = $region49
  $region48: #{rnn_forward.1} parent=0 // pred_region
    _
  $region49: #{rnn_forward.1} parent=0 // pred_fallthru
    _
  // Predicated region
  $region50: #{rnn_forward.1} parent=0 // pred_check
    _
  $region51: #{rnn_forward.1} parent=0 // pred_check_branch
    %4684 = sbr.rel (0) target = $region53
  $region52: #{rnn_forward.1} parent=0 // pred_region
    _
  $region53: #{rnn_forward.1} parent=0 // pred_fallthru
    _
  // Predicated region
  $region54: #{rnn_forward.1} parent=0 // pred_check
    _
  $region55: #{rnn_forward.1} parent=0 // pred_check_branch
    %4686 = sbr.rel (0) target = $region57
  $region56: #{rnn_forward.1} parent=0 // pred_region
    _
  $region57: #{rnn_forward.1} parent=0 // pred_fallthru
    _

</llo_original>
